<compile_context>
chip_gen: v5e
topology: v5e:2x2
jax: 0.10.0
libtpu: 0.0.40
codegen_flags: <defaults>
</compile_context>

<pallas_src>
import functools
import math

import jax
import jax.numpy as jnp
from jax.experimental import pallas as pl
from jax.experimental.pallas import tpu as pltpu

LN_EPS = 1e-5  # torch.nn.LayerNorm / GroupNorm default


def _round_up(x, m):
    return (x + m - 1) // m * m


def _masked_layernorm(h, gamma, beta, c_true):
    """LayerNorm over the last axis of f32 `h`, where only the first `c_true`
    columns are real; padded columns are exact zeros (zero-padded weights)."""
    p = h.shape[-1]
    inv_c = 1.0 / c_true
    mean = jnp.sum(h, axis=-1, keepdims=True) * inv_c       # padded cols add 0
    d = h - mean
    if c_true == p:
        sq = d * d
    else:
        mask = jax.lax.broadcasted_iota(jnp.int32, (1, p), 1) < c_true
        sq = jnp.where(mask, d * d, 0.0)                      # exclude padded cols
    var = jnp.sum(sq, axis=-1, keepdims=True) * inv_c
    # gamma/beta are zero on padded columns -> padded outputs are exactly 0.
    return d * jax.lax.rsqrt(var + LN_EPS) * gamma + beta


def mlp_kernel(x_ref, w1_ref, g1_ref, b1_ref, w2_ref, g2_ref, b2_ref, o_ref,
               *, c_mid, c_out):
    # Hoisted one-time loads/casts of the tiny LayerNorm affine params.
    g1 = g1_ref[...].astype(jnp.float32)
    b1 = b1_ref[...].astype(jnp.float32)
    g2 = g2_ref[...].astype(jnp.float32)
    b2 = b2_ref[...].astype(jnp.float32)

    # Linear 1 (no bias): native-dtype (bf16) operands straight to the MXU,
    # f32 accumulation via preferred_element_type.
    h = jnp.dot(x_ref[...], w1_ref[...], preferred_element_type=jnp.float32)
    h = _masked_layernorm(h, g1, b1, c_mid)
    h = jnp.maximum(h, 0.0)

    # Linear 2 (no bias): cast the f32 intermediate down to the weight dtype so the
    # MXU runs at full (bf16) throughput; accumulate in f32.
    y = jnp.dot(h.astype(w2_ref.dtype), w2_ref[...],
                preferred_element_type=jnp.float32)
    y = _masked_layernorm(y, g2, b2, c_out)
    y = jnp.maximum(y, 0.0)

    o_ref[...] = y.astype(o_ref.dtype)


def mlp_forward(x, w1, g1, b1, w2, g2, b2, *, tile_b=None, out_dtype=None):
    """x: (B, C_in); w1: (C_in, C_mid); w2: (C_mid, C_out); g*/b*: per-channel affine."""
    B, C_in = x.shape
    assert w1.shape[0] == C_in
    C_mid = w1.shape[1]
    assert w2.shape[0] == C_mid
    C_out = w2.shape[1]
    if out_dtype is None:
        out_dtype = x.dtype

    # --- lane-dense feature padding (multiples of 128) ------------------------
    P_in, P_mid, P_out = (_round_up(c, 128) for c in (C_in, C_mid, C_out))

    # --- explicit batch tile: multiple of 8 sublanes, 128-512 rows typical ----
    # (128-256 is plenty on v5e's 128x128 MXU; 256-512 feeds v6e/v7x's 256-wide MXU.)
    if tile_b is None:
        tile_b = min(512, _round_up(B, 8))
    tile_b = max(8, _round_up(tile_b, 8))
    P_b = _round_up(B, tile_b)
    grid = (P_b // tile_b,)

    def pad_to(a, shape):
        a = jnp.asarray(a)
        if a.ndim == 1:
            a = a.reshape(1, -1)
        return jnp.pad(a, tuple((0, t - s) for s, t in zip(a.shape, shape)))

    xp = pad_to(x, (P_b, P_in))
    w1p = pad_to(w1, (P_in, P_mid))
    w2p = pad_to(w2, (P_mid, P_out))
    g1p = pad_to(g1, (1, P_mid))
    b1p = pad_to(b1, (1, P_mid))
    g2p = pad_to(g2, (1, P_out))
    b2p = pad_to(b2, (1, P_out))

    # --- explicit VMEM budget (re-derived with v7x's 64 MiB/TC in mind) -------
    def nbytes(shape, dt):
        return math.prod(shape) * jnp.dtype(dt).itemsize

    weights_bytes = (nbytes((P_in, P_mid), w1p.dtype)
                     + nbytes((P_mid, P_out), w2p.dtype)
                     + 2 * nbytes((1, P_mid), g1p.dtype)
                     + 2 * nbytes((1, P_out), g2p.dtype))
    vmem_est = (2 * nbytes((tile_b, P_in), xp.dtype)       # double-buffered x tile
                + 2 * nbytes((tile_b, P_out), out_dtype)    # double-buffered out tile
                + 2 * weights_bytes                         # worst case if double-buffered
                + nbytes((tile_b, P_mid), jnp.float32)      # live f32 intermediate h
                + nbytes((tile_b, P_out), jnp.float32))     # live f32 intermediate y
    vmem_limit = int(min(max(2 * vmem_est, 16 * 1024 * 1024), 48 * 1024 * 1024))

    cost = pl.CostEstimate(
        flops=2 * B * (C_in * C_mid + C_mid * C_out),
        transcendentals=2 * B,  # one rsqrt per row per LayerNorm
        bytes_accessed=int(x.size * x.dtype.itemsize
                           + w1.size * w1.dtype.itemsize
                           + w2.size * w2.dtype.itemsize
                           + 4 * (g1.size + b1.size + g2.size + b2.size)
                           + B * C_out * jnp.dtype(out_dtype).itemsize),
    )

    kernel = functools.partial(mlp_kernel, c_mid=C_mid, c_out=C_out)

    def build_call(single_buffer_weights):
        def const_spec(shape):
            idx = lambda i: (0,) * len(shape)
            if single_buffer_weights:
                # Grid-invariant operand: nothing to prefetch, keep one VMEM copy.
                return pl.BlockSpec(shape, idx, pipeline_mode=pl.Buffered(1))
            return pl.BlockSpec(shape, idx)

        return pl.pallas_call(
            kernel,
            out_shape=jax.ShapeDtypeStruct((P_b, P_out), out_dtype),
            grid_spec=pltpu.PrefetchScalarGridSpec(
                num_scalar_prefetch=0,
                grid=grid,
                in_specs=[
                    pl.BlockSpec((tile_b, P_in), lambda i: (i, 0)),   # x tile
                    const_spec((P_in, P_mid)),                        # w1
                    const_spec((1, P_mid)),                           # ln1 gamma
                    const_spec((1, P_mid)),                           # ln1 beta
                    const_spec((P_mid, P_out)),                       # w2
                    const_spec((1, P_out)),                           # ln2 gamma
                    const_spec((1, P_out)),                           # ln2 beta
                ],
                out_specs=pl.BlockSpec((tile_b, P_out), lambda i: (i, 0)),
            ),
            compiler_params=pltpu.CompilerParams(
                dimension_semantics=("parallel",),
                vmem_limit_bytes=vmem_limit),
            cost_estimate=cost,
        )

    args = (xp, w1p, g1p, b1p, w2p, g2p, b2p)
    try:
        out_padded = build_call(single_buffer_weights=True)(*args)
    except Exception:
        # pl.Buffered(1) not supported by this jax version: fall back to the default
        # double-buffered pipeline (identical results, slightly more weight VMEM).
        out_padded = build_call(single_buffer_weights=False)(*args)

    return out_padded[:B, :C_out]


def reference_mlp(x, w1, g1, b1, w2, g2, b2):
    def ln(h, g, b):
        m = jnp.mean(h, axis=-1, keepdims=True)
        v = jnp.mean((h - m) ** 2, axis=-1, keepdims=True)
        return (h - m) * jax.lax.rsqrt(v + LN_EPS) * g.reshape(1, -1) + b.reshape(1, -1)

    h = jnp.dot(x, w1, preferred_element_type=jnp.float32)
    h = jnp.maximum(ln(h, g1, b1), 0.0)
    y = jnp.dot(h.astype(w2.dtype), w2, preferred_element_type=jnp.float32)
    y = jnp.maximum(ln(y, g2, b2), 0.0)
    return y


if __name__ == "__main__":
    # Decoder-style block of S_AE: latent_dim=16 -> hidden_dim=64 -> hidden_dim=64,
    # batch of 512 latent vectors.  Weights/activations in bf16 (native MXU dtype),
    # f32 output; tile_b=256 -> grid=(2,) so both v7x TensorCores get work.
    B, C_in, C_mid, C_out = 512, 16, 64, 64

    key = jax.random.PRNGKey(0)
    kx, kw1, kw2, kg1, kb1, kg2, kb2 = jax.random.split(key, 7)

    x = jax.random.normal(kx, (B, C_in), dtype=jnp.float32).astype(jnp.bfloat16)
    bound1 = 1.0 / math.sqrt(C_in)
    bound2 = 1.0 / math.sqrt(C_mid)
    w1 = jax.random.uniform(kw1, (C_in, C_mid), jnp.float32,
                            -bound1, bound1).astype(jnp.bfloat16)
    w2 = jax.random.uniform(kw2, (C_mid, C_out), jnp.float32,
                            -bound2, bound2).astype(jnp.bfloat16)
    g1 = 1.0 + 0.1 * jax.random.normal(kg1, (C_mid,), dtype=jnp.float32)
    b1 = 0.1 * jax.random.normal(kb1, (C_mid,), dtype=jnp.float32)
    g2 = 1.0 + 0.1 * jax.random.normal(kg2, (C_out,), dtype=jnp.float32)
    b2 = 0.1 * jax.random.normal(kb2, (C_out,), dtype=jnp.float32)

    out = mlp_forward(x, w1, g1, b1, w2, g2, b2, tile_b=256, out_dtype=jnp.float32)
    out = jax.block_until_ready(out)

    ref = jax.block_until_ready(reference_mlp(x, w1, g1, b1, w2, g2, b2))
    assert out.shape == (B, C_out), out.shape
    max_err = float(jnp.max(jnp.abs(out - ref)))
    assert jnp.allclose(out, ref, atol=1e-3, rtol=1e-3), max_err

    print("KERNEL_OK")
</pallas_src>

<mosaic_0001>
module attributes {stable_mosaic.version = 11 : i64} {
  func.func @mlp_kernel(%arg0: i32, %arg1: memref<256x128xbf16, #tpu.memory_space<vmem>>, %arg2: memref<128x128xbf16, #tpu.memory_space<vmem>>, %arg3: memref<1x128xf32, #tpu.memory_space<vmem>>, %arg4: memref<1x128xf32, #tpu.memory_space<vmem>>, %arg5: memref<128x128xbf16, #tpu.memory_space<vmem>>, %arg6: memref<1x128xf32, #tpu.memory_space<vmem>>, %arg7: memref<1x128xf32, #tpu.memory_space<vmem>>, %arg8: memref<256x128xf32, #tpu.memory_space<vmem>>) attributes {dimension_semantics = [#tpu.dimension_semantics<parallel>], iteration_bounds = array<i64: 2>, scalar_prefetch = 0 : i64, scratch_operands = 0 : i64, tpu.core_type = #tpu.core_type<tc>, window_params = [{transform_indices = @transform_0, window_bounds = array<i64: 256, 128>}, {pipeline_mode = #tpu.pipeline_mode<synchronous>, transform_indices = @transform_1, window_bounds = array<i64: 128, 128>}, {pipeline_mode = #tpu.pipeline_mode<synchronous>, transform_indices = @transform_2, window_bounds = array<i64: 1, 128>}, {pipeline_mode = #tpu.pipeline_mode<synchronous>, transform_indices = @transform_3, window_bounds = array<i64: 1, 128>}, {pipeline_mode = #tpu.pipeline_mode<synchronous>, transform_indices = @transform_4, window_bounds = array<i64: 128, 128>}, {pipeline_mode = #tpu.pipeline_mode<synchronous>, transform_indices = @transform_5, window_bounds = array<i64: 1, 128>}, {pipeline_mode = #tpu.pipeline_mode<synchronous>, transform_indices = @transform_6, window_bounds = array<i64: 1, 128>}, {transform_indices = @transform_7, window_bounds = array<i64: 256, 128>}]} {
    %c0 = arith.constant 0 : index
    %c0_0 = arith.constant 0 : index
    %0 = vector.load %arg3[%c0, %c0_0] : memref<1x128xf32, #tpu.memory_space<vmem>>, vector<1x128xf32>
    %c0_1 = arith.constant 0 : index
    %c0_2 = arith.constant 0 : index
    %1 = vector.load %arg4[%c0_1, %c0_2] : memref<1x128xf32, #tpu.memory_space<vmem>>, vector<1x128xf32>
    %c0_3 = arith.constant 0 : index
    %c0_4 = arith.constant 0 : index
    %2 = vector.load %arg6[%c0_3, %c0_4] : memref<1x128xf32, #tpu.memory_space<vmem>>, vector<1x128xf32>
    %c0_5 = arith.constant 0 : index
    %c0_6 = arith.constant 0 : index
    %3 = vector.load %arg7[%c0_5, %c0_6] : memref<1x128xf32, #tpu.memory_space<vmem>>, vector<1x128xf32>
    %c0_7 = arith.constant 0 : index
    %c0_8 = arith.constant 0 : index
    %4 = vector.load %arg1[%c0_7, %c0_8] : memref<256x128xbf16, #tpu.memory_space<vmem>>, vector<256x128xbf16>
    %c0_9 = arith.constant 0 : index
    %c0_10 = arith.constant 0 : index
    %5 = vector.load %arg2[%c0_9, %c0_10] : memref<128x128xbf16, #tpu.memory_space<vmem>>, vector<128x128xbf16>
    %cst = arith.constant dense<0.000000e+00> : vector<256x128xf32>
    %6 = tpu.matmul %4, %5, %cst {dimension_numbers = #tpu.dot_dimension_numbers<[1], [0], [0], [1], [0, 0, 1, 1], [], []>} : vector<256x128xbf16>, vector<128x128xbf16>, vector<256x128xf32> -> vector<256x128xf32>
    %cst_11 = arith.constant dense<0.000000e+00> : vector<256xf32>
    %7 = vector.multi_reduction <add>, %6, %cst_11 [1] : vector<256x128xf32> to vector<256xf32>
    %8 = vector.shape_cast %7 : vector<256xf32> to vector<256x1xf32>
    %cst_12 = arith.constant 1.562500e-02 : f32
    %9 = vector.broadcast %cst_12 : f32 to vector<256x1xf32>
    %10 = arith.mulf %8, %9 : vector<256x1xf32>
    %11 = vector.broadcast %10 : vector<256x1xf32> to vector<256x128xf32>
    %12 = arith.subf %6, %11 : vector<256x128xf32>
    %13 = tpu.iota {dimensions = array<i32: 1>} : vector<1x128xi32>
    %c64_i32 = arith.constant 64 : i32
    %14 = vector.broadcast %c64_i32 : i32 to vector<1x128xi32>
    %15 = arith.cmpi slt, %13, %14 : vector<1x128xi32>
    %16 = arith.mulf %12, %12 : vector<256x128xf32>
    %cst_13 = arith.constant 0.000000e+00 : f32
    %17 = vector.shape_cast %15 : vector<1x128xi1> to vector<1x128xi1>
    %18 = vector.broadcast %17 : vector<1x128xi1> to vector<256x128xi1>
    %19 = vector.broadcast %cst_13 : f32 to vector<256x128xf32>
    %20 = arith.select %18, %16, %19 : vector<256x128xi1>, vector<256x128xf32>
    %cst_14 = arith.constant dense<0.000000e+00> : vector<256xf32>
    %21 = vector.multi_reduction <add>, %20, %cst_14 [1] : vector<256x128xf32> to vector<256xf32>
    %22 = vector.shape_cast %21 : vector<256xf32> to vector<256x1xf32>
    %cst_15 = arith.constant 1.562500e-02 : f32
    %23 = vector.broadcast %cst_15 : f32 to vector<256x1xf32>
    %24 = arith.mulf %22, %23 : vector<256x1xf32>
    %cst_16 = arith.constant 9.99999974E-6 : f32
    %25 = vector.broadcast %cst_16 : f32 to vector<256x1xf32>
    %26 = arith.addf %24, %25 : vector<256x1xf32>
    %27 = math.rsqrt %26 : vector<256x1xf32>
    %28 = vector.broadcast %27 : vector<256x1xf32> to vector<256x128xf32>
    %29 = arith.mulf %12, %28 : vector<256x128xf32>
    %30 = vector.broadcast %0 : vector<1x128xf32> to vector<256x128xf32>
    %31 = arith.mulf %29, %30 : vector<256x128xf32>
    %32 = vector.broadcast %1 : vector<1x128xf32> to vector<256x128xf32>
    %33 = arith.addf %31, %32 : vector<256x128xf32>
    %cst_17 = arith.constant 0.000000e+00 : f32
    %34 = vector.broadcast %cst_17 : f32 to vector<256x128xf32>
    %35 = arith.maximumf %33, %34 : vector<256x128xf32>
    %36 = arith.truncf %35 : vector<256x128xf32> to vector<256x128xbf16>
    %c0_18 = arith.constant 0 : index
    %c0_19 = arith.constant 0 : index
    %37 = vector.load %arg5[%c0_18, %c0_19] : memref<128x128xbf16, #tpu.memory_space<vmem>>, vector<128x128xbf16>
    %cst_20 = arith.constant dense<0.000000e+00> : vector<256x128xf32>
    %38 = tpu.matmul %36, %37, %cst_20 {dimension_numbers = #tpu.dot_dimension_numbers<[1], [0], [0], [1], [0, 0, 1, 1], [], []>} : vector<256x128xbf16>, vector<128x128xbf16>, vector<256x128xf32> -> vector<256x128xf32>
    %cst_21 = arith.constant dense<0.000000e+00> : vector<256xf32>
    %39 = vector.multi_reduction <add>, %38, %cst_21 [1] : vector<256x128xf32> to vector<256xf32>
    %40 = vector.shape_cast %39 : vector<256xf32> to vector<256x1xf32>
    %cst_22 = arith.constant 1.562500e-02 : f32
    %41 = vector.broadcast %cst_22 : f32 to vector<256x1xf32>
    %42 = arith.mulf %40, %41 : vector<256x1xf32>
    %43 = vector.broadcast %42 : vector<256x1xf32> to vector<256x128xf32>
    %44 = arith.subf %38, %43 : vector<256x128xf32>
    %45 = tpu.iota {dimensions = array<i32: 1>} : vector<1x128xi32>
    %c64_i32_23 = arith.constant 64 : i32
    %46 = vector.broadcast %c64_i32_23 : i32 to vector<1x128xi32>
    %47 = arith.cmpi slt, %45, %46 : vector<1x128xi32>
    %48 = arith.mulf %44, %44 : vector<256x128xf32>
    %cst_24 = arith.constant 0.000000e+00 : f32
    %49 = vector.shape_cast %47 : vector<1x128xi1> to vector<1x128xi1>
    %50 = vector.broadcast %49 : vector<1x128xi1> to vector<256x128xi1>
    %51 = vector.broadcast %cst_24 : f32 to vector<256x128xf32>
    %52 = arith.select %50, %48, %51 : vector<256x128xi1>, vector<256x128xf32>
    %cst_25 = arith.constant dense<0.000000e+00> : vector<256xf32>
    %53 = vector.multi_reduction <add>, %52, %cst_25 [1] : vector<256x128xf32> to vector<256xf32>
    %54 = vector.shape_cast %53 : vector<256xf32> to vector<256x1xf32>
    %cst_26 = arith.constant 1.562500e-02 : f32
    %55 = vector.broadcast %cst_26 : f32 to vector<256x1xf32>
    %56 = arith.mulf %54, %55 : vector<256x1xf32>
    %cst_27 = arith.constant 9.99999974E-6 : f32
    %57 = vector.broadcast %cst_27 : f32 to vector<256x1xf32>
    %58 = arith.addf %56, %57 : vector<256x1xf32>
    %59 = math.rsqrt %58 : vector<256x1xf32>
    %60 = vector.broadcast %59 : vector<256x1xf32> to vector<256x128xf32>
    %61 = arith.mulf %44, %60 : vector<256x128xf32>
    %62 = vector.broadcast %2 : vector<1x128xf32> to vector<256x128xf32>
    %63 = arith.mulf %61, %62 : vector<256x128xf32>
    %64 = vector.broadcast %3 : vector<1x128xf32> to vector<256x128xf32>
    %65 = arith.addf %63, %64 : vector<256x128xf32>
    %cst_28 = arith.constant 0.000000e+00 : f32
    %66 = vector.broadcast %cst_28 : f32 to vector<256x128xf32>
    %67 = arith.maximumf %65, %66 : vector<256x128xf32>
    %c0_29 = arith.constant 0 : index
    %c0_30 = arith.constant 0 : index
    %68 = vector.load %arg8[%c0_29, %c0_30] : memref<256x128xf32, #tpu.memory_space<vmem>>, vector<256x128xf32>
    tpu.vector_store %arg8[%c0_29, %c0_30], %67 {strides = array<i32>} : memref<256x128xf32, #tpu.memory_space<vmem>>, vector<256x128xf32>,
    return
  }
  func.func @transform_0(%arg0: i32) -> (i32, i32) {
    %c0_i32 = arith.constant 0 : i32
    %c0_i32_0 = arith.constant 0 : i32
    return %arg0, %c0_i32 : i32, i32
  }
  func.func @transform_1(%arg0: i32) -> (i32, i32) {
    %c0_i32 = arith.constant 0 : i32
    %c0_i32_0 = arith.constant 0 : i32
    %c0_i32_1 = arith.constant 0 : i32
    return %c0_i32, %c0_i32_0 : i32, i32
  }
  func.func @transform_2(%arg0: i32) -> (i32, i32) {
    %c0_i32 = arith.constant 0 : i32
    %c0_i32_0 = arith.constant 0 : i32
    %c0_i32_1 = arith.constant 0 : i32
    return %c0_i32, %c0_i32_0 : i32, i32
  }
  func.func @transform_3(%arg0: i32) -> (i32, i32) {
    %c0_i32 = arith.constant 0 : i32
    %c0_i32_0 = arith.constant 0 : i32
    %c0_i32_1 = arith.constant 0 : i32
    return %c0_i32, %c0_i32_0 : i32, i32
  }
  func.func @transform_4(%arg0: i32) -> (i32, i32) {
    %c0_i32 = arith.constant 0 : i32
    %c0_i32_0 = arith.constant 0 : i32
    %c0_i32_1 = arith.constant 0 : i32
    return %c0_i32, %c0_i32_0 : i32, i32
  }
  func.func @transform_5(%arg0: i32) -> (i32, i32) {
    %c0_i32 = arith.constant 0 : i32
    %c0_i32_0 = arith.constant 0 : i32
    %c0_i32_1 = arith.constant 0 : i32
    return %c0_i32, %c0_i32_0 : i32, i32
  }
  func.func @transform_6(%arg0: i32) -> (i32, i32) {
    %c0_i32 = arith.constant 0 : i32
    %c0_i32_0 = arith.constant 0 : i32
    %c0_i32_1 = arith.constant 0 : i32
    return %c0_i32, %c0_i32_0 : i32, i32
  }
  func.func @transform_7(%arg0: i32) -> (i32, i32) {
    %c0_i32 = arith.constant 0 : i32
    %c0_i32_0 = arith.constant 0 : i32
    return %arg0, %c0_i32 : i32, i32
  }
}

module attributes {stable_mosaic.version = 11 : i64} {
  func.func @mlp_kernel(%arg0: i32, %arg1: memref<256x128xbf16, #tpu.memory_space<vmem>>, %arg2: memref<128x128xbf16, #tpu.memory_space<vmem>>, %arg3: memref<1x128xf32, #tpu.memory_space<vmem>>, %arg4: memref<1x128xf32, #tpu.memory_space<vmem>>, %arg5: memref<128x128xbf16, #tpu.memory_space<vmem>>, %arg6: memref<1x128xf32, #tpu.memory_space<vmem>>, %arg7: memref<1x128xf32, #tpu.memory_space<vmem>>, %arg8: memref<256x128xf32, #tpu.memory_space<vmem>>) attributes {dimension_semantics = [#tpu.dimension_semantics<parallel>], iteration_bounds = array<i64: 2>, scalar_prefetch = 0 : i64, scratch_operands = 0 : i64, tpu.core_type = #tpu.core_type<tc>, window_params = [{transform_indices = @transform_0, window_bounds = array<i64: 256, 128>}, {pipeline_mode = #tpu.pipeline_mode<synchronous>, transform_indices = @transform_1, window_bounds = array<i64: 128, 128>}, {pipeline_mode = #tpu.pipeline_mode<synchronous>, transform_indices = @transform_2, window_bounds = array<i64: 1, 128>}, {pipeline_mode = #tpu.pipeline_mode<synchronous>, transform_indices = @transform_3, window_bounds = array<i64: 1, 128>}, {pipeline_mode = #tpu.pipeline_mode<synchronous>, transform_indices = @transform_4, window_bounds = array<i64: 128, 128>}, {pipeline_mode = #tpu.pipeline_mode<synchronous>, transform_indices = @transform_5, window_bounds = array<i64: 1, 128>}, {pipeline_mode = #tpu.pipeline_mode<synchronous>, transform_indices = @transform_6, window_bounds = array<i64: 1, 128>}, {transform_indices = @transform_7, window_bounds = array<i64: 256, 128>}]} {
    %c0 = arith.constant 0 : index
    %c0_0 = arith.constant 0 : index
    %0 = vector.load %arg3[%c0, %c0_0] : memref<1x128xf32, #tpu.memory_space<vmem>>, vector<1x128xf32>
    %c0_1 = arith.constant 0 : index
    %c0_2 = arith.constant 0 : index
    %1 = vector.load %arg4[%c0_1, %c0_2] : memref<1x128xf32, #tpu.memory_space<vmem>>, vector<1x128xf32>
    %c0_3 = arith.constant 0 : index
    %c0_4 = arith.constant 0 : index
    %2 = vector.load %arg6[%c0_3, %c0_4] : memref<1x128xf32, #tpu.memory_space<vmem>>, vector<1x128xf32>
    %c0_5 = arith.constant 0 : index
    %c0_6 = arith.constant 0 : index
    %3 = vector.load %arg7[%c0_5, %c0_6] : memref<1x128xf32, #tpu.memory_space<vmem>>, vector<1x128xf32>
    %c0_7 = arith.constant 0 : index
    %c0_8 = arith.constant 0 : index
    %4 = vector.load %arg1[%c0_7, %c0_8] : memref<256x128xbf16, #tpu.memory_space<vmem>>, vector<256x128xbf16>
    %c0_9 = arith.constant 0 : index
    %c0_10 = arith.constant 0 : index
    %5 = vector.load %arg2[%c0_9, %c0_10] : memref<128x128xbf16, #tpu.memory_space<vmem>>, vector<128x128xbf16>
    %cst = arith.constant dense<0.000000e+00> : vector<256x128xf32>
    %6 = tpu.matmul %4, %5, %cst {dimension_numbers = #tpu.dot_dimension_numbers<[1], [0], [0], [1], [0, 0, 1, 1], [], []>} : vector<256x128xbf16>, vector<128x128xbf16>, vector<256x128xf32> -> vector<256x128xf32>
    %cst_11 = arith.constant dense<0.000000e+00> : vector<256xf32>
    %7 = vector.multi_reduction <add>, %6, %cst_11 [1] : vector<256x128xf32> to vector<256xf32>
    %8 = vector.shape_cast %7 : vector<256xf32> to vector<256x1xf32>
    %cst_12 = arith.constant 1.562500e-02 : f32
    %9 = vector.broadcast %cst_12 : f32 to vector<256x1xf32>
    %10 = arith.mulf %8, %9 : vector<256x1xf32>
    %11 = vector.broadcast %10 : vector<256x1xf32> to vector<256x128xf32>
    %12 = arith.subf %6, %11 : vector<256x128xf32>
    %13 = tpu.iota {dimensions = array<i32: 1>} : vector<1x128xi32>
    %c64_i32 = arith.constant 64 : i32
    %14 = vector.broadcast %c64_i32 : i32 to vector<1x128xi32>
    %15 = arith.cmpi slt, %13, %14 : vector<1x128xi32>
    %16 = arith.mulf %12, %12 : vector<256x128xf32>
    %cst_13 = arith.constant 0.000000e+00 : f32
    %17 = vector.shape_cast %15 : vector<1x128xi1> to vector<1x128xi1>
    %18 = vector.broadcast %17 : vector<1x128xi1> to vector<256x128xi1>
    %19 = vector.broadcast %cst_13 : f32 to vector<256x128xf32>
    %20 = arith.select %18, %16, %19 : vector<256x128xi1>, vector<256x128xf32>
    %cst_14 = arith.constant dense<0.000000e+00> : vector<256xf32>
    %21 = vector.multi_reduction <add>, %20, %cst_14 [1] : vector<256x128xf32> to vector<256xf32>
    %22 = vector.shape_cast %21 : vector<256xf32> to vector<256x1xf32>
    %cst_15 = arith.constant 1.562500e-02 : f32
    %23 = vector.broadcast %cst_15 : f32 to vector<256x1xf32>
    %24 = arith.mulf %22, %23 : vector<256x1xf32>
    %cst_16 = arith.constant 9.99999974E-6 : f32
    %25 = vector.broadcast %cst_16 : f32 to vector<256x1xf32>
    %26 = arith.addf %24, %25 : vector<256x1xf32>
    %27 = math.rsqrt %26 : vector<256x1xf32>
    %28 = vector.broadcast %27 : vector<256x1xf32> to vector<256x128xf32>
    %29 = arith.mulf %12, %28 : vector<256x128xf32>
    %30 = vector.broadcast %0 : vector<1x128xf32> to vector<256x128xf32>
    %31 = arith.mulf %29, %30 : vector<256x128xf32>
    %32 = vector.broadcast %1 : vector<1x128xf32> to vector<256x128xf32>
    %33 = arith.addf %31, %32 : vector<256x128xf32>
    %cst_17 = arith.constant 0.000000e+00 : f32
    %34 = vector.broadcast %cst_17 : f32 to vector<256x128xf32>
    %35 = arith.maximumf %33, %34 : vector<256x128xf32>
    %36 = arith.truncf %35 : vector<256x128xf32> to vector<256x128xbf16>
    %c0_18 = arith.constant 0 : index
    %c0_19 = arith.constant 0 : index
    %37 = vector.load %arg5[%c0_18, %c0_19] : memref<128x128xbf16, #tpu.memory_space<vmem>>, vector<128x128xbf16>
    %cst_20 = arith.constant dense<0.000000e+00> : vector<256x128xf32>
    %38 = tpu.matmul %36, %37, %cst_20 {dimension_numbers = #tpu.dot_dimension_numbers<[1], [0], [0], [1], [0, 0, 1, 1], [], []>} : vector<256x128xbf16>, vector<128x128xbf16>, vector<256x128xf32> -> vector<256x128xf32>
    %cst_21 = arith.constant dense<0.000000e+00> : vector<256xf32>
    %39 = vector.multi_reduction <add>, %38, %cst_21 [1] : vector<256x128xf32> to vector<256xf32>
    %40 = vector.shape_cast %39 : vector<256xf32> to vector<256x1xf32>
    %cst_22 = arith.constant 1.562500e-02 : f32
    %41 = vector.broadcast %cst_22 : f32 to vector<256x1xf32>
    %42 = arith.mulf %40, %41 : vector<256x1xf32>
    %43 = vector.broadcast %42 : vector<256x1xf32> to vector<256x128xf32>
    %44 = arith.subf %38, %43 : vector<256x128xf32>
    %45 = tpu.iota {dimensions = array<i32: 1>} : vector<1x128xi32>
    %c64_i32_23 = arith.constant 64 : i32
    %46 = vector.broadcast %c64_i32_23 : i32 to vector<1x128xi32>
    %47 = arith.cmpi slt, %45, %46 : vector<1x128xi32>
    %48 = arith.mulf %44, %44 : vector<256x128xf32>
    %cst_24 = arith.constant 0.000000e+00 : f32
    %49 = vector.shape_cast %47 : vector<1x128xi1> to vector<1x128xi1>
    %50 = vector.broadcast %49 : vector<1x128xi1> to vector<256x128xi1>
    %51 = vector.broadcast %cst_24 : f32 to vector<256x128xf32>
    %52 = arith.select %50, %48, %51 : vector<256x128xi1>, vector<256x128xf32>
    %cst_25 = arith.constant dense<0.000000e+00> : vector<256xf32>
    %53 = vector.multi_reduction <add>, %52, %cst_25 [1] : vector<256x128xf32> to vector<256xf32>
    %54 = vector.shape_cast %53 : vector<256xf32> to vector<256x1xf32>
    %cst_26 = arith.constant 1.562500e-02 : f32
    %55 = vector.broadcast %cst_26 : f32 to vector<256x1xf32>
    %56 = arith.mulf %54, %55 : vector<256x1xf32>
    %cst_27 = arith.constant 9.99999974E-6 : f32
    %57 = vector.broadcast %cst_27 : f32 to vector<256x1xf32>
    %58 = arith.addf %56, %57 : vector<256x1xf32>
    %59 = math.rsqrt %58 : vector<256x1xf32>
    %60 = vector.broadcast %59 : vector<256x1xf32> to vector<256x128xf32>
    %61 = arith.mulf %44, %60 : vector<256x128xf32>
    %62 = vector.broadcast %2 : vector<1x128xf32> to vector<256x128xf32>
    %63 = arith.mulf %61, %62 : vector<256x128xf32>
    %64 = vector.broadcast %3 : vector<1x128xf32> to vector<256x128xf32>
    %65 = arith.addf %63, %64 : vector<256x128xf32>
    %cst_28 = arith.constant 0.000000e+00 : f32
    %66 = vector.broadcast %cst_28 : f32 to vector<256x128xf32>
    %67 = arith.maximumf %65, %66 : vector<256x128xf32>
    %c0_29 = arith.constant 0 : index
    %c0_30 = arith.constant 0 : index
    %68 = vector.load %arg8[%c0_29, %c0_30] : memref<256x128xf32, #tpu.memory_space<vmem>>, vector<256x128xf32>
    tpu.vector_store %arg8[%c0_29, %c0_30], %67 {strides = array<i32>} : memref<256x128xf32, #tpu.memory_space<vmem>>, vector<256x128xf32>,
    return
  }
  func.func @transform_0(%arg0: i32) -> (i32, i32) {
    %c0_i32 = arith.constant 0 : i32
    %c0_i32_0 = arith.constant 0 : i32
    return %arg0, %c0_i32 : i32, i32
  }
  func.func @transform_1(%arg0: i32) -> (i32, i32) {
    %c0_i32 = arith.constant 0 : i32
    %c0_i32_0 = arith.constant 0 : i32
    %c0_i32_1 = arith.constant 0 : i32
    return %c0_i32, %c0_i32_0 : i32, i32
  }
  func.func @transform_2(%arg0: i32) -> (i32, i32) {
    %c0_i32 = arith.constant 0 : i32
    %c0_i32_0 = arith.constant 0 : i32
    %c0_i32_1 = arith.constant 0 : i32
    return %c0_i32, %c0_i32_0 : i32, i32
  }
  func.func @transform_3(%arg0: i32) -> (i32, i32) {
    %c0_i32 = arith.constant 0 : i32
    %c0_i32_0 = arith.constant 0 : i32
    %c0_i32_1 = arith.constant 0 : i32
    return %c0_i32, %c0_i32_0 : i32, i32
  }
  func.func @transform_4(%arg0: i32) -> (i32, i32) {
    %c0_i32 = arith.constant 0 : i32
    %c0_i32_0 = arith.constant 0 : i32
    %c0_i32_1 = arith.constant 0 : i32
    return %c0_i32, %c0_i32_0 : i32, i32
  }
  func.func @transform_5(%arg0: i32) -> (i32, i32) {
    %c0_i32 = arith.constant 0 : i32
    %c0_i32_0 = arith.constant 0 : i32
    %c0_i32_1 = arith.constant 0 : i32
    return %c0_i32, %c0_i32_0 : i32, i32
  }
  func.func @transform_6(%arg0: i32) -> (i32, i32) {
    %c0_i32 = arith.constant 0 : i32
    %c0_i32_0 = arith.constant 0 : i32
    %c0_i32_1 = arith.constant 0 : i32
    return %c0_i32, %c0_i32_0 : i32, i32
  }
  func.func @transform_7(%arg0: i32) -> (i32, i32) {
    %c0_i32 = arith.constant 0 : i32
    %c0_i32_0 = arith.constant 0 : i32
    return %arg0, %c0_i32 : i32, i32
  }
}

</mosaic_0001>

<llo_original>
// kernel: tpu_custom_call.1
$region0: #{tpu_custom_call.1}
  #allocation0 [shape = 'u32[]', space=smem, size = 0x4, offset = 0x4, fixed_abs, tag = 'smem constant byte address 0x4 - core index']
  #allocation1 [shape = 'u32[72,128]{1,0:T(1,128)}', space=vmem, size = 0x9000, scoped, tag = 'internal scratch']
  %s0 = inlined_call_operand.hbm [shape: bf16[512,128], index: 0, kind: input, shape index: {}]
  %s1 = inlined_call_operand.hbm [shape: bf16[128,128], index: 1, kind: input, shape index: {}]
  %s2 = inlined_call_operand.vmem [shape: f32[1,128], index: 2, kind: input, shape index: {}]
  %s3 = inlined_call_operand.vmem [shape: f32[1,128], index: 3, kind: input, shape index: {}]
  %s4 = inlined_call_operand.hbm [shape: bf16[128,128], index: 4, kind: input, shape index: {}]
  %s5 = inlined_call_operand.vmem [shape: f32[1,128], index: 5, kind: input, shape index: {}]
  %s6 = inlined_call_operand.vmem [shape: f32[1,128], index: 6, kind: input, shape index: {}]
  %s7 = inlined_call_operand.hbm [shape: f32[512,128], index: 7, kind: output, shape index: {}]
  %s8 = sld [smem:[#allocation0]]
  $region73: #{tpu_custom_call.1} parent=0
    _
  %s10 = ssub.s32 1, %s8
  %s11 = scalar_select 0, %s10, %s8
  $region1: #{tpu_custom_call.1} parent=0
    #allocation2 [shape = 'u8[131072]{0}', space=vmem, size = 0x20000, scoped, tag = 'input window, operand 0']
    #allocation3 [shape = 's32[2]{0}', space=sflag, size = 0x8, scoped, tag = 'scoped memory for tpu_custom_call.1']
    #allocation4 [shape = 's32[2]{0}', space=sflag, size = 0x8, scoped, tag = 'scoped memory for tpu_custom_call.1']
    #allocation5 [shape = 'u8[32768]{0}', space=vmem, size = 0x8000, scoped, tag = 'input window, operand 1, single buffered']
    #allocation6 [shape = 's32[1]{0}', space=sflag, size = 0x4, scoped, tag = 'scoped memory for tpu_custom_call.1']
    #allocation7 [shape = 'u8[32768]{0}', space=vmem, size = 0x8000, scoped, tag = 'input window, operand 4, single buffered']
    #allocation8 [shape = 'u8[262144]{0}', space=vmem, size = 0x40000, scoped, tag = 'output window, operand 0']
    %12 = vsyncpa [#allocation3], 0
    %s13 = scalar_lea.sflag [#allocation3], 1
    %14 = vsyncpa %s13, 0
    %15 = vsyncpa [#allocation6], 0
    %16 = vsyncpa [#allocation4], 0
    %s17 = scalar_lea.sflag [#allocation4], 1
    %18 = vsyncpa %s17, 0
    loop: start=0, step=1, limit=4
    $region2: #{tpu_custom_call.1} parent=1 // loop_pre_header
      _
    $region3: #{tpu_custom_call.1} parent=1 // loop_header
      %s20 = sphi 0, %s24
      %p21 = scmp.ge.s32.totalorder %s20, 4
      %s30 = sphi 0, %s32
      %s33 = sphi 0, %s30
      %s34 = sphi 0, %s33
      %s50 = sphi 0, %s34
      %s54 = sphi 0, %s54
      %s56 = sphi 0, %s54
      %s57 = sphi 0, %s56
      %s71 = sphi 0, %s57
      %s75 = sphi 0, %s75
      %s77 = sphi 0, %s75
      %s78 = sphi 0, %s77
      %s92 = sphi 0, %s78
      %s96 = sphi 0, %s96
      %s98 = sphi 0, %s96
      %s99 = sphi 0, %s98
      %s113 = sphi 0, %s99
      %s117 = sphi 0, %s117
      %s119 = sphi 0, %s117
      %s120 = sphi 0, %s119
      %s134 = sphi 0, %s120
      %s138 = sphi 0, %s138
      %s140 = sphi 0, %s138
      %s141 = sphi 0, %s140
      %s155 = sphi 0, %s141
      %s159 = sphi 0, %s159
      %s161 = sphi 0, %s159
      %s162 = sphi 0, %s161
      %s176 = sphi 0, %s162
      %s182 = sphi 0, %s184
      %s185 = sphi 0, %s182
      %s186 = sphi 0, %s185
      %s202 = sphi 0, %s186
    $region4: #{tpu_custom_call.1} parent=1 // loop_header_branch
      %23 = sbr.rel (%p21) target = $region8
    $region5: #{tpu_custom_call.1} parent=1 // loop_body
      %s25 = ssub.s32 %s20, 1
      %s26 = ssub.s32 %s20, 2
      %s27 = sadd.s32 %s20, 1
      %s28 = ssub.s32 %s20, %s27
      %p29 = scmp.eq.s32.totalorder %s28, 0
      %s31 = sadd.s32 %s30, 1
      %s32 = scalar_select %p29, %s30, %s31
      %p35 = pneg %p29
      %p36 = scmp.eq.s32.totalorder %s20, 1
      %p37 = por %p35, %p36
      %p38 = scmp.ne.s32.totalorder %s30, %s33
      %p39 = scmp.eq.s32.totalorder %s20, 0
      %p40 = por %p38, %p39
      %p41 = scmp.ne.s32.totalorder %s30, %s33
      %p42 = scmp.eq.s32.totalorder %s25, 1
      %p43 = por %p41, %p42
      %p44 = scmp.ne.s32.totalorder %s33, %s34
      %p45 = scmp.eq.s32.totalorder %s25, 0
      %p46 = por %p44, %p45
      %p47 = scmp.ne.s32.totalorder %s33, %s34
      %p48 = scmp.eq.s32.totalorder %s26, 1
      %p49 = por %p47, %p48
      %p51 = scmp.ne.s32.totalorder %s34, %s50
      %p52 = scmp.eq.s32.totalorder %s26, 0
      %p53 = por %p51, %p52
      %s55 = sadd.s32 %s54, 1
      %p58 = scmp.eq.s32.totalorder %s20, 1
      %p59 = scmp.ne.s32.totalorder %s54, %s56
      %p60 = scmp.eq.s32.totalorder %s20, 0
      %p61 = por %p59, %p60
      %p62 = scmp.ne.s32.totalorder %s54, %s56
      %p63 = scmp.eq.s32.totalorder %s25, 1
      %p64 = por %p62, %p63
      %p65 = scmp.ne.s32.totalorder %s56, %s57
      %p66 = scmp.eq.s32.totalorder %s25, 0
      %p67 = por %p65, %p66
      %p68 = scmp.ne.s32.totalorder %s56, %s57
      %p69 = scmp.eq.s32.totalorder %s26, 1
      %p70 = por %p68, %p69
      %p72 = scmp.ne.s32.totalorder %s57, %s71
      %p73 = scmp.eq.s32.totalorder %s26, 0
      %p74 = por %p72, %p73
      %s76 = sadd.s32 %s75, 1
      %p79 = scmp.eq.s32.totalorder %s20, 1
      %p80 = scmp.ne.s32.totalorder %s75, %s77
      %p81 = scmp.eq.s32.totalorder %s20, 0
      %p82 = por %p80, %p81
      %p83 = scmp.ne.s32.totalorder %s75, %s77
      %p84 = scmp.eq.s32.totalorder %s25, 1
      %p85 = por %p83, %p84
      %p86 = scmp.ne.s32.totalorder %s77, %s78
      %p87 = scmp.eq.s32.totalorder %s25, 0
      %p88 = por %p86, %p87
      %p89 = scmp.ne.s32.totalorder %s77, %s78
      %p90 = scmp.eq.s32.totalorder %s26, 1
      %p91 = por %p89, %p90
      %p93 = scmp.ne.s32.totalorder %s78, %s92
      %p94 = scmp.eq.s32.totalorder %s26, 0
      %p95 = por %p93, %p94
      %s97 = sadd.s32 %s96, 1
      %p100 = scmp.eq.s32.totalorder %s20, 1
      %p101 = scmp.ne.s32.totalorder %s96, %s98
      %p102 = scmp.eq.s32.totalorder %s20, 0
      %p103 = por %p101, %p102
      %p104 = scmp.ne.s32.totalorder %s96, %s98
      %p105 = scmp.eq.s32.totalorder %s25, 1
      %p106 = por %p104, %p105
      %p107 = scmp.ne.s32.totalorder %s98, %s99
      %p108 = scmp.eq.s32.totalorder %s25, 0
      %p109 = por %p107, %p108
      %p110 = scmp.ne.s32.totalorder %s98, %s99
      %p111 = scmp.eq.s32.totalorder %s26, 1
      %p112 = por %p110, %p111
      %p114 = scmp.ne.s32.totalorder %s99, %s113
      %p115 = scmp.eq.s32.totalorder %s26, 0
      %p116 = por %p114, %p115
      %s118 = sadd.s32 %s117, 1
      %p121 = scmp.eq.s32.totalorder %s20, 1
      %p122 = scmp.ne.s32.totalorder %s117, %s119
      %p123 = scmp.eq.s32.totalorder %s20, 0
      %p124 = por %p122, %p123
      %p125 = scmp.ne.s32.totalorder %s117, %s119
      %p126 = scmp.eq.s32.totalorder %s25, 1
      %p127 = por %p125, %p126
      %p128 = scmp.ne.s32.totalorder %s119, %s120
      %p129 = scmp.eq.s32.totalorder %s25, 0
      %p130 = por %p128, %p129
      %p131 = scmp.ne.s32.totalorder %s119, %s120
      %p132 = scmp.eq.s32.totalorder %s26, 1
      %p133 = por %p131, %p132
      %p135 = scmp.ne.s32.totalorder %s120, %s134
      %p136 = scmp.eq.s32.totalorder %s26, 0
      %p137 = por %p135, %p136
      %s139 = sadd.s32 %s138, 1
      %p142 = scmp.eq.s32.totalorder %s20, 1
      %p143 = scmp.ne.s32.totalorder %s138, %s140
      %p144 = scmp.eq.s32.totalorder %s20, 0
      %p145 = por %p143, %p144
      %p146 = scmp.ne.s32.totalorder %s138, %s140
      %p147 = scmp.eq.s32.totalorder %s25, 1
      %p148 = por %p146, %p147
      %p149 = scmp.ne.s32.totalorder %s140, %s141
      %p150 = scmp.eq.s32.totalorder %s25, 0
      %p151 = por %p149, %p150
      %p152 = scmp.ne.s32.totalorder %s140, %s141
      %p153 = scmp.eq.s32.totalorder %s26, 1
      %p154 = por %p152, %p153
      %p156 = scmp.ne.s32.totalorder %s141, %s155
      %p157 = scmp.eq.s32.totalorder %s26, 0
      %p158 = por %p156, %p157
      %s160 = sadd.s32 %s159, 1
      %p163 = scmp.eq.s32.totalorder %s20, 1
      %p164 = scmp.ne.s32.totalorder %s159, %s161
      %p165 = scmp.eq.s32.totalorder %s20, 0
      %p166 = por %p164, %p165
      %p167 = scmp.ne.s32.totalorder %s159, %s161
      %p168 = scmp.eq.s32.totalorder %s25, 1
      %p169 = por %p167, %p168
      %p170 = scmp.ne.s32.totalorder %s161, %s162
      %p171 = scmp.eq.s32.totalorder %s25, 0
      %p172 = por %p170, %p171
      %p173 = scmp.ne.s32.totalorder %s161, %s162
      %p174 = scmp.eq.s32.totalorder %s26, 1
      %p175 = por %p173, %p174
      %p177 = scmp.ne.s32.totalorder %s162, %s176
      %p178 = scmp.eq.s32.totalorder %s26, 0
      %p179 = por %p177, %p178
      %s180 = ssub.s32 %s20, %s27
      %p181 = scmp.eq.s32.totalorder %s180, 0
      %s183 = sadd.s32 %s182, 1
      %s184 = scalar_select %p181, %s182, %s183
      %p187 = pneg %p181
      %p188 = scmp.eq.s32.totalorder %s20, 1
      %p189 = por %p187, %p188
      %p190 = scmp.ne.s32.totalorder %s182, %s185
      %p191 = scmp.eq.s32.totalorder %s20, 0
      %p192 = por %p190, %p191
      %p193 = scmp.ne.s32.totalorder %s182, %s185
      %p194 = scmp.eq.s32.totalorder %s25, 1
      %p195 = por %p193, %p194
      %p196 = scmp.ne.s32.totalorder %s185, %s186
      %p197 = scmp.eq.s32.totalorder %s25, 0
      %p198 = por %p196, %p197
      %p199 = scmp.ne.s32.totalorder %s185, %s186
      %p200 = scmp.eq.s32.totalorder %s26, 1
      %p201 = por %p199, %p200
      %p203 = scmp.ne.s32.totalorder %s186, %s202
      %p204 = scmp.eq.s32.totalorder %s26, 0
      %p205 = por %p203, %p204
      %p206 = scmp.le.s32.totalorder 1, %s20
      %p207 = scmp.lt.s32.totalorder %s20, 3
      %p208 = pnand %p206, %p207
      %p209 = pneg %p208
      // Predicated region
      $region9: #{tpu_custom_call.1} parent=5 // pred_check
        _
      $region10: #{tpu_custom_call.1} parent=5 // pred_check_branch
        %211 = sbr.rel (%p208) target = $region12
      $region11: #{tpu_custom_call.1} parent=5 // pred_region
        %s212 = ssub.s32 %s20, 1
        // Predicated region
        $region13: #{tpu_custom_call.1} parent=11 // pred_check
          %p213 = pneg %p67
        $region14: #{tpu_custom_call.1} parent=11 // pred_check_branch
          %215 = sbr.rel (%p213) target = $region16
        $region15: #{tpu_custom_call.1} parent=11 // pred_region
          %217 = vsyncadd [#allocation6], 0
          %s218 = sshll.u32 %s1, 4
          %s219 = int_to_ptr.hbm [resolvable:$true] %s218
          %s220 = sshll.u32 [#allocation5], 4
          %s221 = int_to_ptr.vmem [resolvable:$true] %s220
          %226 = dma.hbm_to_vmem [thread:$0]  %s219, 1024, %s221, [#allocation6], 64, 64, 4
        $region16: #{tpu_custom_call.1} parent=11 // pred_fallthru
          _
        // Predicated region
        $region17: #{tpu_custom_call.1} parent=11 // pred_check
          %p227 = pneg %p88
        $region18: #{tpu_custom_call.1} parent=11 // pred_check_branch
          %229 = sbr.rel (%p227) target = $region20
        $region19: #{tpu_custom_call.1} parent=11 // pred_region
          _
        $region20: #{tpu_custom_call.1} parent=11 // pred_fallthru
          _
        // Predicated region
        $region21: #{tpu_custom_call.1} parent=11 // pred_check
          %p230 = pneg %p109
        $region22: #{tpu_custom_call.1} parent=11 // pred_check_branch
          %232 = sbr.rel (%p230) target = $region24
        $region23: #{tpu_custom_call.1} parent=11 // pred_region
          _
        $region24: #{tpu_custom_call.1} parent=11 // pred_fallthru
          _
        // Predicated region
        $region25: #{tpu_custom_call.1} parent=11 // pred_check
          %p233 = pneg %p130
        $region26: #{tpu_custom_call.1} parent=11 // pred_check_branch
          %235 = sbr.rel (%p233) target = $region28
        $region27: #{tpu_custom_call.1} parent=11 // pred_region
          %237 = vsyncadd [#allocation6], 0
          %s238 = sshll.u32 %s4, 4
          %s239 = int_to_ptr.hbm [resolvable:$true] %s238
          %s240 = sshll.u32 [#allocation7], 4
          %s241 = int_to_ptr.vmem [resolvable:$true] %s240
          %246 = dma.hbm_to_vmem [thread:$0]  %s239, 1024, %s241, [#allocation6], 64, 64, 4
        $region28: #{tpu_custom_call.1} parent=11 // pred_fallthru
          _
        // Predicated region
        $region29: #{tpu_custom_call.1} parent=11 // pred_check
          %p247 = pneg %p151
        $region30: #{tpu_custom_call.1} parent=11 // pred_check_branch
          %249 = sbr.rel (%p247) target = $region32
        $region31: #{tpu_custom_call.1} parent=11 // pred_region
          _
        $region32: #{tpu_custom_call.1} parent=11 // pred_fallthru
          _
        // Predicated region
        $region33: #{tpu_custom_call.1} parent=11 // pred_check
          %p250 = pneg %p172
        $region34: #{tpu_custom_call.1} parent=11 // pred_check_branch
          %252 = sbr.rel (%p250) target = $region36
        $region35: #{tpu_custom_call.1} parent=11 // pred_region
          _
        $region36: #{tpu_custom_call.1} parent=11 // pred_fallthru
          _
      $region12: #{tpu_custom_call.1} parent=5 // pred_fallthru
        _
      %p253 = scmp.lt.s32.totalorder %s20, 2
      // Predicated region
      $region37: #{tpu_custom_call.1} parent=5 // pred_check
        %p254 = pneg %p253
      $region38: #{tpu_custom_call.1} parent=5 // pred_check_branch
        %256 = sbr.rel (%p254) target = $region40
      $region39: #{tpu_custom_call.1} parent=5 // pred_region
        // Predicated region
        $region41: #{tpu_custom_call.1} parent=39 // pred_check
          %p257 = pneg %p40
        $region42: #{tpu_custom_call.1} parent=39 // pred_check_branch
          %259 = sbr.rel (%p257) target = $region44
        $region43: #{tpu_custom_call.1} parent=39 // pred_region
          %s260 = sand.u32 %s30, 1
          %s261 = scalar_lea.sflag [#allocation3], %s260
          %s262 = sand.u32 %s30, 1
          %s263 = smul.addr %s262, 128
          %s264 = scalar_lea.vmem [#allocation2], %s263
          %s265 = smul.u32 32, %s20
          %267 = vsyncadd %s261, 0
          %s268 = smul.addr %s265, 4
          %s269 = scalar_lea.hbm %s0, %s268
          %s270 = sshll.u32 %s269, 4
          %s271 = int_to_ptr.hbm [resolvable:$true] %s270
          %s272 = sshll.u32 %s264, 4
          %s273 = int_to_ptr.vmem [resolvable:$true] %s272
          %278 = dma.hbm_to_vmem [thread:$0]  %s271, 2048, %s273, %s261, 64, 64, 4
        $region44: #{tpu_custom_call.1} parent=39 // pred_fallthru
          _
      $region40: #{tpu_custom_call.1} parent=5 // pred_fallthru
        _
      %p279 = scmp.le.s32.totalorder 1, %s20
      %p280 = scmp.lt.s32.totalorder %s20, 3
      %p281 = pnand %p279, %p280
      %p282 = pneg %p281
      // Predicated region
      $region45: #{tpu_custom_call.1} parent=5 // pred_check
        _
      $region46: #{tpu_custom_call.1} parent=5 // pred_check_branch
        %284 = sbr.rel (%p281) target = $region48
      $region47: #{tpu_custom_call.1} parent=5 // pred_region
        %s285 = ssub.s32 %s20, 1
        %s286 = sand.u32 %s33, 1
        %s287 = scalar_lea.sflag [#allocation3], %s286
        %s288 = sand.u32 %s33, 1
        %s289 = smul.addr %s288, 128
        %s290 = scalar_lea.vmem [#allocation2], %s289
        // Predicated region
        $region49: #{tpu_custom_call.1} parent=47 // pred_check
          %p291 = pneg %p46
        $region50: #{tpu_custom_call.1} parent=47 // pred_check_branch
          %293 = sbr.rel (%p291) target = $region52
        $region51: #{tpu_custom_call.1} parent=47 // pred_region
          %295 = dma.done %s287, 2048
        $region52: #{tpu_custom_call.1} parent=47 // pred_fallthru
          _
        // Predicated region
        $region53: #{tpu_custom_call.1} parent=47 // pred_check
          %p296 = pneg %p67
        $region54: #{tpu_custom_call.1} parent=47 // pred_check_branch
          %298 = sbr.rel (%p296) target = $region56
        $region55: #{tpu_custom_call.1} parent=47 // pred_region
          %300 = dma.done [#allocation6], 1024
        $region56: #{tpu_custom_call.1} parent=47 // pred_fallthru
          _
        // Predicated region
        $region57: #{tpu_custom_call.1} parent=47 // pred_check
          %p301 = pneg %p130
        $region58: #{tpu_custom_call.1} parent=47 // pred_check_branch
          %303 = sbr.rel (%p301) target = $region60
        $region59: #{tpu_custom_call.1} parent=47 // pred_region
          %305 = dma.done [#allocation6], 1024
        $region60: #{tpu_custom_call.1} parent=47 // pred_fallthru
          _
        %s306 = sand.u32 %s33, 1
        %s307 = scalar_lea.sflag [#allocation3], %s306
        %s308 = sand.u32 %s33, 1
        %s309 = smul.addr %s308, 128
        %s310 = scalar_lea.vmem [#allocation2], %s309
        %p311 = pneg %p46
        %p312 = pneg %p43
        %p313 = pneg %p67
        %p314 = pneg %p64
        %p315 = pneg %p88
        %p316 = pneg %p85
        %p317 = pneg %p109
        %p318 = pneg %p106
        %p319 = pneg %p130
        %p320 = pneg %p127
        %p321 = pneg %p151
        %p322 = pneg %p148
        %p323 = pneg %p172
        %p324 = pneg %p169
        %p325 = pneg %p198
        %p326 = pneg %p195
        %s327 = sand.u32 %s185, 1
        %s328 = scalar_lea.sflag [#allocation4], %s327
        %s329 = sand.u32 %s185, 1
        %s330 = smul.addr %s329, 256
        %s331 = scalar_lea.vmem [#allocation8], %s330
        %s332 = smul.u32 32, %s25
        %s333 = smul.u32 32, %s25
        %v334 = vld [vmem:[%s2] sm:$0x1]
        %v335 = vld [vmem:[%s3] sm:$0x1]
        %v336 = vld [vmem:[%s5] sm:$0x1]
        %v337 = vld [vmem:[%s6] sm:$0x1]
        %v338 = vld [vmem:[%s290] sm:$0xf]
        %v339 = vld [vmem:[%s290 + $0x4] sm:$0xf]
        %v340 = vld [vmem:[%s290 + $0x8] sm:$0xf]
        %v341 = vld [vmem:[%s290 + $0xc] sm:$0xf]
        %v342 = vld [vmem:[%s290 + $0x10] sm:$0xf]
        %v343 = vld [vmem:[%s290 + $0x14] sm:$0xf]
        %v344 = vld [vmem:[%s290 + $0x18] sm:$0xf]
        %v345 = vld [vmem:[%s290 + $0x1c] sm:$0xf]
        %v346 = vld [vmem:[%s290 + $0x20] sm:$0xf]
        %v347 = vld [vmem:[%s290 + $0x24] sm:$0xf]
        %v348 = vld [vmem:[%s290 + $0x28] sm:$0xf]
        %v349 = vld [vmem:[%s290 + $0x2c] sm:$0xf]
        %v350 = vld [vmem:[%s290 + $0x30] sm:$0xf]
        %v351 = vld [vmem:[%s290 + $0x34] sm:$0xf]
        %v352 = vld [vmem:[%s290 + $0x38] sm:$0xf]
        %v353 = vld [vmem:[%s290 + $0x3c] sm:$0xf]
        %v354 = vld [vmem:[%s290 + $0x40] sm:$0xf]
        %v355 = vld [vmem:[%s290 + $0x44] sm:$0xf]
        %v356 = vld [vmem:[%s290 + $0x48] sm:$0xf]
        %v357 = vld [vmem:[%s290 + $0x4c] sm:$0xf]
        %v358 = vld [vmem:[%s290 + $0x50] sm:$0xf]
        %v359 = vld [vmem:[%s290 + $0x54] sm:$0xf]
        %v360 = vld [vmem:[%s290 + $0x58] sm:$0xf]
        %v361 = vld [vmem:[%s290 + $0x5c] sm:$0xf]
        %v362 = vld [vmem:[%s290 + $0x60] sm:$0xf]
        %v363 = vld [vmem:[%s290 + $0x64] sm:$0xf]
        %v364 = vld [vmem:[%s290 + $0x68] sm:$0xf]
        %v365 = vld [vmem:[%s290 + $0x6c] sm:$0xf]
        %v366 = vld [vmem:[%s290 + $0x70] sm:$0xf]
        %v367 = vld [vmem:[%s290 + $0x74] sm:$0xf]
        %v368 = vld [vmem:[%s290 + $0x78] sm:$0xf]
        %v369 = vld [vmem:[%s290 + $0x7c] sm:$0xf]
        %v370 = vld [vmem:[#allocation5] sm:$0xf]
        %v371 = vld [vmem:[#allocation5 + $0x4] sm:$0xf]
        %v372 = vld [vmem:[#allocation5 + $0x8] sm:$0xf]
        %v373 = vld [vmem:[#allocation5 + $0xc] sm:$0xf]
        %v374 = vld [vmem:[#allocation5 + $0x10] sm:$0xf]
        %v375 = vld [vmem:[#allocation5 + $0x14] sm:$0xf]
        %v376 = vld [vmem:[#allocation5 + $0x18] sm:$0xf]
        %v377 = vld [vmem:[#allocation5 + $0x1c] sm:$0xf]
        %v378 = vld [vmem:[#allocation5 + $0x20] sm:$0xf]
        %v379 = vld [vmem:[#allocation5 + $0x24] sm:$0xf]
        %v380 = vld [vmem:[#allocation5 + $0x28] sm:$0xf]
        %v381 = vld [vmem:[#allocation5 + $0x2c] sm:$0xf]
        %v382 = vld [vmem:[#allocation5 + $0x30] sm:$0xf]
        %v383 = vld [vmem:[#allocation5 + $0x34] sm:$0xf]
        %v384 = vld [vmem:[#allocation5 + $0x38] sm:$0xf]
        %v385 = vld [vmem:[#allocation5 + $0x3c] sm:$0xf]
        %v418 = vunpack.c.l.b16 %v338
        %v419 = vunpack.c.l.b16 %v339
        %v420 = vunpack.c.l.b16 %v340
        %v421 = vunpack.c.l.b16 %v341
        %v422 = vunpack.c.l.b16 %v342
        %v423 = vunpack.c.l.b16 %v343
        %v424 = vunpack.c.l.b16 %v344
        %v425 = vunpack.c.l.b16 %v345
        %v426 = vunpack.c.l.b16 %v346
        %v427 = vunpack.c.l.b16 %v347
        %v428 = vunpack.c.l.b16 %v348
        %v429 = vunpack.c.l.b16 %v349
        %v430 = vunpack.c.l.b16 %v350
        %v431 = vunpack.c.l.b16 %v351
        %v432 = vunpack.c.l.b16 %v352
        %v433 = vunpack.c.l.b16 %v353
        %v434 = vunpack.c.l.b16 %v354
        %v435 = vunpack.c.l.b16 %v355
        %v436 = vunpack.c.l.b16 %v356
        %v437 = vunpack.c.l.b16 %v357
        %v438 = vunpack.c.l.b16 %v358
        %v439 = vunpack.c.l.b16 %v359
        %v440 = vunpack.c.l.b16 %v360
        %v441 = vunpack.c.l.b16 %v361
        %v442 = vunpack.c.l.b16 %v362
        %v443 = vunpack.c.l.b16 %v363
        %v444 = vunpack.c.l.b16 %v364
        %v445 = vunpack.c.l.b16 %v365
        %v446 = vunpack.c.l.b16 %v366
        %v447 = vunpack.c.l.b16 %v367
        %v448 = vunpack.c.l.b16 %v368
        %v449 = vunpack.c.l.b16 %v369
        %v450 = vpack.c.b16 %v419, %v418
        %v451 = vpack.c.b16 %v421, %v420
        %v452 = vpack.c.b16 %v423, %v422
        %v453 = vpack.c.b16 %v425, %v424
        %v454 = vpack.c.b16 %v427, %v426
        %v455 = vpack.c.b16 %v429, %v428
        %v456 = vpack.c.b16 %v431, %v430
        %v457 = vpack.c.b16 %v433, %v432
        %v458 = vpack.c.b16 %v435, %v434
        %v459 = vpack.c.b16 %v437, %v436
        %v460 = vpack.c.b16 %v439, %v438
        %v461 = vpack.c.b16 %v441, %v440
        %v462 = vpack.c.b16 %v443, %v442
        %v463 = vpack.c.b16 %v445, %v444
        %v464 = vpack.c.b16 %v447, %v446
        %v465 = vpack.c.b16 %v449, %v448
        %v498 = vunpack.c.l.b16 %v370
        %v499 = vunpack.c.l.b16 %v371
        %v500 = vunpack.c.l.b16 %v372
        %v501 = vunpack.c.l.b16 %v373
        %v502 = vunpack.c.l.b16 %v374
        %v503 = vunpack.c.l.b16 %v375
        %v504 = vunpack.c.l.b16 %v376
        %v505 = vunpack.c.l.b16 %v377
        %v506 = vunpack.c.l.b16 %v378
        %v507 = vunpack.c.l.b16 %v379
        %v508 = vunpack.c.l.b16 %v380
        %v509 = vunpack.c.l.b16 %v381
        %v510 = vunpack.c.l.b16 %v382
        %v511 = vunpack.c.l.b16 %v383
        %v512 = vunpack.c.l.b16 %v384
        %v513 = vunpack.c.l.b16 %v385
        %v514 = vpack.c.b16 %v499, %v498
        %v515 = vpack.c.b16 %v501, %v500
        %v516 = vpack.c.b16 %v503, %v502
        %v517 = vpack.c.b16 %v505, %v504
        %v518 = vpack.c.b16 %v507, %v506
        %v519 = vpack.c.b16 %v509, %v508
        %v520 = vpack.c.b16 %v511, %v510
        %v521 = vpack.c.b16 %v513, %v512
        %530 = vmatpush.bf16.msra.mxu0 %v521
        %531 = vmatpush.bf16.msra.mxu0 %v520
        %532 = vmatpush.bf16.msra.mxu0 %v519
        %533 = vmatpush.bf16.msra.mxu0 %v518
        %534 = vmatpush.bf16.msra.mxu0 %v517
        %535 = vmatpush.bf16.msra.mxu0 %v516
        %536 = vmatpush.bf16.msra.mxu0 %v515
        %537 = vmatpush.bf16.msra.mxu0 %v514
        %538 = vmatmul.bf16.gmra.mxu0 %v450
        %v539 = vpop.f32.mrf.mxu0
        %v540 = vadd.f32 0.0, %v539
        %v541 = vpop.f32.mrf.mxu0
        %v542 = vadd.f32 0.0, %v541
        %543 = vmatmul.bf16.gmra.mxu0 %v451
        %v544 = vpop.f32.mrf.mxu0
        %v545 = vadd.f32 0.0, %v544
        %v546 = vpop.f32.mrf.mxu0
        %v547 = vadd.f32 0.0, %v546
        %548 = vmatmul.bf16.gmra.mxu0 %v452
        %v549 = vpop.f32.mrf.mxu0
        %v550 = vadd.f32 0.0, %v549
        %v551 = vpop.f32.mrf.mxu0
        %v552 = vadd.f32 0.0, %v551
        %553 = vmatmul.bf16.gmra.mxu0 %v453
        %v554 = vpop.f32.mrf.mxu0
        %v555 = vadd.f32 0.0, %v554
        %v556 = vpop.f32.mrf.mxu0
        %v557 = vadd.f32 0.0, %v556
        %558 = vmatmul.bf16.gmra.mxu0 %v454
        %v559 = vpop.f32.mrf.mxu0
        %v560 = vadd.f32 0.0, %v559
        %v561 = vpop.f32.mrf.mxu0
        %v562 = vadd.f32 0.0, %v561
        %563 = vmatmul.bf16.gmra.mxu0 %v455
        %v564 = vpop.f32.mrf.mxu0
        %v565 = vadd.f32 0.0, %v564
        %v566 = vpop.f32.mrf.mxu0
        %v567 = vadd.f32 0.0, %v566
        %568 = vmatmul.bf16.gmra.mxu0 %v456
        %v569 = vpop.f32.mrf.mxu0
        %v570 = vadd.f32 0.0, %v569
        %v571 = vpop.f32.mrf.mxu0
        %v572 = vadd.f32 0.0, %v571
        %573 = vmatmul.bf16.gmra.mxu0 %v457
        %v574 = vpop.f32.mrf.mxu0
        %v575 = vadd.f32 0.0, %v574
        %v576 = vpop.f32.mrf.mxu0
        %v577 = vadd.f32 0.0, %v576
        %578 = vmatmul.bf16.gmra.mxu0 %v458
        %v579 = vpop.f32.mrf.mxu0
        %v580 = vadd.f32 0.0, %v579
        %v581 = vpop.f32.mrf.mxu0
        %v582 = vadd.f32 0.0, %v581
        %583 = vmatmul.bf16.gmra.mxu0 %v459
        %v584 = vpop.f32.mrf.mxu0
        %v585 = vadd.f32 0.0, %v584
        %v586 = vpop.f32.mrf.mxu0
        %v587 = vadd.f32 0.0, %v586
        %588 = vmatmul.bf16.gmra.mxu0 %v460
        %v589 = vpop.f32.mrf.mxu0
        %v590 = vadd.f32 0.0, %v589
        %v591 = vpop.f32.mrf.mxu0
        %v592 = vadd.f32 0.0, %v591
        %593 = vmatmul.bf16.gmra.mxu0 %v461
        %v594 = vpop.f32.mrf.mxu0
        %v595 = vadd.f32 0.0, %v594
        %v596 = vpop.f32.mrf.mxu0
        %v597 = vadd.f32 0.0, %v596
        %598 = vmatmul.bf16.gmra.mxu0 %v462
        %v599 = vpop.f32.mrf.mxu0
        %v600 = vadd.f32 0.0, %v599
        %v601 = vpop.f32.mrf.mxu0
        %v602 = vadd.f32 0.0, %v601
        %603 = vmatmul.bf16.gmra.mxu0 %v463
        %v604 = vpop.f32.mrf.mxu0
        %v605 = vadd.f32 0.0, %v604
        %v606 = vpop.f32.mrf.mxu0
        %v607 = vadd.f32 0.0, %v606
        %608 = vmatmul.bf16.gmra.mxu0 %v464
        %v609 = vpop.f32.mrf.mxu0
        %v610 = vadd.f32 0.0, %v609
        %v611 = vpop.f32.mrf.mxu0
        %v612 = vadd.f32 0.0, %v611
        %613 = vmatmul.bf16.gmra.mxu0 %v465
        %v614 = vpop.f32.mrf.mxu0
        %v615 = vadd.f32 0.0, %v614
        %v616 = vpop.f32.mrf.mxu0
        %v617 = vadd.f32 0.0, %v616
        %618 = vdwg.mxu0
        %619 = vadd.xlane.f32.xlu0 %v540
        %v620 = vpop.xlane.xlu0 %619
        %621 = vadd.xlane.f32.xlu0 %v542
        %v622 = vpop.xlane.xlu0 %621
        %623 = vadd.xlane.f32.xlu0 %v545
        %v624 = vpop.xlane.xlu0 %623
        %625 = vadd.xlane.f32.xlu0 %v547
        %v626 = vpop.xlane.xlu0 %625
        %627 = vadd.xlane.f32.xlu0 %v550
        %v628 = vpop.xlane.xlu0 %627
        %629 = vadd.xlane.f32.xlu0 %v552
        %v630 = vpop.xlane.xlu0 %629
        %631 = vadd.xlane.f32.xlu0 %v555
        %v632 = vpop.xlane.xlu0 %631
        %633 = vadd.xlane.f32.xlu0 %v557
        %v634 = vpop.xlane.xlu0 %633
        %635 = vadd.xlane.f32.xlu0 %v560
        %v636 = vpop.xlane.xlu0 %635
        %637 = vadd.xlane.f32.xlu0 %v562
        %v638 = vpop.xlane.xlu0 %637
        %639 = vadd.xlane.f32.xlu0 %v565
        %v640 = vpop.xlane.xlu0 %639
        %641 = vadd.xlane.f32.xlu0 %v567
        %v642 = vpop.xlane.xlu0 %641
        %643 = vadd.xlane.f32.xlu0 %v570
        %v644 = vpop.xlane.xlu0 %643
        %645 = vadd.xlane.f32.xlu0 %v572
        %v646 = vpop.xlane.xlu0 %645
        %647 = vadd.xlane.f32.xlu0 %v575
        %v648 = vpop.xlane.xlu0 %647
        %649 = vadd.xlane.f32.xlu0 %v577
        %v650 = vpop.xlane.xlu0 %649
        %651 = vadd.xlane.f32.xlu0 %v580
        %v652 = vpop.xlane.xlu0 %651
        %653 = vadd.xlane.f32.xlu0 %v582
        %v654 = vpop.xlane.xlu0 %653
        %655 = vadd.xlane.f32.xlu0 %v585
        %v656 = vpop.xlane.xlu0 %655
        %657 = vadd.xlane.f32.xlu0 %v587
        %v658 = vpop.xlane.xlu0 %657
        %659 = vadd.xlane.f32.xlu0 %v590
        %v660 = vpop.xlane.xlu0 %659
        %661 = vadd.xlane.f32.xlu0 %v592
        %v662 = vpop.xlane.xlu0 %661
        %663 = vadd.xlane.f32.xlu0 %v595
        %v664 = vpop.xlane.xlu0 %663
        %665 = vadd.xlane.f32.xlu0 %v597
        %v666 = vpop.xlane.xlu0 %665
        %667 = vadd.xlane.f32.xlu0 %v600
        %v668 = vpop.xlane.xlu0 %667
        %669 = vadd.xlane.f32.xlu0 %v602
        %v670 = vpop.xlane.xlu0 %669
        %671 = vadd.xlane.f32.xlu0 %v605
        %v672 = vpop.xlane.xlu0 %671
        %673 = vadd.xlane.f32.xlu0 %v607
        %v674 = vpop.xlane.xlu0 %673
        %675 = vadd.xlane.f32.xlu0 %v610
        %v676 = vpop.xlane.xlu0 %675
        %677 = vadd.xlane.f32.xlu0 %v612
        %v678 = vpop.xlane.xlu0 %677
        %679 = vadd.xlane.f32.xlu0 %v615
        %v680 = vpop.xlane.xlu0 %679
        %681 = vadd.xlane.f32.xlu0 %v617
        %v682 = vpop.xlane.xlu0 %681
        %v683 = vmul.f32 %v620, 0.015625
        %v684 = vmul.f32 %v622, 0.015625
        %v685 = vmul.f32 %v624, 0.015625
        %v686 = vmul.f32 %v626, 0.015625
        %v687 = vmul.f32 %v628, 0.015625
        %v688 = vmul.f32 %v630, 0.015625
        %v689 = vmul.f32 %v632, 0.015625
        %v690 = vmul.f32 %v634, 0.015625
        %v691 = vmul.f32 %v636, 0.015625
        %v692 = vmul.f32 %v638, 0.015625
        %v693 = vmul.f32 %v640, 0.015625
        %v694 = vmul.f32 %v642, 0.015625
        %v695 = vmul.f32 %v644, 0.015625
        %v696 = vmul.f32 %v646, 0.015625
        %v697 = vmul.f32 %v648, 0.015625
        %v698 = vmul.f32 %v650, 0.015625
        %v699 = vmul.f32 %v652, 0.015625
        %v700 = vmul.f32 %v654, 0.015625
        %v701 = vmul.f32 %v656, 0.015625
        %v702 = vmul.f32 %v658, 0.015625
        %v703 = vmul.f32 %v660, 0.015625
        %v704 = vmul.f32 %v662, 0.015625
        %v705 = vmul.f32 %v664, 0.015625
        %v706 = vmul.f32 %v666, 0.015625
        %v707 = vmul.f32 %v668, 0.015625
        %v708 = vmul.f32 %v670, 0.015625
        %v709 = vmul.f32 %v672, 0.015625
        %v710 = vmul.f32 %v674, 0.015625
        %v711 = vmul.f32 %v676, 0.015625
        %v712 = vmul.f32 %v678, 0.015625
        %v713 = vmul.f32 %v680, 0.015625
        %v714 = vmul.f32 %v682, 0.015625
        %v715 = vsub.f32 %v540, %v683
        %v716 = vsub.f32 %v542, %v684
        %v717 = vsub.f32 %v545, %v685
        %v718 = vsub.f32 %v547, %v686
        %v719 = vsub.f32 %v550, %v687
        %v720 = vsub.f32 %v552, %v688
        %v721 = vsub.f32 %v555, %v689
        %v722 = vsub.f32 %v557, %v690
        %v723 = vsub.f32 %v560, %v691
        %v724 = vsub.f32 %v562, %v692
        %v725 = vsub.f32 %v565, %v693
        %v726 = vsub.f32 %v567, %v694
        %v727 = vsub.f32 %v570, %v695
        %v728 = vsub.f32 %v572, %v696
        %v729 = vsub.f32 %v575, %v697
        %v730 = vsub.f32 %v577, %v698
        %v731 = vsub.f32 %v580, %v699
        %v732 = vsub.f32 %v582, %v700
        %v733 = vsub.f32 %v585, %v701
        %v734 = vsub.f32 %v587, %v702
        %v735 = vsub.f32 %v590, %v703
        %v736 = vsub.f32 %v592, %v704
        %v737 = vsub.f32 %v595, %v705
        %v738 = vsub.f32 %v597, %v706
        %v739 = vsub.f32 %v600, %v707
        %v740 = vsub.f32 %v602, %v708
        %v741 = vsub.f32 %v605, %v709
        %v742 = vsub.f32 %v607, %v710
        %v743 = vsub.f32 %v610, %v711
        %v744 = vsub.f32 %v612, %v712
        %v745 = vsub.f32 %v615, %v713
        %v746 = vsub.f32 %v617, %v714
        %v747 = vlaneseq
        %v748 = vand.u32 %v747, 127
        %vm749 = vcmp.lt.s32.totalorder %v748, 64
        %v750 = vmul.f32 %v715, %v715
        %v751 = vmul.f32 %v716, %v716
        %v752 = vmul.f32 %v717, %v717
        %v753 = vmul.f32 %v718, %v718
        %v754 = vmul.f32 %v719, %v719
        %v755 = vmul.f32 %v720, %v720
        %v756 = vmul.f32 %v721, %v721
        %v757 = vmul.f32 %v722, %v722
        %v758 = vmul.f32 %v723, %v723
        %v759 = vmul.f32 %v724, %v724
        %v760 = vmul.f32 %v725, %v725
        %v761 = vmul.f32 %v726, %v726
        %v762 = vmul.f32 %v727, %v727
        %v763 = vmul.f32 %v728, %v728
        %v764 = vmul.f32 %v729, %v729
        %v765 = vmul.f32 %v730, %v730
        %v766 = vmul.f32 %v731, %v731
        %v767 = vmul.f32 %v732, %v732
        %v768 = vmul.f32 %v733, %v733
        %v769 = vmul.f32 %v734, %v734
        %v770 = vmul.f32 %v735, %v735
        %v771 = vmul.f32 %v736, %v736
        %v772 = vmul.f32 %v737, %v737
        %v773 = vmul.f32 %v738, %v738
        %v774 = vmul.f32 %v739, %v739
        %v775 = vmul.f32 %v740, %v740
        %v776 = vmul.f32 %v741, %v741
        %v777 = vmul.f32 %v742, %v742
        %v778 = vmul.f32 %v743, %v743
        %v779 = vmul.f32 %v744, %v744
        %v780 = vmul.f32 %v745, %v745
        %v781 = vmul.f32 %v746, %v746
        %v782 = vsel %vm749, 1, 0
        %vm783 = vcmp.eq.s32.totalorder %v782, 1
        %v784 = vsel %vm783, %v750, 0.0
        %v785 = vsel %vm783, %v751, 0.0
        %v786 = vsel %vm783, %v752, 0.0
        %v787 = vsel %vm783, %v753, 0.0
        %v788 = vsel %vm783, %v754, 0.0
        %v789 = vsel %vm783, %v755, 0.0
        %v790 = vsel %vm783, %v756, 0.0
        %v791 = vsel %vm783, %v757, 0.0
        %v792 = vsel %vm783, %v758, 0.0
        %v793 = vsel %vm783, %v759, 0.0
        %v794 = vsel %vm783, %v760, 0.0
        %v795 = vsel %vm783, %v761, 0.0
        %v796 = vsel %vm783, %v762, 0.0
        %v797 = vsel %vm783, %v763, 0.0
        %v798 = vsel %vm783, %v764, 0.0
        %v799 = vsel %vm783, %v765, 0.0
        %v800 = vsel %vm783, %v766, 0.0
        %v801 = vsel %vm783, %v767, 0.0
        %v802 = vsel %vm783, %v768, 0.0
        %v803 = vsel %vm783, %v769, 0.0
        %v804 = vsel %vm783, %v770, 0.0
        %v805 = vsel %vm783, %v771, 0.0
        %v806 = vsel %vm783, %v772, 0.0
        %v807 = vsel %vm783, %v773, 0.0
        %v808 = vsel %vm783, %v774, 0.0
        %v809 = vsel %vm783, %v775, 0.0
        %v810 = vsel %vm783, %v776, 0.0
        %v811 = vsel %vm783, %v777, 0.0
        %v812 = vsel %vm783, %v778, 0.0
        %v813 = vsel %vm783, %v779, 0.0
        %v814 = vsel %vm783, %v780, 0.0
        %v815 = vsel %vm783, %v781, 0.0
        %816 = vadd.xlane.f32.xlu0 %v784
        %v817 = vpop.xlane.xlu0 %816
        %818 = vadd.xlane.f32.xlu0 %v785
        %v819 = vpop.xlane.xlu0 %818
        %820 = vadd.xlane.f32.xlu0 %v786
        %v821 = vpop.xlane.xlu0 %820
        %822 = vadd.xlane.f32.xlu0 %v787
        %v823 = vpop.xlane.xlu0 %822
        %824 = vadd.xlane.f32.xlu0 %v788
        %v825 = vpop.xlane.xlu0 %824
        %826 = vadd.xlane.f32.xlu0 %v789
        %v827 = vpop.xlane.xlu0 %826
        %828 = vadd.xlane.f32.xlu0 %v790
        %v829 = vpop.xlane.xlu0 %828
        %830 = vadd.xlane.f32.xlu0 %v791
        %v831 = vpop.xlane.xlu0 %830
        %832 = vadd.xlane.f32.xlu0 %v792
        %v833 = vpop.xlane.xlu0 %832
        %834 = vadd.xlane.f32.xlu0 %v793
        %v835 = vpop.xlane.xlu0 %834
        %836 = vadd.xlane.f32.xlu0 %v794
        %v837 = vpop.xlane.xlu0 %836
        %838 = vadd.xlane.f32.xlu0 %v795
        %v839 = vpop.xlane.xlu0 %838
        %840 = vadd.xlane.f32.xlu0 %v796
        %v841 = vpop.xlane.xlu0 %840
        %842 = vadd.xlane.f32.xlu0 %v797
        %v843 = vpop.xlane.xlu0 %842
        %844 = vadd.xlane.f32.xlu0 %v798
        %v845 = vpop.xlane.xlu0 %844
        %846 = vadd.xlane.f32.xlu0 %v799
        %v847 = vpop.xlane.xlu0 %846
        %848 = vadd.xlane.f32.xlu0 %v800
        %v849 = vpop.xlane.xlu0 %848
        %850 = vadd.xlane.f32.xlu0 %v801
        %v851 = vpop.xlane.xlu0 %850
        %852 = vadd.xlane.f32.xlu0 %v802
        %v853 = vpop.xlane.xlu0 %852
        %854 = vadd.xlane.f32.xlu0 %v803
        %v855 = vpop.xlane.xlu0 %854
        %856 = vadd.xlane.f32.xlu0 %v804
        %v857 = vpop.xlane.xlu0 %856
        %858 = vadd.xlane.f32.xlu0 %v805
        %v859 = vpop.xlane.xlu0 %858
        %860 = vadd.xlane.f32.xlu0 %v806
        %v861 = vpop.xlane.xlu0 %860
        %862 = vadd.xlane.f32.xlu0 %v807
        %v863 = vpop.xlane.xlu0 %862
        %864 = vadd.xlane.f32.xlu0 %v808
        %v865 = vpop.xlane.xlu0 %864
        %866 = vadd.xlane.f32.xlu0 %v809
        %v867 = vpop.xlane.xlu0 %866
        %868 = vadd.xlane.f32.xlu0 %v810
        %v869 = vpop.xlane.xlu0 %868
        %870 = vadd.xlane.f32.xlu0 %v811
        %v871 = vpop.xlane.xlu0 %870
        %872 = vadd.xlane.f32.xlu0 %v812
        %v873 = vpop.xlane.xlu0 %872
        %874 = vadd.xlane.f32.xlu0 %v813
        %v875 = vpop.xlane.xlu0 %874
        %876 = vadd.xlane.f32.xlu0 %v814
        %v877 = vpop.xlane.xlu0 %876
        %878 = vadd.xlane.f32.xlu0 %v815
        %v879 = vpop.xlane.xlu0 %878
        %v880 = vmul.f32 %v817, 0.015625
        %v881 = vmul.f32 %v819, 0.015625
        %v882 = vmul.f32 %v821, 0.015625
        %v883 = vmul.f32 %v823, 0.015625
        %v884 = vmul.f32 %v825, 0.015625
        %v885 = vmul.f32 %v827, 0.015625
        %v886 = vmul.f32 %v829, 0.015625
        %v887 = vmul.f32 %v831, 0.015625
        %v888 = vmul.f32 %v833, 0.015625
        %v889 = vmul.f32 %v835, 0.015625
        %v890 = vmul.f32 %v837, 0.015625
        %v891 = vmul.f32 %v839, 0.015625
        %v892 = vmul.f32 %v841, 0.015625
        %v893 = vmul.f32 %v843, 0.015625
        %v894 = vmul.f32 %v845, 0.015625
        %v895 = vmul.f32 %v847, 0.015625
        %v896 = vmul.f32 %v849, 0.015625
        %v897 = vmul.f32 %v851, 0.015625
        %v898 = vmul.f32 %v853, 0.015625
        %v899 = vmul.f32 %v855, 0.015625
        %v900 = vmul.f32 %v857, 0.015625
        %v901 = vmul.f32 %v859, 0.015625
        %v902 = vmul.f32 %v861, 0.015625
        %v903 = vmul.f32 %v863, 0.015625
        %v904 = vmul.f32 %v865, 0.015625
        %v905 = vmul.f32 %v867, 0.015625
        %v906 = vmul.f32 %v869, 0.015625
        %v907 = vmul.f32 %v871, 0.015625
        %v908 = vmul.f32 %v873, 0.015625
        %v909 = vmul.f32 %v875, 0.015625
        %v910 = vmul.f32 %v877, 0.015625
        %v911 = vmul.f32 %v879, 0.015625
        %v912 = vadd.f32 %v880, 1e-05
        %v913 = vadd.f32 %v881, 1e-05
        %v914 = vadd.f32 %v882, 1e-05
        %v915 = vadd.f32 %v883, 1e-05
        %v916 = vadd.f32 %v884, 1e-05
        %v917 = vadd.f32 %v885, 1e-05
        %v918 = vadd.f32 %v886, 1e-05
        %v919 = vadd.f32 %v887, 1e-05
        %v920 = vadd.f32 %v888, 1e-05
        %v921 = vadd.f32 %v889, 1e-05
        %v922 = vadd.f32 %v890, 1e-05
        %v923 = vadd.f32 %v891, 1e-05
        %v924 = vadd.f32 %v892, 1e-05
        %v925 = vadd.f32 %v893, 1e-05
        %v926 = vadd.f32 %v894, 1e-05
        %v927 = vadd.f32 %v895, 1e-05
        %v928 = vadd.f32 %v896, 1e-05
        %v929 = vadd.f32 %v897, 1e-05
        %v930 = vadd.f32 %v898, 1e-05
        %v931 = vadd.f32 %v899, 1e-05
        %v932 = vadd.f32 %v900, 1e-05
        %v933 = vadd.f32 %v901, 1e-05
        %v934 = vadd.f32 %v902, 1e-05
        %v935 = vadd.f32 %v903, 1e-05
        %v936 = vadd.f32 %v904, 1e-05
        %v937 = vadd.f32 %v905, 1e-05
        %v938 = vadd.f32 %v906, 1e-05
        %v939 = vadd.f32 %v907, 1e-05
        %v940 = vadd.f32 %v908, 1e-05
        %v941 = vadd.f32 %v909, 1e-05
        %v942 = vadd.f32 %v910, 1e-05
        %v943 = vadd.f32 %v911, 1e-05
        %v944 = vrsqrt.pop %v912
        %v945 = vmul.f32 %v944, %v912
        %v946 = vmul.f32 %v945, %v944
        %v947 = vmul.f32 0.5, %v946
        %v948 = vsub.f32 1.5, %v947
        %v949 = vmul.f32 %v944, %v948
        %vm950 = vweird.f32 %v912
        %vm951 = vweird.f32 %v944
        %vm952 = vmor %vm950, %vm951
        %v953 = vsel %vm952, %v944, %v949
        %v954 = vrsqrt.pop %v913
        %v955 = vmul.f32 %v954, %v913
        %v956 = vmul.f32 %v955, %v954
        %v957 = vmul.f32 0.5, %v956
        %v958 = vsub.f32 1.5, %v957
        %v959 = vmul.f32 %v954, %v958
        %vm960 = vweird.f32 %v913
        %vm961 = vweird.f32 %v954
        %vm962 = vmor %vm960, %vm961
        %v963 = vsel %vm962, %v954, %v959
        %v964 = vrsqrt.pop %v914
        %v965 = vmul.f32 %v964, %v914
        %v966 = vmul.f32 %v965, %v964
        %v967 = vmul.f32 0.5, %v966
        %v968 = vsub.f32 1.5, %v967
        %v969 = vmul.f32 %v964, %v968
        %vm970 = vweird.f32 %v914
        %vm971 = vweird.f32 %v964
        %vm972 = vmor %vm970, %vm971
        %v973 = vsel %vm972, %v964, %v969
        %v974 = vrsqrt.pop %v915
        %v975 = vmul.f32 %v974, %v915
        %v976 = vmul.f32 %v975, %v974
        %v977 = vmul.f32 0.5, %v976
        %v978 = vsub.f32 1.5, %v977
        %v979 = vmul.f32 %v974, %v978
        %vm980 = vweird.f32 %v915
        %vm981 = vweird.f32 %v974
        %vm982 = vmor %vm980, %vm981
        %v983 = vsel %vm982, %v974, %v979
        %v984 = vrsqrt.pop %v916
        %v985 = vmul.f32 %v984, %v916
        %v986 = vmul.f32 %v985, %v984
        %v987 = vmul.f32 0.5, %v986
        %v988 = vsub.f32 1.5, %v987
        %v989 = vmul.f32 %v984, %v988
        %vm990 = vweird.f32 %v916
        %vm991 = vweird.f32 %v984
        %vm992 = vmor %vm990, %vm991
        %v993 = vsel %vm992, %v984, %v989
        %v994 = vrsqrt.pop %v917
        %v995 = vmul.f32 %v994, %v917
        %v996 = vmul.f32 %v995, %v994
        %v997 = vmul.f32 0.5, %v996
        %v998 = vsub.f32 1.5, %v997
        %v999 = vmul.f32 %v994, %v998
        %vm1000 = vweird.f32 %v917
        %vm1001 = vweird.f32 %v994
        %vm1002 = vmor %vm1000, %vm1001
        %v1003 = vsel %vm1002, %v994, %v999
        %v1004 = vrsqrt.pop %v918
        %v1005 = vmul.f32 %v1004, %v918
        %v1006 = vmul.f32 %v1005, %v1004
        %v1007 = vmul.f32 0.5, %v1006
        %v1008 = vsub.f32 1.5, %v1007
        %v1009 = vmul.f32 %v1004, %v1008
        %vm1010 = vweird.f32 %v918
        %vm1011 = vweird.f32 %v1004
        %vm1012 = vmor %vm1010, %vm1011
        %v1013 = vsel %vm1012, %v1004, %v1009
        %v1014 = vrsqrt.pop %v919
        %v1015 = vmul.f32 %v1014, %v919
        %v1016 = vmul.f32 %v1015, %v1014
        %v1017 = vmul.f32 0.5, %v1016
        %v1018 = vsub.f32 1.5, %v1017
        %v1019 = vmul.f32 %v1014, %v1018
        %vm1020 = vweird.f32 %v919
        %vm1021 = vweird.f32 %v1014
        %vm1022 = vmor %vm1020, %vm1021
        %v1023 = vsel %vm1022, %v1014, %v1019
        %v1024 = vrsqrt.pop %v920
        %v1025 = vmul.f32 %v1024, %v920
        %v1026 = vmul.f32 %v1025, %v1024
        %v1027 = vmul.f32 0.5, %v1026
        %v1028 = vsub.f32 1.5, %v1027
        %v1029 = vmul.f32 %v1024, %v1028
        %vm1030 = vweird.f32 %v920
        %vm1031 = vweird.f32 %v1024
        %vm1032 = vmor %vm1030, %vm1031
        %v1033 = vsel %vm1032, %v1024, %v1029
        %v1034 = vrsqrt.pop %v921
        %v1035 = vmul.f32 %v1034, %v921
        %v1036 = vmul.f32 %v1035, %v1034
        %v1037 = vmul.f32 0.5, %v1036
        %v1038 = vsub.f32 1.5, %v1037
        %v1039 = vmul.f32 %v1034, %v1038
        %vm1040 = vweird.f32 %v921
        %vm1041 = vweird.f32 %v1034
        %vm1042 = vmor %vm1040, %vm1041
        %v1043 = vsel %vm1042, %v1034, %v1039
        %v1044 = vrsqrt.pop %v922
        %v1045 = vmul.f32 %v1044, %v922
        %v1046 = vmul.f32 %v1045, %v1044
        %v1047 = vmul.f32 0.5, %v1046
        %v1048 = vsub.f32 1.5, %v1047
        %v1049 = vmul.f32 %v1044, %v1048
        %vm1050 = vweird.f32 %v922
        %vm1051 = vweird.f32 %v1044
        %vm1052 = vmor %vm1050, %vm1051
        %v1053 = vsel %vm1052, %v1044, %v1049
        %v1054 = vrsqrt.pop %v923
        %v1055 = vmul.f32 %v1054, %v923
        %v1056 = vmul.f32 %v1055, %v1054
        %v1057 = vmul.f32 0.5, %v1056
        %v1058 = vsub.f32 1.5, %v1057
        %v1059 = vmul.f32 %v1054, %v1058
        %vm1060 = vweird.f32 %v923
        %vm1061 = vweird.f32 %v1054
        %vm1062 = vmor %vm1060, %vm1061
        %v1063 = vsel %vm1062, %v1054, %v1059
        %v1064 = vrsqrt.pop %v924
        %v1065 = vmul.f32 %v1064, %v924
        %v1066 = vmul.f32 %v1065, %v1064
        %v1067 = vmul.f32 0.5, %v1066
        %v1068 = vsub.f32 1.5, %v1067
        %v1069 = vmul.f32 %v1064, %v1068
        %vm1070 = vweird.f32 %v924
        %vm1071 = vweird.f32 %v1064
        %vm1072 = vmor %vm1070, %vm1071
        %v1073 = vsel %vm1072, %v1064, %v1069
        %v1074 = vrsqrt.pop %v925
        %v1075 = vmul.f32 %v1074, %v925
        %v1076 = vmul.f32 %v1075, %v1074
        %v1077 = vmul.f32 0.5, %v1076
        %v1078 = vsub.f32 1.5, %v1077
        %v1079 = vmul.f32 %v1074, %v1078
        %vm1080 = vweird.f32 %v925
        %vm1081 = vweird.f32 %v1074
        %vm1082 = vmor %vm1080, %vm1081
        %v1083 = vsel %vm1082, %v1074, %v1079
        %v1084 = vrsqrt.pop %v926
        %v1085 = vmul.f32 %v1084, %v926
        %v1086 = vmul.f32 %v1085, %v1084
        %v1087 = vmul.f32 0.5, %v1086
        %v1088 = vsub.f32 1.5, %v1087
        %v1089 = vmul.f32 %v1084, %v1088
        %vm1090 = vweird.f32 %v926
        %vm1091 = vweird.f32 %v1084
        %vm1092 = vmor %vm1090, %vm1091
        %v1093 = vsel %vm1092, %v1084, %v1089
        %v1094 = vrsqrt.pop %v927
        %v1095 = vmul.f32 %v1094, %v927
        %v1096 = vmul.f32 %v1095, %v1094
        %v1097 = vmul.f32 0.5, %v1096
        %v1098 = vsub.f32 1.5, %v1097
        %v1099 = vmul.f32 %v1094, %v1098
        %vm1100 = vweird.f32 %v927
        %vm1101 = vweird.f32 %v1094
        %vm1102 = vmor %vm1100, %vm1101
        %v1103 = vsel %vm1102, %v1094, %v1099
        %v1104 = vrsqrt.pop %v928
        %v1105 = vmul.f32 %v1104, %v928
        %v1106 = vmul.f32 %v1105, %v1104
        %v1107 = vmul.f32 0.5, %v1106
        %v1108 = vsub.f32 1.5, %v1107
        %v1109 = vmul.f32 %v1104, %v1108
        %vm1110 = vweird.f32 %v928
        %vm1111 = vweird.f32 %v1104
        %vm1112 = vmor %vm1110, %vm1111
        %v1113 = vsel %vm1112, %v1104, %v1109
        %v1114 = vrsqrt.pop %v929
        %v1115 = vmul.f32 %v1114, %v929
        %v1116 = vmul.f32 %v1115, %v1114
        %v1117 = vmul.f32 0.5, %v1116
        %v1118 = vsub.f32 1.5, %v1117
        %v1119 = vmul.f32 %v1114, %v1118
        %vm1120 = vweird.f32 %v929
        %vm1121 = vweird.f32 %v1114
        %vm1122 = vmor %vm1120, %vm1121
        %v1123 = vsel %vm1122, %v1114, %v1119
        %v1124 = vrsqrt.pop %v930
        %v1125 = vmul.f32 %v1124, %v930
        %v1126 = vmul.f32 %v1125, %v1124
        %v1127 = vmul.f32 0.5, %v1126
        %v1128 = vsub.f32 1.5, %v1127
        %v1129 = vmul.f32 %v1124, %v1128
        %vm1130 = vweird.f32 %v930
        %vm1131 = vweird.f32 %v1124
        %vm1132 = vmor %vm1130, %vm1131
        %v1133 = vsel %vm1132, %v1124, %v1129
        %v1134 = vrsqrt.pop %v931
        %v1135 = vmul.f32 %v1134, %v931
        %v1136 = vmul.f32 %v1135, %v1134
        %v1137 = vmul.f32 0.5, %v1136
        %v1138 = vsub.f32 1.5, %v1137
        %v1139 = vmul.f32 %v1134, %v1138
        %vm1140 = vweird.f32 %v931
        %vm1141 = vweird.f32 %v1134
        %vm1142 = vmor %vm1140, %vm1141
        %v1143 = vsel %vm1142, %v1134, %v1139
        %v1144 = vrsqrt.pop %v932
        %v1145 = vmul.f32 %v1144, %v932
        %v1146 = vmul.f32 %v1145, %v1144
        %v1147 = vmul.f32 0.5, %v1146
        %v1148 = vsub.f32 1.5, %v1147
        %v1149 = vmul.f32 %v1144, %v1148
        %vm1150 = vweird.f32 %v932
        %vm1151 = vweird.f32 %v1144
        %vm1152 = vmor %vm1150, %vm1151
        %v1153 = vsel %vm1152, %v1144, %v1149
        %v1154 = vrsqrt.pop %v933
        %v1155 = vmul.f32 %v1154, %v933
        %v1156 = vmul.f32 %v1155, %v1154
        %v1157 = vmul.f32 0.5, %v1156
        %v1158 = vsub.f32 1.5, %v1157
        %v1159 = vmul.f32 %v1154, %v1158
        %vm1160 = vweird.f32 %v933
        %vm1161 = vweird.f32 %v1154
        %vm1162 = vmor %vm1160, %vm1161
        %v1163 = vsel %vm1162, %v1154, %v1159
        %v1164 = vrsqrt.pop %v934
        %v1165 = vmul.f32 %v1164, %v934
        %v1166 = vmul.f32 %v1165, %v1164
        %v1167 = vmul.f32 0.5, %v1166
        %v1168 = vsub.f32 1.5, %v1167
        %v1169 = vmul.f32 %v1164, %v1168
        %vm1170 = vweird.f32 %v934
        %vm1171 = vweird.f32 %v1164
        %vm1172 = vmor %vm1170, %vm1171
        %v1173 = vsel %vm1172, %v1164, %v1169
        %v1174 = vrsqrt.pop %v935
        %v1175 = vmul.f32 %v1174, %v935
        %v1176 = vmul.f32 %v1175, %v1174
        %v1177 = vmul.f32 0.5, %v1176
        %v1178 = vsub.f32 1.5, %v1177
        %v1179 = vmul.f32 %v1174, %v1178
        %vm1180 = vweird.f32 %v935
        %vm1181 = vweird.f32 %v1174
        %vm1182 = vmor %vm1180, %vm1181
        %v1183 = vsel %vm1182, %v1174, %v1179
        %v1184 = vrsqrt.pop %v936
        %v1185 = vmul.f32 %v1184, %v936
        %v1186 = vmul.f32 %v1185, %v1184
        %v1187 = vmul.f32 0.5, %v1186
        %v1188 = vsub.f32 1.5, %v1187
        %v1189 = vmul.f32 %v1184, %v1188
        %vm1190 = vweird.f32 %v936
        %vm1191 = vweird.f32 %v1184
        %vm1192 = vmor %vm1190, %vm1191
        %v1193 = vsel %vm1192, %v1184, %v1189
        %v1194 = vrsqrt.pop %v937
        %v1195 = vmul.f32 %v1194, %v937
        %v1196 = vmul.f32 %v1195, %v1194
        %v1197 = vmul.f32 0.5, %v1196
        %v1198 = vsub.f32 1.5, %v1197
        %v1199 = vmul.f32 %v1194, %v1198
        %vm1200 = vweird.f32 %v937
        %vm1201 = vweird.f32 %v1194
        %vm1202 = vmor %vm1200, %vm1201
        %v1203 = vsel %vm1202, %v1194, %v1199
        %v1204 = vrsqrt.pop %v938
        %v1205 = vmul.f32 %v1204, %v938
        %v1206 = vmul.f32 %v1205, %v1204
        %v1207 = vmul.f32 0.5, %v1206
        %v1208 = vsub.f32 1.5, %v1207
        %v1209 = vmul.f32 %v1204, %v1208
        %vm1210 = vweird.f32 %v938
        %vm1211 = vweird.f32 %v1204
        %vm1212 = vmor %vm1210, %vm1211
        %v1213 = vsel %vm1212, %v1204, %v1209
        %v1214 = vrsqrt.pop %v939
        %v1215 = vmul.f32 %v1214, %v939
        %v1216 = vmul.f32 %v1215, %v1214
        %v1217 = vmul.f32 0.5, %v1216
        %v1218 = vsub.f32 1.5, %v1217
        %v1219 = vmul.f32 %v1214, %v1218
        %vm1220 = vweird.f32 %v939
        %vm1221 = vweird.f32 %v1214
        %vm1222 = vmor %vm1220, %vm1221
        %v1223 = vsel %vm1222, %v1214, %v1219
        %v1224 = vrsqrt.pop %v940
        %v1225 = vmul.f32 %v1224, %v940
        %v1226 = vmul.f32 %v1225, %v1224
        %v1227 = vmul.f32 0.5, %v1226
        %v1228 = vsub.f32 1.5, %v1227
        %v1229 = vmul.f32 %v1224, %v1228
        %vm1230 = vweird.f32 %v940
        %vm1231 = vweird.f32 %v1224
        %vm1232 = vmor %vm1230, %vm1231
        %v1233 = vsel %vm1232, %v1224, %v1229
        %v1234 = vrsqrt.pop %v941
        %v1235 = vmul.f32 %v1234, %v941
        %v1236 = vmul.f32 %v1235, %v1234
        %v1237 = vmul.f32 0.5, %v1236
        %v1238 = vsub.f32 1.5, %v1237
        %v1239 = vmul.f32 %v1234, %v1238
        %vm1240 = vweird.f32 %v941
        %vm1241 = vweird.f32 %v1234
        %vm1242 = vmor %vm1240, %vm1241
        %v1243 = vsel %vm1242, %v1234, %v1239
        %v1244 = vrsqrt.pop %v942
        %v1245 = vmul.f32 %v1244, %v942
        %v1246 = vmul.f32 %v1245, %v1244
        %v1247 = vmul.f32 0.5, %v1246
        %v1248 = vsub.f32 1.5, %v1247
        %v1249 = vmul.f32 %v1244, %v1248
        %vm1250 = vweird.f32 %v942
        %vm1251 = vweird.f32 %v1244
        %vm1252 = vmor %vm1250, %vm1251
        %v1253 = vsel %vm1252, %v1244, %v1249
        %v1254 = vrsqrt.pop %v943
        %v1255 = vmul.f32 %v1254, %v943
        %v1256 = vmul.f32 %v1255, %v1254
        %v1257 = vmul.f32 0.5, %v1256
        %v1258 = vsub.f32 1.5, %v1257
        %v1259 = vmul.f32 %v1254, %v1258
        %vm1260 = vweird.f32 %v943
        %vm1261 = vweird.f32 %v1254
        %vm1262 = vmor %vm1260, %vm1261
        %v1263 = vsel %vm1262, %v1254, %v1259
        %v1264 = vmul.f32 %v715, %v953
        %v1265 = vmul.f32 %v716, %v963
        %v1266 = vmul.f32 %v717, %v973
        %v1267 = vmul.f32 %v718, %v983
        %v1268 = vmul.f32 %v719, %v993
        %v1269 = vmul.f32 %v720, %v1003
        %v1270 = vmul.f32 %v721, %v1013
        %v1271 = vmul.f32 %v722, %v1023
        %v1272 = vmul.f32 %v723, %v1033
        %v1273 = vmul.f32 %v724, %v1043
        %v1274 = vmul.f32 %v725, %v1053
        %v1275 = vmul.f32 %v726, %v1063
        %v1276 = vmul.f32 %v727, %v1073
        %v1277 = vmul.f32 %v728, %v1083
        %v1278 = vmul.f32 %v729, %v1093
        %v1279 = vmul.f32 %v730, %v1103
        %v1280 = vmul.f32 %v731, %v1113
        %v1281 = vmul.f32 %v732, %v1123
        %v1282 = vmul.f32 %v733, %v1133
        %v1283 = vmul.f32 %v734, %v1143
        %v1284 = vmul.f32 %v735, %v1153
        %v1285 = vmul.f32 %v736, %v1163
        %v1286 = vmul.f32 %v737, %v1173
        %v1287 = vmul.f32 %v738, %v1183
        %v1288 = vmul.f32 %v739, %v1193
        %v1289 = vmul.f32 %v740, %v1203
        %v1290 = vmul.f32 %v741, %v1213
        %v1291 = vmul.f32 %v742, %v1223
        %v1292 = vmul.f32 %v743, %v1233
        %v1293 = vmul.f32 %v744, %v1243
        %v1294 = vmul.f32 %v745, %v1253
        %v1295 = vmul.f32 %v746, %v1263
        %v1297 = vperm.slane %v334, 0
        %v1299 = vmul.f32 %v1264, %v1297
        %v1300 = vmul.f32 %v1265, %v1297
        %v1301 = vmul.f32 %v1266, %v1297
        %v1302 = vmul.f32 %v1267, %v1297
        %v1303 = vmul.f32 %v1268, %v1297
        %v1304 = vmul.f32 %v1269, %v1297
        %v1305 = vmul.f32 %v1270, %v1297
        %v1306 = vmul.f32 %v1271, %v1297
        %v1307 = vmul.f32 %v1272, %v1297
        %v1308 = vmul.f32 %v1273, %v1297
        %v1309 = vmul.f32 %v1274, %v1297
        %v1310 = vmul.f32 %v1275, %v1297
        %v1311 = vmul.f32 %v1276, %v1297
        %v1312 = vmul.f32 %v1277, %v1297
        %v1313 = vmul.f32 %v1278, %v1297
        %v1314 = vmul.f32 %v1279, %v1297
        %v1315 = vmul.f32 %v1280, %v1297
        %v1316 = vmul.f32 %v1281, %v1297
        %v1317 = vmul.f32 %v1282, %v1297
        %v1318 = vmul.f32 %v1283, %v1297
        %v1319 = vmul.f32 %v1284, %v1297
        %v1320 = vmul.f32 %v1285, %v1297
        %v1321 = vmul.f32 %v1286, %v1297
        %v1322 = vmul.f32 %v1287, %v1297
        %v1323 = vmul.f32 %v1288, %v1297
        %v1324 = vmul.f32 %v1289, %v1297
        %v1325 = vmul.f32 %v1290, %v1297
        %v1326 = vmul.f32 %v1291, %v1297
        %v1327 = vmul.f32 %v1292, %v1297
        %v1328 = vmul.f32 %v1293, %v1297
        %v1329 = vmul.f32 %v1294, %v1297
        %v1330 = vmul.f32 %v1295, %v1297
        %v1332 = vperm.slane %v335, 0
        %v1334 = vadd.f32 %v1299, %v1332
        %v1335 = vadd.f32 %v1300, %v1332
        %v1336 = vadd.f32 %v1301, %v1332
        %v1337 = vadd.f32 %v1302, %v1332
        %v1338 = vadd.f32 %v1303, %v1332
        %v1339 = vadd.f32 %v1304, %v1332
        %v1340 = vadd.f32 %v1305, %v1332
        %v1341 = vadd.f32 %v1306, %v1332
        %v1342 = vadd.f32 %v1307, %v1332
        %v1343 = vadd.f32 %v1308, %v1332
        %v1344 = vadd.f32 %v1309, %v1332
        %v1345 = vadd.f32 %v1310, %v1332
        %v1346 = vadd.f32 %v1311, %v1332
        %v1347 = vadd.f32 %v1312, %v1332
        %v1348 = vadd.f32 %v1313, %v1332
        %v1349 = vadd.f32 %v1314, %v1332
        %v1350 = vadd.f32 %v1315, %v1332
        %v1351 = vadd.f32 %v1316, %v1332
        %v1352 = vadd.f32 %v1317, %v1332
        %v1353 = vadd.f32 %v1318, %v1332
        %v1354 = vadd.f32 %v1319, %v1332
        %v1355 = vadd.f32 %v1320, %v1332
        %v1356 = vadd.f32 %v1321, %v1332
        %v1357 = vadd.f32 %v1322, %v1332
        %v1358 = vadd.f32 %v1323, %v1332
        %v1359 = vadd.f32 %v1324, %v1332
        %v1360 = vadd.f32 %v1325, %v1332
        %v1361 = vadd.f32 %v1326, %v1332
        %v1362 = vadd.f32 %v1327, %v1332
        %v1363 = vadd.f32 %v1328, %v1332
        %v1364 = vadd.f32 %v1329, %v1332
        %v1365 = vadd.f32 %v1330, %v1332
        %v1366 = vmax.f32 %v1334, 0.0
        %v1367 = vmax.f32 %v1335, 0.0
        %v1368 = vmax.f32 %v1336, 0.0
        %v1369 = vmax.f32 %v1337, 0.0
        %v1370 = vmax.f32 %v1338, 0.0
        %v1371 = vmax.f32 %v1339, 0.0
        %v1372 = vmax.f32 %v1340, 0.0
        %v1373 = vmax.f32 %v1341, 0.0
        %v1374 = vmax.f32 %v1342, 0.0
        %v1375 = vmax.f32 %v1343, 0.0
        %v1376 = vmax.f32 %v1344, 0.0
        %v1377 = vmax.f32 %v1345, 0.0
        %v1378 = vmax.f32 %v1346, 0.0
        %v1379 = vmax.f32 %v1347, 0.0
        %v1380 = vmax.f32 %v1348, 0.0
        %v1381 = vmax.f32 %v1349, 0.0
        %v1382 = vmax.f32 %v1350, 0.0
        %v1383 = vmax.f32 %v1351, 0.0
        %v1384 = vmax.f32 %v1352, 0.0
        %v1385 = vmax.f32 %v1353, 0.0
        %v1386 = vmax.f32 %v1354, 0.0
        %v1387 = vmax.f32 %v1355, 0.0
        %v1388 = vmax.f32 %v1356, 0.0
        %v1389 = vmax.f32 %v1357, 0.0
        %v1390 = vmax.f32 %v1358, 0.0
        %v1391 = vmax.f32 %v1359, 0.0
        %v1392 = vmax.f32 %v1360, 0.0
        %v1393 = vmax.f32 %v1361, 0.0
        %v1394 = vmax.f32 %v1362, 0.0
        %v1395 = vmax.f32 %v1363, 0.0
        %v1396 = vmax.f32 %v1364, 0.0
        %v1397 = vmax.f32 %v1365, 0.0
        %v1398 = vpack.c.bf16 %v1367, %v1366
        %v1399 = vpack.c.bf16 %v1369, %v1368
        %v1400 = vpack.c.bf16 %v1371, %v1370
        %v1401 = vpack.c.bf16 %v1373, %v1372
        %v1402 = vpack.c.bf16 %v1375, %v1374
        %v1403 = vpack.c.bf16 %v1377, %v1376
        %v1404 = vpack.c.bf16 %v1379, %v1378
        %v1405 = vpack.c.bf16 %v1381, %v1380
        %v1406 = vpack.c.bf16 %v1383, %v1382
        %v1407 = vpack.c.bf16 %v1385, %v1384
        %v1408 = vpack.c.bf16 %v1387, %v1386
        %v1409 = vpack.c.bf16 %v1389, %v1388
        %v1410 = vpack.c.bf16 %v1391, %v1390
        %v1411 = vpack.c.bf16 %v1393, %v1392
        %v1412 = vpack.c.bf16 %v1395, %v1394
        %v1413 = vpack.c.bf16 %v1397, %v1396
        %v1414 = vld [vmem:[#allocation7] sm:$0xf]
        %v1415 = vld [vmem:[#allocation7 + $0x4] sm:$0xf]
        %v1416 = vld [vmem:[#allocation7 + $0x8] sm:$0xf]
        %v1417 = vld [vmem:[#allocation7 + $0xc] sm:$0xf]
        %v1418 = vld [vmem:[#allocation7 + $0x10] sm:$0xf]
        %v1419 = vld [vmem:[#allocation7 + $0x14] sm:$0xf]
        %v1420 = vld [vmem:[#allocation7 + $0x18] sm:$0xf]
        %v1421 = vld [vmem:[#allocation7 + $0x1c] sm:$0xf]
        %v1422 = vld [vmem:[#allocation7 + $0x20] sm:$0xf]
        %v1423 = vld [vmem:[#allocation7 + $0x24] sm:$0xf]
        %v1424 = vld [vmem:[#allocation7 + $0x28] sm:$0xf]
        %v1425 = vld [vmem:[#allocation7 + $0x2c] sm:$0xf]
        %v1426 = vld [vmem:[#allocation7 + $0x30] sm:$0xf]
        %v1427 = vld [vmem:[#allocation7 + $0x34] sm:$0xf]
        %v1428 = vld [vmem:[#allocation7 + $0x38] sm:$0xf]
        %v1429 = vld [vmem:[#allocation7 + $0x3c] sm:$0xf]
        %v1446 = vunpack.c.l.b16 %v1414
        %v1447 = vunpack.c.l.b16 %v1415
        %v1448 = vunpack.c.l.b16 %v1416
        %v1449 = vunpack.c.l.b16 %v1417
        %v1450 = vunpack.c.l.b16 %v1418
        %v1451 = vunpack.c.l.b16 %v1419
        %v1452 = vunpack.c.l.b16 %v1420
        %v1453 = vunpack.c.l.b16 %v1421
        %v1454 = vunpack.c.l.b16 %v1422
        %v1455 = vunpack.c.l.b16 %v1423
        %v1456 = vunpack.c.l.b16 %v1424
        %v1457 = vunpack.c.l.b16 %v1425
        %v1458 = vunpack.c.l.b16 %v1426
        %v1459 = vunpack.c.l.b16 %v1427
        %v1460 = vunpack.c.l.b16 %v1428
        %v1461 = vunpack.c.l.b16 %v1429
        %v1462 = vpack.c.b16 %v1447, %v1446
        %v1463 = vpack.c.b16 %v1449, %v1448
        %v1464 = vpack.c.b16 %v1451, %v1450
        %v1465 = vpack.c.b16 %v1453, %v1452
        %v1466 = vpack.c.b16 %v1455, %v1454
        %v1467 = vpack.c.b16 %v1457, %v1456
        %v1468 = vpack.c.b16 %v1459, %v1458
        %v1469 = vpack.c.b16 %v1461, %v1460
        %1478 = vmatpush.bf16.msra.mxu0 %v1469
        %1479 = vmatpush.bf16.msra.mxu0 %v1468
        %1480 = vmatpush.bf16.msra.mxu0 %v1467
        %1481 = vmatpush.bf16.msra.mxu0 %v1466
        %1482 = vmatpush.bf16.msra.mxu0 %v1465
        %1483 = vmatpush.bf16.msra.mxu0 %v1464
        %1484 = vmatpush.bf16.msra.mxu0 %v1463
        %1485 = vmatpush.bf16.msra.mxu0 %v1462
        %1486 = vmatmul.bf16.gmra.mxu0 %v1398
        %v1487 = vpop.f32.mrf.mxu0
        %v1488 = vadd.f32 0.0, %v1487
        %v1489 = vpop.f32.mrf.mxu0
        %v1490 = vadd.f32 0.0, %v1489
        %1491 = vmatmul.bf16.gmra.mxu0 %v1399
        %v1492 = vpop.f32.mrf.mxu0
        %v1493 = vadd.f32 0.0, %v1492
        %v1494 = vpop.f32.mrf.mxu0
        %v1495 = vadd.f32 0.0, %v1494
        %1496 = vmatmul.bf16.gmra.mxu0 %v1400
        %v1497 = vpop.f32.mrf.mxu0
        %v1498 = vadd.f32 0.0, %v1497
        %v1499 = vpop.f32.mrf.mxu0
        %v1500 = vadd.f32 0.0, %v1499
        %1501 = vmatmul.bf16.gmra.mxu0 %v1401
        %v1502 = vpop.f32.mrf.mxu0
        %v1503 = vadd.f32 0.0, %v1502
        %v1504 = vpop.f32.mrf.mxu0
        %v1505 = vadd.f32 0.0, %v1504
        %1506 = vmatmul.bf16.gmra.mxu0 %v1402
        %v1507 = vpop.f32.mrf.mxu0
        %v1508 = vadd.f32 0.0, %v1507
        %v1509 = vpop.f32.mrf.mxu0
        %v1510 = vadd.f32 0.0, %v1509
        %1511 = vmatmul.bf16.gmra.mxu0 %v1403
        %v1512 = vpop.f32.mrf.mxu0
        %v1513 = vadd.f32 0.0, %v1512
        %v1514 = vpop.f32.mrf.mxu0
        %v1515 = vadd.f32 0.0, %v1514
        %1516 = vmatmul.bf16.gmra.mxu0 %v1404
        %v1517 = vpop.f32.mrf.mxu0
        %v1518 = vadd.f32 0.0, %v1517
        %v1519 = vpop.f32.mrf.mxu0
        %v1520 = vadd.f32 0.0, %v1519
        %1521 = vmatmul.bf16.gmra.mxu0 %v1405
        %v1522 = vpop.f32.mrf.mxu0
        %v1523 = vadd.f32 0.0, %v1522
        %v1524 = vpop.f32.mrf.mxu0
        %v1525 = vadd.f32 0.0, %v1524
        %1526 = vmatmul.bf16.gmra.mxu0 %v1406
        %v1527 = vpop.f32.mrf.mxu0
        %v1528 = vadd.f32 0.0, %v1527
        %v1529 = vpop.f32.mrf.mxu0
        %v1530 = vadd.f32 0.0, %v1529
        %1531 = vmatmul.bf16.gmra.mxu0 %v1407
        %v1532 = vpop.f32.mrf.mxu0
        %v1533 = vadd.f32 0.0, %v1532
        %v1534 = vpop.f32.mrf.mxu0
        %v1535 = vadd.f32 0.0, %v1534
        %1536 = vmatmul.bf16.gmra.mxu0 %v1408
        %v1537 = vpop.f32.mrf.mxu0
        %v1538 = vadd.f32 0.0, %v1537
        %v1539 = vpop.f32.mrf.mxu0
        %v1540 = vadd.f32 0.0, %v1539
        %1541 = vmatmul.bf16.gmra.mxu0 %v1409
        %v1542 = vpop.f32.mrf.mxu0
        %v1543 = vadd.f32 0.0, %v1542
        %v1544 = vpop.f32.mrf.mxu0
        %v1545 = vadd.f32 0.0, %v1544
        %1546 = vmatmul.bf16.gmra.mxu0 %v1410
        %v1547 = vpop.f32.mrf.mxu0
        %v1548 = vadd.f32 0.0, %v1547
        %v1549 = vpop.f32.mrf.mxu0
        %v1550 = vadd.f32 0.0, %v1549
        %1551 = vmatmul.bf16.gmra.mxu0 %v1411
        %v1552 = vpop.f32.mrf.mxu0
        %v1553 = vadd.f32 0.0, %v1552
        %v1554 = vpop.f32.mrf.mxu0
        %v1555 = vadd.f32 0.0, %v1554
        %1556 = vmatmul.bf16.gmra.mxu0 %v1412
        %v1557 = vpop.f32.mrf.mxu0
        %v1558 = vadd.f32 0.0, %v1557
        %v1559 = vpop.f32.mrf.mxu0
        %v1560 = vadd.f32 0.0, %v1559
        %1561 = vmatmul.bf16.gmra.mxu0 %v1413
        %v1562 = vpop.f32.mrf.mxu0
        %v1563 = vadd.f32 0.0, %v1562
        %v1564 = vpop.f32.mrf.mxu0
        %v1565 = vadd.f32 0.0, %v1564
        %1566 = vdwg.mxu0
        %1567 = vadd.xlane.f32.xlu0 %v1488
        %v1568 = vpop.xlane.xlu0 %1567
        %1569 = vadd.xlane.f32.xlu0 %v1490
        %v1570 = vpop.xlane.xlu0 %1569
        %1571 = vadd.xlane.f32.xlu0 %v1493
        %v1572 = vpop.xlane.xlu0 %1571
        %1573 = vadd.xlane.f32.xlu0 %v1495
        %v1574 = vpop.xlane.xlu0 %1573
        %1575 = vadd.xlane.f32.xlu0 %v1498
        %v1576 = vpop.xlane.xlu0 %1575
        %1577 = vadd.xlane.f32.xlu0 %v1500
        %v1578 = vpop.xlane.xlu0 %1577
        %1579 = vadd.xlane.f32.xlu0 %v1503
        %v1580 = vpop.xlane.xlu0 %1579
        %1581 = vadd.xlane.f32.xlu0 %v1505
        %v1582 = vpop.xlane.xlu0 %1581
        %1583 = vadd.xlane.f32.xlu0 %v1508
        %v1584 = vpop.xlane.xlu0 %1583
        %1585 = vadd.xlane.f32.xlu0 %v1510
        %v1586 = vpop.xlane.xlu0 %1585
        %1587 = vadd.xlane.f32.xlu0 %v1513
        %v1588 = vpop.xlane.xlu0 %1587
        %1589 = vadd.xlane.f32.xlu0 %v1515
        %v1590 = vpop.xlane.xlu0 %1589
        %1591 = vadd.xlane.f32.xlu0 %v1518
        %v1592 = vpop.xlane.xlu0 %1591
        %1593 = vadd.xlane.f32.xlu0 %v1520
        %v1594 = vpop.xlane.xlu0 %1593
        %1595 = vadd.xlane.f32.xlu0 %v1523
        %v1596 = vpop.xlane.xlu0 %1595
        %1597 = vadd.xlane.f32.xlu0 %v1525
        %v1598 = vpop.xlane.xlu0 %1597
        %1599 = vadd.xlane.f32.xlu0 %v1528
        %v1600 = vpop.xlane.xlu0 %1599
        %1601 = vadd.xlane.f32.xlu0 %v1530
        %v1602 = vpop.xlane.xlu0 %1601
        %1603 = vadd.xlane.f32.xlu0 %v1533
        %v1604 = vpop.xlane.xlu0 %1603
        %1605 = vadd.xlane.f32.xlu0 %v1535
        %v1606 = vpop.xlane.xlu0 %1605
        %1607 = vadd.xlane.f32.xlu0 %v1538
        %v1608 = vpop.xlane.xlu0 %1607
        %1609 = vadd.xlane.f32.xlu0 %v1540
        %v1610 = vpop.xlane.xlu0 %1609
        %1611 = vadd.xlane.f32.xlu0 %v1543
        %v1612 = vpop.xlane.xlu0 %1611
        %1613 = vadd.xlane.f32.xlu0 %v1545
        %v1614 = vpop.xlane.xlu0 %1613
        %1615 = vadd.xlane.f32.xlu0 %v1548
        %v1616 = vpop.xlane.xlu0 %1615
        %1617 = vadd.xlane.f32.xlu0 %v1550
        %v1618 = vpop.xlane.xlu0 %1617
        %1619 = vadd.xlane.f32.xlu0 %v1553
        %v1620 = vpop.xlane.xlu0 %1619
        %1621 = vadd.xlane.f32.xlu0 %v1555
        %v1622 = vpop.xlane.xlu0 %1621
        %1623 = vadd.xlane.f32.xlu0 %v1558
        %v1624 = vpop.xlane.xlu0 %1623
        %1625 = vadd.xlane.f32.xlu0 %v1560
        %v1626 = vpop.xlane.xlu0 %1625
        %1627 = vadd.xlane.f32.xlu0 %v1563
        %v1628 = vpop.xlane.xlu0 %1627
        %1629 = vadd.xlane.f32.xlu0 %v1565
        %v1630 = vpop.xlane.xlu0 %1629
        %v1631 = vmul.f32 %v1568, 0.015625
        %v1632 = vmul.f32 %v1570, 0.015625
        %v1633 = vmul.f32 %v1572, 0.015625
        %v1634 = vmul.f32 %v1574, 0.015625
        %v1635 = vmul.f32 %v1576, 0.015625
        %v1636 = vmul.f32 %v1578, 0.015625
        %v1637 = vmul.f32 %v1580, 0.015625
        %v1638 = vmul.f32 %v1582, 0.015625
        %v1639 = vmul.f32 %v1584, 0.015625
        %v1640 = vmul.f32 %v1586, 0.015625
        %v1641 = vmul.f32 %v1588, 0.015625
        %v1642 = vmul.f32 %v1590, 0.015625
        %v1643 = vmul.f32 %v1592, 0.015625
        %v1644 = vmul.f32 %v1594, 0.015625
        %v1645 = vmul.f32 %v1596, 0.015625
        %v1646 = vmul.f32 %v1598, 0.015625
        %v1647 = vmul.f32 %v1600, 0.015625
        %v1648 = vmul.f32 %v1602, 0.015625
        %v1649 = vmul.f32 %v1604, 0.015625
        %v1650 = vmul.f32 %v1606, 0.015625
        %v1651 = vmul.f32 %v1608, 0.015625
        %v1652 = vmul.f32 %v1610, 0.015625
        %v1653 = vmul.f32 %v1612, 0.015625
        %v1654 = vmul.f32 %v1614, 0.015625
        %v1655 = vmul.f32 %v1616, 0.015625
        %v1656 = vmul.f32 %v1618, 0.015625
        %v1657 = vmul.f32 %v1620, 0.015625
        %v1658 = vmul.f32 %v1622, 0.015625
        %v1659 = vmul.f32 %v1624, 0.015625
        %v1660 = vmul.f32 %v1626, 0.015625
        %v1661 = vmul.f32 %v1628, 0.015625
        %v1662 = vmul.f32 %v1630, 0.015625
        %v1663 = vsub.f32 %v1488, %v1631
        %v1664 = vsub.f32 %v1490, %v1632
        %v1665 = vsub.f32 %v1493, %v1633
        %v1666 = vsub.f32 %v1495, %v1634
        %v1667 = vsub.f32 %v1498, %v1635
        %v1668 = vsub.f32 %v1500, %v1636
        %v1669 = vsub.f32 %v1503, %v1637
        %v1670 = vsub.f32 %v1505, %v1638
        %v1671 = vsub.f32 %v1508, %v1639
        %v1672 = vsub.f32 %v1510, %v1640
        %v1673 = vsub.f32 %v1513, %v1641
        %v1674 = vsub.f32 %v1515, %v1642
        %v1675 = vsub.f32 %v1518, %v1643
        %v1676 = vsub.f32 %v1520, %v1644
        %v1677 = vsub.f32 %v1523, %v1645
        %v1678 = vsub.f32 %v1525, %v1646
        %v1679 = vsub.f32 %v1528, %v1647
        %v1680 = vsub.f32 %v1530, %v1648
        %v1681 = vsub.f32 %v1533, %v1649
        %v1682 = vsub.f32 %v1535, %v1650
        %v1683 = vsub.f32 %v1538, %v1651
        %v1684 = vsub.f32 %v1540, %v1652
        %v1685 = vsub.f32 %v1543, %v1653
        %v1686 = vsub.f32 %v1545, %v1654
        %v1687 = vsub.f32 %v1548, %v1655
        %v1688 = vsub.f32 %v1550, %v1656
        %v1689 = vsub.f32 %v1553, %v1657
        %v1690 = vsub.f32 %v1555, %v1658
        %v1691 = vsub.f32 %v1558, %v1659
        %v1692 = vsub.f32 %v1560, %v1660
        %v1693 = vsub.f32 %v1563, %v1661
        %v1694 = vsub.f32 %v1565, %v1662
        %v1695 = vmul.f32 %v1663, %v1663
        %v1696 = vmul.f32 %v1664, %v1664
        %v1697 = vmul.f32 %v1665, %v1665
        %v1698 = vmul.f32 %v1666, %v1666
        %v1699 = vmul.f32 %v1667, %v1667
        %v1700 = vmul.f32 %v1668, %v1668
        %v1701 = vmul.f32 %v1669, %v1669
        %v1702 = vmul.f32 %v1670, %v1670
        %v1703 = vmul.f32 %v1671, %v1671
        %v1704 = vmul.f32 %v1672, %v1672
        %v1705 = vmul.f32 %v1673, %v1673
        %v1706 = vmul.f32 %v1674, %v1674
        %v1707 = vmul.f32 %v1675, %v1675
        %v1708 = vmul.f32 %v1676, %v1676
        %v1709 = vmul.f32 %v1677, %v1677
        %v1710 = vmul.f32 %v1678, %v1678
        %v1711 = vmul.f32 %v1679, %v1679
        %v1712 = vmul.f32 %v1680, %v1680
        %v1713 = vmul.f32 %v1681, %v1681
        %v1714 = vmul.f32 %v1682, %v1682
        %v1715 = vmul.f32 %v1683, %v1683
        %v1716 = vmul.f32 %v1684, %v1684
        %v1717 = vmul.f32 %v1685, %v1685
        %v1718 = vmul.f32 %v1686, %v1686
        %v1719 = vmul.f32 %v1687, %v1687
        %v1720 = vmul.f32 %v1688, %v1688
        %v1721 = vmul.f32 %v1689, %v1689
        %v1722 = vmul.f32 %v1690, %v1690
        %v1723 = vmul.f32 %v1691, %v1691
        %v1724 = vmul.f32 %v1692, %v1692
        %v1725 = vmul.f32 %v1693, %v1693
        %v1726 = vmul.f32 %v1694, %v1694
        %v1727 = vsel %vm783, %v1695, 0.0
        %v1728 = vsel %vm783, %v1696, 0.0
        %v1729 = vsel %vm783, %v1697, 0.0
        %v1730 = vsel %vm783, %v1698, 0.0
        %v1731 = vsel %vm783, %v1699, 0.0
        %v1732 = vsel %vm783, %v1700, 0.0
        %v1733 = vsel %vm783, %v1701, 0.0
        %v1734 = vsel %vm783, %v1702, 0.0
        %v1735 = vsel %vm783, %v1703, 0.0
        %v1736 = vsel %vm783, %v1704, 0.0
        %v1737 = vsel %vm783, %v1705, 0.0
        %v1738 = vsel %vm783, %v1706, 0.0
        %v1739 = vsel %vm783, %v1707, 0.0
        %v1740 = vsel %vm783, %v1708, 0.0
        %v1741 = vsel %vm783, %v1709, 0.0
        %v1742 = vsel %vm783, %v1710, 0.0
        %v1743 = vsel %vm783, %v1711, 0.0
        %v1744 = vsel %vm783, %v1712, 0.0
        %v1745 = vsel %vm783, %v1713, 0.0
        %v1746 = vsel %vm783, %v1714, 0.0
        %v1747 = vsel %vm783, %v1715, 0.0
        %v1748 = vsel %vm783, %v1716, 0.0
        %v1749 = vsel %vm783, %v1717, 0.0
        %v1750 = vsel %vm783, %v1718, 0.0
        %v1751 = vsel %vm783, %v1719, 0.0
        %v1752 = vsel %vm783, %v1720, 0.0
        %v1753 = vsel %vm783, %v1721, 0.0
        %v1754 = vsel %vm783, %v1722, 0.0
        %v1755 = vsel %vm783, %v1723, 0.0
        %v1756 = vsel %vm783, %v1724, 0.0
        %v1757 = vsel %vm783, %v1725, 0.0
        %v1758 = vsel %vm783, %v1726, 0.0
        %1759 = vadd.xlane.f32.xlu0 %v1727
        %v1760 = vpop.xlane.xlu0 %1759
        %1761 = vadd.xlane.f32.xlu0 %v1728
        %v1762 = vpop.xlane.xlu0 %1761
        %1763 = vadd.xlane.f32.xlu0 %v1729
        %v1764 = vpop.xlane.xlu0 %1763
        %1765 = vadd.xlane.f32.xlu0 %v1730
        %v1766 = vpop.xlane.xlu0 %1765
        %1767 = vadd.xlane.f32.xlu0 %v1731
        %v1768 = vpop.xlane.xlu0 %1767
        %1769 = vadd.xlane.f32.xlu0 %v1732
        %v1770 = vpop.xlane.xlu0 %1769
        %1771 = vadd.xlane.f32.xlu0 %v1733
        %v1772 = vpop.xlane.xlu0 %1771
        %1773 = vadd.xlane.f32.xlu0 %v1734
        %v1774 = vpop.xlane.xlu0 %1773
        %1775 = vadd.xlane.f32.xlu0 %v1735
        %v1776 = vpop.xlane.xlu0 %1775
        %1777 = vadd.xlane.f32.xlu0 %v1736
        %v1778 = vpop.xlane.xlu0 %1777
        %1779 = vadd.xlane.f32.xlu0 %v1737
        %v1780 = vpop.xlane.xlu0 %1779
        %1781 = vadd.xlane.f32.xlu0 %v1738
        %v1782 = vpop.xlane.xlu0 %1781
        %1783 = vadd.xlane.f32.xlu0 %v1739
        %v1784 = vpop.xlane.xlu0 %1783
        %1785 = vadd.xlane.f32.xlu0 %v1740
        %v1786 = vpop.xlane.xlu0 %1785
        %1787 = vadd.xlane.f32.xlu0 %v1741
        %v1788 = vpop.xlane.xlu0 %1787
        %1789 = vadd.xlane.f32.xlu0 %v1742
        %v1790 = vpop.xlane.xlu0 %1789
        %1791 = vadd.xlane.f32.xlu0 %v1743
        %v1792 = vpop.xlane.xlu0 %1791
        %1793 = vadd.xlane.f32.xlu0 %v1744
        %v1794 = vpop.xlane.xlu0 %1793
        %1795 = vadd.xlane.f32.xlu0 %v1745
        %v1796 = vpop.xlane.xlu0 %1795
        %1797 = vadd.xlane.f32.xlu0 %v1746
        %v1798 = vpop.xlane.xlu0 %1797
        %1799 = vadd.xlane.f32.xlu0 %v1747
        %v1800 = vpop.xlane.xlu0 %1799
        %1801 = vadd.xlane.f32.xlu0 %v1748
        %v1802 = vpop.xlane.xlu0 %1801
        %1803 = vadd.xlane.f32.xlu0 %v1749
        %v1804 = vpop.xlane.xlu0 %1803
        %1805 = vadd.xlane.f32.xlu0 %v1750
        %v1806 = vpop.xlane.xlu0 %1805
        %1807 = vadd.xlane.f32.xlu0 %v1751
        %v1808 = vpop.xlane.xlu0 %1807
        %1809 = vadd.xlane.f32.xlu0 %v1752
        %v1810 = vpop.xlane.xlu0 %1809
        %1811 = vadd.xlane.f32.xlu0 %v1753
        %v1812 = vpop.xlane.xlu0 %1811
        %1813 = vadd.xlane.f32.xlu0 %v1754
        %v1814 = vpop.xlane.xlu0 %1813
        %1815 = vadd.xlane.f32.xlu0 %v1755
        %v1816 = vpop.xlane.xlu0 %1815
        %1817 = vadd.xlane.f32.xlu0 %v1756
        %v1818 = vpop.xlane.xlu0 %1817
        %1819 = vadd.xlane.f32.xlu0 %v1757
        %v1820 = vpop.xlane.xlu0 %1819
        %1821 = vadd.xlane.f32.xlu0 %v1758
        %v1822 = vpop.xlane.xlu0 %1821
        %v1823 = vmul.f32 %v1760, 0.015625
        %v1824 = vmul.f32 %v1762, 0.015625
        %v1825 = vmul.f32 %v1764, 0.015625
        %v1826 = vmul.f32 %v1766, 0.015625
        %v1827 = vmul.f32 %v1768, 0.015625
        %v1828 = vmul.f32 %v1770, 0.015625
        %v1829 = vmul.f32 %v1772, 0.015625
        %v1830 = vmul.f32 %v1774, 0.015625
        %v1831 = vmul.f32 %v1776, 0.015625
        %v1832 = vmul.f32 %v1778, 0.015625
        %v1833 = vmul.f32 %v1780, 0.015625
        %v1834 = vmul.f32 %v1782, 0.015625
        %v1835 = vmul.f32 %v1784, 0.015625
        %v1836 = vmul.f32 %v1786, 0.015625
        %v1837 = vmul.f32 %v1788, 0.015625
        %v1838 = vmul.f32 %v1790, 0.015625
        %v1839 = vmul.f32 %v1792, 0.015625
        %v1840 = vmul.f32 %v1794, 0.015625
        %v1841 = vmul.f32 %v1796, 0.015625
        %v1842 = vmul.f32 %v1798, 0.015625
        %v1843 = vmul.f32 %v1800, 0.015625
        %v1844 = vmul.f32 %v1802, 0.015625
        %v1845 = vmul.f32 %v1804, 0.015625
        %v1846 = vmul.f32 %v1806, 0.015625
        %v1847 = vmul.f32 %v1808, 0.015625
        %v1848 = vmul.f32 %v1810, 0.015625
        %v1849 = vmul.f32 %v1812, 0.015625
        %v1850 = vmul.f32 %v1814, 0.015625
        %v1851 = vmul.f32 %v1816, 0.015625
        %v1852 = vmul.f32 %v1818, 0.015625
        %v1853 = vmul.f32 %v1820, 0.015625
        %v1854 = vmul.f32 %v1822, 0.015625
        %v1855 = vadd.f32 %v1823, 1e-05
        %v1856 = vadd.f32 %v1824, 1e-05
        %v1857 = vadd.f32 %v1825, 1e-05
        %v1858 = vadd.f32 %v1826, 1e-05
        %v1859 = vadd.f32 %v1827, 1e-05
        %v1860 = vadd.f32 %v1828, 1e-05
        %v1861 = vadd.f32 %v1829, 1e-05
        %v1862 = vadd.f32 %v1830, 1e-05
        %v1863 = vadd.f32 %v1831, 1e-05
        %v1864 = vadd.f32 %v1832, 1e-05
        %v1865 = vadd.f32 %v1833, 1e-05
        %v1866 = vadd.f32 %v1834, 1e-05
        %v1867 = vadd.f32 %v1835, 1e-05
        %v1868 = vadd.f32 %v1836, 1e-05
        %v1869 = vadd.f32 %v1837, 1e-05
        %v1870 = vadd.f32 %v1838, 1e-05
        %v1871 = vadd.f32 %v1839, 1e-05
        %v1872 = vadd.f32 %v1840, 1e-05
        %v1873 = vadd.f32 %v1841, 1e-05
        %v1874 = vadd.f32 %v1842, 1e-05
        %v1875 = vadd.f32 %v1843, 1e-05
        %v1876 = vadd.f32 %v1844, 1e-05
        %v1877 = vadd.f32 %v1845, 1e-05
        %v1878 = vadd.f32 %v1846, 1e-05
        %v1879 = vadd.f32 %v1847, 1e-05
        %v1880 = vadd.f32 %v1848, 1e-05
        %v1881 = vadd.f32 %v1849, 1e-05
        %v1882 = vadd.f32 %v1850, 1e-05
        %v1883 = vadd.f32 %v1851, 1e-05
        %v1884 = vadd.f32 %v1852, 1e-05
        %v1885 = vadd.f32 %v1853, 1e-05
        %v1886 = vadd.f32 %v1854, 1e-05
        %v1887 = vrsqrt.pop %v1855
        %v1888 = vmul.f32 %v1887, %v1855
        %v1889 = vmul.f32 %v1888, %v1887
        %v1890 = vmul.f32 0.5, %v1889
        %v1891 = vsub.f32 1.5, %v1890
        %v1892 = vmul.f32 %v1887, %v1891
        %vm1893 = vweird.f32 %v1855
        %vm1894 = vweird.f32 %v1887
        %vm1895 = vmor %vm1893, %vm1894
        %v1896 = vsel %vm1895, %v1887, %v1892
        %v1897 = vrsqrt.pop %v1856
        %v1898 = vmul.f32 %v1897, %v1856
        %v1899 = vmul.f32 %v1898, %v1897
        %v1900 = vmul.f32 0.5, %v1899
        %v1901 = vsub.f32 1.5, %v1900
        %v1902 = vmul.f32 %v1897, %v1901
        %vm1903 = vweird.f32 %v1856
        %vm1904 = vweird.f32 %v1897
        %vm1905 = vmor %vm1903, %vm1904
        %v1906 = vsel %vm1905, %v1897, %v1902
        %v1907 = vrsqrt.pop %v1857
        %v1908 = vmul.f32 %v1907, %v1857
        %v1909 = vmul.f32 %v1908, %v1907
        %v1910 = vmul.f32 0.5, %v1909
        %v1911 = vsub.f32 1.5, %v1910
        %v1912 = vmul.f32 %v1907, %v1911
        %vm1913 = vweird.f32 %v1857
        %vm1914 = vweird.f32 %v1907
        %vm1915 = vmor %vm1913, %vm1914
        %v1916 = vsel %vm1915, %v1907, %v1912
        %v1917 = vrsqrt.pop %v1858
        %v1918 = vmul.f32 %v1917, %v1858
        %v1919 = vmul.f32 %v1918, %v1917
        %v1920 = vmul.f32 0.5, %v1919
        %v1921 = vsub.f32 1.5, %v1920
        %v1922 = vmul.f32 %v1917, %v1921
        %vm1923 = vweird.f32 %v1858
        %vm1924 = vweird.f32 %v1917
        %vm1925 = vmor %vm1923, %vm1924
        %v1926 = vsel %vm1925, %v1917, %v1922
        %v1927 = vrsqrt.pop %v1859
        %v1928 = vmul.f32 %v1927, %v1859
        %v1929 = vmul.f32 %v1928, %v1927
        %v1930 = vmul.f32 0.5, %v1929
        %v1931 = vsub.f32 1.5, %v1930
        %v1932 = vmul.f32 %v1927, %v1931
        %vm1933 = vweird.f32 %v1859
        %vm1934 = vweird.f32 %v1927
        %vm1935 = vmor %vm1933, %vm1934
        %v1936 = vsel %vm1935, %v1927, %v1932
        %v1937 = vrsqrt.pop %v1860
        %v1938 = vmul.f32 %v1937, %v1860
        %v1939 = vmul.f32 %v1938, %v1937
        %v1940 = vmul.f32 0.5, %v1939
        %v1941 = vsub.f32 1.5, %v1940
        %v1942 = vmul.f32 %v1937, %v1941
        %vm1943 = vweird.f32 %v1860
        %vm1944 = vweird.f32 %v1937
        %vm1945 = vmor %vm1943, %vm1944
        %v1946 = vsel %vm1945, %v1937, %v1942
        %v1947 = vrsqrt.pop %v1861
        %v1948 = vmul.f32 %v1947, %v1861
        %v1949 = vmul.f32 %v1948, %v1947
        %v1950 = vmul.f32 0.5, %v1949
        %v1951 = vsub.f32 1.5, %v1950
        %v1952 = vmul.f32 %v1947, %v1951
        %vm1953 = vweird.f32 %v1861
        %vm1954 = vweird.f32 %v1947
        %vm1955 = vmor %vm1953, %vm1954
        %v1956 = vsel %vm1955, %v1947, %v1952
        %v1957 = vrsqrt.pop %v1862
        %v1958 = vmul.f32 %v1957, %v1862
        %v1959 = vmul.f32 %v1958, %v1957
        %v1960 = vmul.f32 0.5, %v1959
        %v1961 = vsub.f32 1.5, %v1960
        %v1962 = vmul.f32 %v1957, %v1961
        %vm1963 = vweird.f32 %v1862
        %vm1964 = vweird.f32 %v1957
        %vm1965 = vmor %vm1963, %vm1964
        %v1966 = vsel %vm1965, %v1957, %v1962
        %v1967 = vrsqrt.pop %v1863
        %v1968 = vmul.f32 %v1967, %v1863
        %v1969 = vmul.f32 %v1968, %v1967
        %v1970 = vmul.f32 0.5, %v1969
        %v1971 = vsub.f32 1.5, %v1970
        %v1972 = vmul.f32 %v1967, %v1971
        %vm1973 = vweird.f32 %v1863
        %vm1974 = vweird.f32 %v1967
        %vm1975 = vmor %vm1973, %vm1974
        %v1976 = vsel %vm1975, %v1967, %v1972
        %v1977 = vrsqrt.pop %v1864
        %v1978 = vmul.f32 %v1977, %v1864
        %v1979 = vmul.f32 %v1978, %v1977
        %v1980 = vmul.f32 0.5, %v1979
        %v1981 = vsub.f32 1.5, %v1980
        %v1982 = vmul.f32 %v1977, %v1981
        %vm1983 = vweird.f32 %v1864
        %vm1984 = vweird.f32 %v1977
        %vm1985 = vmor %vm1983, %vm1984
        %v1986 = vsel %vm1985, %v1977, %v1982
        %v1987 = vrsqrt.pop %v1865
        %v1988 = vmul.f32 %v1987, %v1865
        %v1989 = vmul.f32 %v1988, %v1987
        %v1990 = vmul.f32 0.5, %v1989
        %v1991 = vsub.f32 1.5, %v1990
        %v1992 = vmul.f32 %v1987, %v1991
        %vm1993 = vweird.f32 %v1865
        %vm1994 = vweird.f32 %v1987
        %vm1995 = vmor %vm1993, %vm1994
        %v1996 = vsel %vm1995, %v1987, %v1992
        %v1997 = vrsqrt.pop %v1866
        %v1998 = vmul.f32 %v1997, %v1866
        %v1999 = vmul.f32 %v1998, %v1997
        %v2000 = vmul.f32 0.5, %v1999
        %v2001 = vsub.f32 1.5, %v2000
        %v2002 = vmul.f32 %v1997, %v2001
        %vm2003 = vweird.f32 %v1866
        %vm2004 = vweird.f32 %v1997
        %vm2005 = vmor %vm2003, %vm2004
        %v2006 = vsel %vm2005, %v1997, %v2002
        %v2007 = vrsqrt.pop %v1867
        %v2008 = vmul.f32 %v2007, %v1867
        %v2009 = vmul.f32 %v2008, %v2007
        %v2010 = vmul.f32 0.5, %v2009
        %v2011 = vsub.f32 1.5, %v2010
        %v2012 = vmul.f32 %v2007, %v2011
        %vm2013 = vweird.f32 %v1867
        %vm2014 = vweird.f32 %v2007
        %vm2015 = vmor %vm2013, %vm2014
        %v2016 = vsel %vm2015, %v2007, %v2012
        %v2017 = vrsqrt.pop %v1868
        %v2018 = vmul.f32 %v2017, %v1868
        %v2019 = vmul.f32 %v2018, %v2017
        %v2020 = vmul.f32 0.5, %v2019
        %v2021 = vsub.f32 1.5, %v2020
        %v2022 = vmul.f32 %v2017, %v2021
        %vm2023 = vweird.f32 %v1868
        %vm2024 = vweird.f32 %v2017
        %vm2025 = vmor %vm2023, %vm2024
        %v2026 = vsel %vm2025, %v2017, %v2022
        %v2027 = vrsqrt.pop %v1869
        %v2028 = vmul.f32 %v2027, %v1869
        %v2029 = vmul.f32 %v2028, %v2027
        %v2030 = vmul.f32 0.5, %v2029
        %v2031 = vsub.f32 1.5, %v2030
        %v2032 = vmul.f32 %v2027, %v2031
        %vm2033 = vweird.f32 %v1869
        %vm2034 = vweird.f32 %v2027
        %vm2035 = vmor %vm2033, %vm2034
        %v2036 = vsel %vm2035, %v2027, %v2032
        %v2037 = vrsqrt.pop %v1870
        %v2038 = vmul.f32 %v2037, %v1870
        %v2039 = vmul.f32 %v2038, %v2037
        %v2040 = vmul.f32 0.5, %v2039
        %v2041 = vsub.f32 1.5, %v2040
        %v2042 = vmul.f32 %v2037, %v2041
        %vm2043 = vweird.f32 %v1870
        %vm2044 = vweird.f32 %v2037
        %vm2045 = vmor %vm2043, %vm2044
        %v2046 = vsel %vm2045, %v2037, %v2042
        %v2047 = vrsqrt.pop %v1871
        %v2048 = vmul.f32 %v2047, %v1871
        %v2049 = vmul.f32 %v2048, %v2047
        %v2050 = vmul.f32 0.5, %v2049
        %v2051 = vsub.f32 1.5, %v2050
        %v2052 = vmul.f32 %v2047, %v2051
        %vm2053 = vweird.f32 %v1871
        %vm2054 = vweird.f32 %v2047
        %vm2055 = vmor %vm2053, %vm2054
        %v2056 = vsel %vm2055, %v2047, %v2052
        %v2057 = vrsqrt.pop %v1872
        %v2058 = vmul.f32 %v2057, %v1872
        %v2059 = vmul.f32 %v2058, %v2057
        %v2060 = vmul.f32 0.5, %v2059
        %v2061 = vsub.f32 1.5, %v2060
        %v2062 = vmul.f32 %v2057, %v2061
        %vm2063 = vweird.f32 %v1872
        %vm2064 = vweird.f32 %v2057
        %vm2065 = vmor %vm2063, %vm2064
        %v2066 = vsel %vm2065, %v2057, %v2062
        %v2067 = vrsqrt.pop %v1873
        %v2068 = vmul.f32 %v2067, %v1873
        %v2069 = vmul.f32 %v2068, %v2067
        %v2070 = vmul.f32 0.5, %v2069
        %v2071 = vsub.f32 1.5, %v2070
        %v2072 = vmul.f32 %v2067, %v2071
        %vm2073 = vweird.f32 %v1873
        %vm2074 = vweird.f32 %v2067
        %vm2075 = vmor %vm2073, %vm2074
        %v2076 = vsel %vm2075, %v2067, %v2072
        %v2077 = vrsqrt.pop %v1874
        %v2078 = vmul.f32 %v2077, %v1874
        %v2079 = vmul.f32 %v2078, %v2077
        %v2080 = vmul.f32 0.5, %v2079
        %v2081 = vsub.f32 1.5, %v2080
        %v2082 = vmul.f32 %v2077, %v2081
        %vm2083 = vweird.f32 %v1874
        %vm2084 = vweird.f32 %v2077
        %vm2085 = vmor %vm2083, %vm2084
        %v2086 = vsel %vm2085, %v2077, %v2082
        %v2087 = vrsqrt.pop %v1875
        %v2088 = vmul.f32 %v2087, %v1875
        %v2089 = vmul.f32 %v2088, %v2087
        %v2090 = vmul.f32 0.5, %v2089
        %v2091 = vsub.f32 1.5, %v2090
        %v2092 = vmul.f32 %v2087, %v2091
        %vm2093 = vweird.f32 %v1875
        %vm2094 = vweird.f32 %v2087
        %vm2095 = vmor %vm2093, %vm2094
        %v2096 = vsel %vm2095, %v2087, %v2092
        %v2097 = vrsqrt.pop %v1876
        %v2098 = vmul.f32 %v2097, %v1876
        %v2099 = vmul.f32 %v2098, %v2097
        %v2100 = vmul.f32 0.5, %v2099
        %v2101 = vsub.f32 1.5, %v2100
        %v2102 = vmul.f32 %v2097, %v2101
        %vm2103 = vweird.f32 %v1876
        %vm2104 = vweird.f32 %v2097
        %vm2105 = vmor %vm2103, %vm2104
        %v2106 = vsel %vm2105, %v2097, %v2102
        %v2107 = vrsqrt.pop %v1877
        %v2108 = vmul.f32 %v2107, %v1877
        %v2109 = vmul.f32 %v2108, %v2107
        %v2110 = vmul.f32 0.5, %v2109
        %v2111 = vsub.f32 1.5, %v2110
        %v2112 = vmul.f32 %v2107, %v2111
        %vm2113 = vweird.f32 %v1877
        %vm2114 = vweird.f32 %v2107
        %vm2115 = vmor %vm2113, %vm2114
        %v2116 = vsel %vm2115, %v2107, %v2112
        %v2117 = vrsqrt.pop %v1878
        %v2118 = vmul.f32 %v2117, %v1878
        %v2119 = vmul.f32 %v2118, %v2117
        %v2120 = vmul.f32 0.5, %v2119
        %v2121 = vsub.f32 1.5, %v2120
        %v2122 = vmul.f32 %v2117, %v2121
        %vm2123 = vweird.f32 %v1878
        %vm2124 = vweird.f32 %v2117
        %vm2125 = vmor %vm2123, %vm2124
        %v2126 = vsel %vm2125, %v2117, %v2122
        %v2127 = vrsqrt.pop %v1879
        %v2128 = vmul.f32 %v2127, %v1879
        %v2129 = vmul.f32 %v2128, %v2127
        %v2130 = vmul.f32 0.5, %v2129
        %v2131 = vsub.f32 1.5, %v2130
        %v2132 = vmul.f32 %v2127, %v2131
        %vm2133 = vweird.f32 %v1879
        %vm2134 = vweird.f32 %v2127
        %vm2135 = vmor %vm2133, %vm2134
        %v2136 = vsel %vm2135, %v2127, %v2132
        %v2137 = vrsqrt.pop %v1880
        %v2138 = vmul.f32 %v2137, %v1880
        %v2139 = vmul.f32 %v2138, %v2137
        %v2140 = vmul.f32 0.5, %v2139
        %v2141 = vsub.f32 1.5, %v2140
        %v2142 = vmul.f32 %v2137, %v2141
        %vm2143 = vweird.f32 %v1880
        %vm2144 = vweird.f32 %v2137
        %vm2145 = vmor %vm2143, %vm2144
        %v2146 = vsel %vm2145, %v2137, %v2142
        %v2147 = vrsqrt.pop %v1881
        %v2148 = vmul.f32 %v2147, %v1881
        %v2149 = vmul.f32 %v2148, %v2147
        %v2150 = vmul.f32 0.5, %v2149
        %v2151 = vsub.f32 1.5, %v2150
        %v2152 = vmul.f32 %v2147, %v2151
        %vm2153 = vweird.f32 %v1881
        %vm2154 = vweird.f32 %v2147
        %vm2155 = vmor %vm2153, %vm2154
        %v2156 = vsel %vm2155, %v2147, %v2152
        %v2157 = vrsqrt.pop %v1882
        %v2158 = vmul.f32 %v2157, %v1882
        %v2159 = vmul.f32 %v2158, %v2157
        %v2160 = vmul.f32 0.5, %v2159
        %v2161 = vsub.f32 1.5, %v2160
        %v2162 = vmul.f32 %v2157, %v2161
        %vm2163 = vweird.f32 %v1882
        %vm2164 = vweird.f32 %v2157
        %vm2165 = vmor %vm2163, %vm2164
        %v2166 = vsel %vm2165, %v2157, %v2162
        %v2167 = vrsqrt.pop %v1883
        %v2168 = vmul.f32 %v2167, %v1883
        %v2169 = vmul.f32 %v2168, %v2167
        %v2170 = vmul.f32 0.5, %v2169
        %v2171 = vsub.f32 1.5, %v2170
        %v2172 = vmul.f32 %v2167, %v2171
        %vm2173 = vweird.f32 %v1883
        %vm2174 = vweird.f32 %v2167
        %vm2175 = vmor %vm2173, %vm2174
        %v2176 = vsel %vm2175, %v2167, %v2172
        %v2177 = vrsqrt.pop %v1884
        %v2178 = vmul.f32 %v2177, %v1884
        %v2179 = vmul.f32 %v2178, %v2177
        %v2180 = vmul.f32 0.5, %v2179
        %v2181 = vsub.f32 1.5, %v2180
        %v2182 = vmul.f32 %v2177, %v2181
        %vm2183 = vweird.f32 %v1884
        %vm2184 = vweird.f32 %v2177
        %vm2185 = vmor %vm2183, %vm2184
        %v2186 = vsel %vm2185, %v2177, %v2182
        %v2187 = vrsqrt.pop %v1885
        %v2188 = vmul.f32 %v2187, %v1885
        %v2189 = vmul.f32 %v2188, %v2187
        %v2190 = vmul.f32 0.5, %v2189
        %v2191 = vsub.f32 1.5, %v2190
        %v2192 = vmul.f32 %v2187, %v2191
        %vm2193 = vweird.f32 %v1885
        %vm2194 = vweird.f32 %v2187
        %vm2195 = vmor %vm2193, %vm2194
        %v2196 = vsel %vm2195, %v2187, %v2192
        %v2197 = vrsqrt.pop %v1886
        %v2198 = vmul.f32 %v2197, %v1886
        %v2199 = vmul.f32 %v2198, %v2197
        %v2200 = vmul.f32 0.5, %v2199
        %v2201 = vsub.f32 1.5, %v2200
        %v2202 = vmul.f32 %v2197, %v2201
        %vm2203 = vweird.f32 %v1886
        %vm2204 = vweird.f32 %v2197
        %vm2205 = vmor %vm2203, %vm2204
        %v2206 = vsel %vm2205, %v2197, %v2202
        %v2207 = vmul.f32 %v1663, %v1896
        %v2208 = vmul.f32 %v1664, %v1906
        %v2209 = vmul.f32 %v1665, %v1916
        %v2210 = vmul.f32 %v1666, %v1926
        %v2211 = vmul.f32 %v1667, %v1936
        %v2212 = vmul.f32 %v1668, %v1946
        %v2213 = vmul.f32 %v1669, %v1956
        %v2214 = vmul.f32 %v1670, %v1966
        %v2215 = vmul.f32 %v1671, %v1976
        %v2216 = vmul.f32 %v1672, %v1986
        %v2217 = vmul.f32 %v1673, %v1996
        %v2218 = vmul.f32 %v1674, %v2006
        %v2219 = vmul.f32 %v1675, %v2016
        %v2220 = vmul.f32 %v1676, %v2026
        %v2221 = vmul.f32 %v1677, %v2036
        %v2222 = vmul.f32 %v1678, %v2046
        %v2223 = vmul.f32 %v1679, %v2056
        %v2224 = vmul.f32 %v1680, %v2066
        %v2225 = vmul.f32 %v1681, %v2076
        %v2226 = vmul.f32 %v1682, %v2086
        %v2227 = vmul.f32 %v1683, %v2096
        %v2228 = vmul.f32 %v1684, %v2106
        %v2229 = vmul.f32 %v1685, %v2116
        %v2230 = vmul.f32 %v1686, %v2126
        %v2231 = vmul.f32 %v1687, %v2136
        %v2232 = vmul.f32 %v1688, %v2146
        %v2233 = vmul.f32 %v1689, %v2156
        %v2234 = vmul.f32 %v1690, %v2166
        %v2235 = vmul.f32 %v1691, %v2176
        %v2236 = vmul.f32 %v1692, %v2186
        %v2237 = vmul.f32 %v1693, %v2196
        %v2238 = vmul.f32 %v1694, %v2206
        %v2240 = vperm.slane %v336, 0
        %v2242 = vmul.f32 %v2207, %v2240
        %v2243 = vmul.f32 %v2208, %v2240
        %v2244 = vmul.f32 %v2209, %v2240
        %v2245 = vmul.f32 %v2210, %v2240
        %v2246 = vmul.f32 %v2211, %v2240
        %v2247 = vmul.f32 %v2212, %v2240
        %v2248 = vmul.f32 %v2213, %v2240
        %v2249 = vmul.f32 %v2214, %v2240
        %v2250 = vmul.f32 %v2215, %v2240
        %v2251 = vmul.f32 %v2216, %v2240
        %v2252 = vmul.f32 %v2217, %v2240
        %v2253 = vmul.f32 %v2218, %v2240
        %v2254 = vmul.f32 %v2219, %v2240
        %v2255 = vmul.f32 %v2220, %v2240
        %v2256 = vmul.f32 %v2221, %v2240
        %v2257 = vmul.f32 %v2222, %v2240
        %v2258 = vmul.f32 %v2223, %v2240
        %v2259 = vmul.f32 %v2224, %v2240
        %v2260 = vmul.f32 %v2225, %v2240
        %v2261 = vmul.f32 %v2226, %v2240
        %v2262 = vmul.f32 %v2227, %v2240
        %v2263 = vmul.f32 %v2228, %v2240
        %v2264 = vmul.f32 %v2229, %v2240
        %v2265 = vmul.f32 %v2230, %v2240
        %v2266 = vmul.f32 %v2231, %v2240
        %v2267 = vmul.f32 %v2232, %v2240
        %v2268 = vmul.f32 %v2233, %v2240
        %v2269 = vmul.f32 %v2234, %v2240
        %v2270 = vmul.f32 %v2235, %v2240
        %v2271 = vmul.f32 %v2236, %v2240
        %v2272 = vmul.f32 %v2237, %v2240
        %v2273 = vmul.f32 %v2238, %v2240
        %v2275 = vperm.slane %v337, 0
        %v2277 = vadd.f32 %v2242, %v2275
        %v2278 = vadd.f32 %v2243, %v2275
        %v2279 = vadd.f32 %v2244, %v2275
        %v2280 = vadd.f32 %v2245, %v2275
        %v2281 = vadd.f32 %v2246, %v2275
        %v2282 = vadd.f32 %v2247, %v2275
        %v2283 = vadd.f32 %v2248, %v2275
        %v2284 = vadd.f32 %v2249, %v2275
        %v2285 = vadd.f32 %v2250, %v2275
        %v2286 = vadd.f32 %v2251, %v2275
        %v2287 = vadd.f32 %v2252, %v2275
        %v2288 = vadd.f32 %v2253, %v2275
        %v2289 = vadd.f32 %v2254, %v2275
        %v2290 = vadd.f32 %v2255, %v2275
        %v2291 = vadd.f32 %v2256, %v2275
        %v2292 = vadd.f32 %v2257, %v2275
        %v2293 = vadd.f32 %v2258, %v2275
        %v2294 = vadd.f32 %v2259, %v2275
        %v2295 = vadd.f32 %v2260, %v2275
        %v2296 = vadd.f32 %v2261, %v2275
        %v2297 = vadd.f32 %v2262, %v2275
        %v2298 = vadd.f32 %v2263, %v2275
        %v2299 = vadd.f32 %v2264, %v2275
        %v2300 = vadd.f32 %v2265, %v2275
        %v2301 = vadd.f32 %v2266, %v2275
        %v2302 = vadd.f32 %v2267, %v2275
        %v2303 = vadd.f32 %v2268, %v2275
        %v2304 = vadd.f32 %v2269, %v2275
        %v2305 = vadd.f32 %v2270, %v2275
        %v2306 = vadd.f32 %v2271, %v2275
        %v2307 = vadd.f32 %v2272, %v2275
        %v2308 = vadd.f32 %v2273, %v2275
        %v2309 = vmax.f32 %v2277, 0.0
        %v2310 = vmax.f32 %v2278, 0.0
        %v2311 = vmax.f32 %v2279, 0.0
        %v2312 = vmax.f32 %v2280, 0.0
        %v2313 = vmax.f32 %v2281, 0.0
        %v2314 = vmax.f32 %v2282, 0.0
        %v2315 = vmax.f32 %v2283, 0.0
        %v2316 = vmax.f32 %v2284, 0.0
        %v2317 = vmax.f32 %v2285, 0.0
        %v2318 = vmax.f32 %v2286, 0.0
        %v2319 = vmax.f32 %v2287, 0.0
        %v2320 = vmax.f32 %v2288, 0.0
        %v2321 = vmax.f32 %v2289, 0.0
        %v2322 = vmax.f32 %v2290, 0.0
        %v2323 = vmax.f32 %v2291, 0.0
        %v2324 = vmax.f32 %v2292, 0.0
        %v2325 = vmax.f32 %v2293, 0.0
        %v2326 = vmax.f32 %v2294, 0.0
        %v2327 = vmax.f32 %v2295, 0.0
        %v2328 = vmax.f32 %v2296, 0.0
        %v2329 = vmax.f32 %v2297, 0.0
        %v2330 = vmax.f32 %v2298, 0.0
        %v2331 = vmax.f32 %v2299, 0.0
        %v2332 = vmax.f32 %v2300, 0.0
        %v2333 = vmax.f32 %v2301, 0.0
        %v2334 = vmax.f32 %v2302, 0.0
        %v2335 = vmax.f32 %v2303, 0.0
        %v2336 = vmax.f32 %v2304, 0.0
        %v2337 = vmax.f32 %v2305, 0.0
        %v2338 = vmax.f32 %v2306, 0.0
        %v2339 = vmax.f32 %v2307, 0.0
        %v2340 = vmax.f32 %v2308, 0.0
        %2341 = vst [vmem:[%s331] sm:$0xff] %v2309
        %2342 = vst [vmem:[%s331 + $0x8] sm:$0xff] %v2310
        %2343 = vst [vmem:[%s331 + $0x10] sm:$0xff] %v2311
        %2344 = vst [vmem:[%s331 + $0x18] sm:$0xff] %v2312
        %2345 = vst [vmem:[%s331 + $0x20] sm:$0xff] %v2313
        %2346 = vst [vmem:[%s331 + $0x28] sm:$0xff] %v2314
        %2347 = vst [vmem:[%s331 + $0x30] sm:$0xff] %v2315
        %2348 = vst [vmem:[%s331 + $0x38] sm:$0xff] %v2316
        %2349 = vst [vmem:[%s331 + $0x40] sm:$0xff] %v2317
        %2350 = vst [vmem:[%s331 + $0x48] sm:$0xff] %v2318
        %2351 = vst [vmem:[%s331 + $0x50] sm:$0xff] %v2319
        %2352 = vst [vmem:[%s331 + $0x58] sm:$0xff] %v2320
        %2353 = vst [vmem:[%s331 + $0x60] sm:$0xff] %v2321
        %2354 = vst [vmem:[%s331 + $0x68] sm:$0xff] %v2322
        %2355 = vst [vmem:[%s331 + $0x70] sm:$0xff] %v2323
        %2356 = vst [vmem:[%s331 + $0x78] sm:$0xff] %v2324
        %2357 = vst [vmem:[%s331 + $0x80] sm:$0xff] %v2325
        %2358 = vst [vmem:[%s331 + $0x88] sm:$0xff] %v2326
        %2359 = vst [vmem:[%s331 + $0x90] sm:$0xff] %v2327
        %2360 = vst [vmem:[%s331 + $0x98] sm:$0xff] %v2328
        %2361 = vst [vmem:[%s331 + $0xa0] sm:$0xff] %v2329
        %2362 = vst [vmem:[%s331 + $0xa8] sm:$0xff] %v2330
        %2363 = vst [vmem:[%s331 + $0xb0] sm:$0xff] %v2331
        %2364 = vst [vmem:[%s331 + $0xb8] sm:$0xff] %v2332
        %2365 = vst [vmem:[%s331 + $0xc0] sm:$0xff] %v2333
        %2366 = vst [vmem:[%s331 + $0xc8] sm:$0xff] %v2334
        %2367 = vst [vmem:[%s331 + $0xd0] sm:$0xff] %v2335
        %2368 = vst [vmem:[%s331 + $0xd8] sm:$0xff] %v2336
        %2369 = vst [vmem:[%s331 + $0xe0] sm:$0xff] %v2337
        %2370 = vst [vmem:[%s331 + $0xe8] sm:$0xff] %v2338
        %2371 = vst [vmem:[%s331 + $0xf0] sm:$0xff] %v2339
        %2372 = vst [vmem:[%s331 + $0xf8] sm:$0xff] %v2340
        %s2373 = sand.u32 %s185, 1
        %s2374 = scalar_lea.sflag [#allocation4], %s2373
        %s2375 = sand.u32 %s185, 1
        %s2376 = smul.addr %s2375, 256
        %s2377 = scalar_lea.vmem [#allocation8], %s2376
        // Predicated region
        $region61: #{tpu_custom_call.1} parent=47 // pred_check
          %p2378 = pneg %p195
        $region62: #{tpu_custom_call.1} parent=47 // pred_check_branch
          %2380 = sbr.rel (%p2378) target = $region64
        $region63: #{tpu_custom_call.1} parent=47 // pred_region
          %s2381 = smul.u32 32, %s25
          %2383 = vsyncadd %s2374, 0
          %s2384 = smul.addr %s2381, 8
          %s2385 = scalar_lea.hbm %s7, %s2384
          %s2386 = sshll.u32 %s2377, 4
          %s2387 = int_to_ptr.vmem [resolvable:$true] %s2386
          %s2388 = sshll.u32 %s2385, 4
          %s2389 = int_to_ptr.hbm [resolvable:$true] %s2388
          %2394 = dma.vmem_to_hbm [thread:$0]  %s2387, 4096, %s2389, %s2374, 128, 128, 8
        $region64: #{tpu_custom_call.1} parent=47 // pred_fallthru
          _
      $region48: #{tpu_custom_call.1} parent=5 // pred_fallthru
        _
      %p2395 = scmp.le.s32.totalorder 2, %s20
      // Predicated region
      $region65: #{tpu_custom_call.1} parent=5 // pred_check
        %p2396 = pneg %p2395
      $region66: #{tpu_custom_call.1} parent=5 // pred_check_branch
        %2398 = sbr.rel (%p2396) target = $region68
      $region67: #{tpu_custom_call.1} parent=5 // pred_region
        %s2399 = ssub.s32 %s20, 2
        // Predicated region
        $region69: #{tpu_custom_call.1} parent=67 // pred_check
          %p2400 = pneg %p201
        $region70: #{tpu_custom_call.1} parent=67 // pred_check_branch
          %2402 = sbr.rel (%p2400) target = $region72
        $region71: #{tpu_custom_call.1} parent=67 // pred_region
          %s2403 = sand.u32 %s186, 1
          %s2404 = scalar_lea.sflag [#allocation4], %s2403
          %s2405 = sand.u32 %s186, 1
          %s2406 = smul.addr %s2405, 256
          %s2407 = scalar_lea.vmem [#allocation8], %s2406
          %2409 = dma.done %s2404, 4096
        $region72: #{tpu_custom_call.1} parent=67 // pred_fallthru
          _
      $region68: #{tpu_custom_call.1} parent=5 // pred_fallthru
        _
    $region6: #{tpu_custom_call.1} parent=1 // loop_footer
      %s24 = sadd.s32 1, %s20
    $region7: #{tpu_custom_call.1} parent=1 // loop_footer_branch
      %19 = sbr.rel target = $region3
    $region8: #{tpu_custom_call.1} parent=1 // loop_exit
      _
    %2410 = vsyncpa [#allocation3], 1
    %s2411 = scalar_lea.sflag [#allocation3], 1
    %2412 = vsyncpa %s2411, 1
    %2413 = vsyncpa [#allocation6], 1
    %2414 = vsyncpa [#allocation4], 1
    %s2415 = scalar_lea.sflag [#allocation4], 1
    %2416 = vsyncpa %s2415, 1

// kernel: tpu_custom_call.1
$region0: #{tpu_custom_call.1}
  #allocation0 [shape = 'u32[]', space=smem, size = 0x4, offset = 0x4, fixed_abs, tag = 'smem constant byte address 0x4 - core index']
  #allocation1 [shape = 'u32[72,128]{1,0:T(1,128)}', space=vmem, size = 0x9000, scoped, tag = 'internal scratch']
  %s0 = inlined_call_operand.hbm [shape: bf16[512,128], index: 0, kind: input, shape index: {}]
  %s1 = inlined_call_operand.hbm [shape: bf16[128,128], index: 1, kind: input, shape index: {}]
  %s2 = inlined_call_operand.vmem [shape: f32[1,128], index: 2, kind: input, shape index: {}]
  %s3 = inlined_call_operand.vmem [shape: f32[1,128], index: 3, kind: input, shape index: {}]
  %s4 = inlined_call_operand.hbm [shape: bf16[128,128], index: 4, kind: input, shape index: {}]
  %s5 = inlined_call_operand.vmem [shape: f32[1,128], index: 5, kind: input, shape index: {}]
  %s6 = inlined_call_operand.vmem [shape: f32[1,128], index: 6, kind: input, shape index: {}]
  %s7 = inlined_call_operand.hbm [shape: f32[512,128], index: 7, kind: output, shape index: {}]
  %s8 = sld [smem:[#allocation0]]
  $region73: #{tpu_custom_call.1} parent=0
    _
  %s10 = ssub.s32 1, %s8
  %s11 = scalar_select 0, %s10, %s8
  $region1: #{tpu_custom_call.1} parent=0
    #allocation2 [shape = 'u8[131072]{0}', space=vmem, size = 0x20000, scoped, tag = 'input window, operand 0']
    #allocation3 [shape = 's32[2]{0}', space=sflag, size = 0x8, scoped, tag = 'scoped memory for tpu_custom_call.1']
    #allocation4 [shape = 's32[2]{0}', space=sflag, size = 0x8, scoped, tag = 'scoped memory for tpu_custom_call.1']
    #allocation5 [shape = 'u8[32768]{0}', space=vmem, size = 0x8000, scoped, tag = 'input window, operand 1, single buffered']
    #allocation6 [shape = 's32[1]{0}', space=sflag, size = 0x4, scoped, tag = 'scoped memory for tpu_custom_call.1']
    #allocation7 [shape = 'u8[32768]{0}', space=vmem, size = 0x8000, scoped, tag = 'input window, operand 4, single buffered']
    #allocation8 [shape = 'u8[262144]{0}', space=vmem, size = 0x40000, scoped, tag = 'output window, operand 0']
    %12 = vsyncpa [#allocation3], 0
    %s13 = scalar_lea.sflag [#allocation3], 1
    %14 = vsyncpa %s13, 0
    %15 = vsyncpa [#allocation6], 0
    %16 = vsyncpa [#allocation4], 0
    %s17 = scalar_lea.sflag [#allocation4], 1
    %18 = vsyncpa %s17, 0
    loop: start=0, step=1, limit=4
    $region2: #{tpu_custom_call.1} parent=1 // loop_pre_header
      _
    $region3: #{tpu_custom_call.1} parent=1 // loop_header
      %s20 = sphi 0, %s24
      %p21 = scmp.ge.s32.totalorder %s20, 4
      %s30 = sphi 0, %s32
      %s33 = sphi 0, %s30
      %s34 = sphi 0, %s33
      %s50 = sphi 0, %s34
      %s54 = sphi 0, %s54
      %s56 = sphi 0, %s54
      %s57 = sphi 0, %s56
      %s71 = sphi 0, %s57
      %s75 = sphi 0, %s75
      %s77 = sphi 0, %s75
      %s78 = sphi 0, %s77
      %s92 = sphi 0, %s78
      %s96 = sphi 0, %s96
      %s98 = sphi 0, %s96
      %s99 = sphi 0, %s98
      %s113 = sphi 0, %s99
      %s117 = sphi 0, %s117
      %s119 = sphi 0, %s117
      %s120 = sphi 0, %s119
      %s134 = sphi 0, %s120
      %s138 = sphi 0, %s138
      %s140 = sphi 0, %s138
      %s141 = sphi 0, %s140
      %s155 = sphi 0, %s141
      %s159 = sphi 0, %s159
      %s161 = sphi 0, %s159
      %s162 = sphi 0, %s161
      %s176 = sphi 0, %s162
      %s182 = sphi 0, %s184
      %s185 = sphi 0, %s182
      %s186 = sphi 0, %s185
      %s202 = sphi 0, %s186
    $region4: #{tpu_custom_call.1} parent=1 // loop_header_branch
      %23 = sbr.rel (%p21) target = $region8
    $region5: #{tpu_custom_call.1} parent=1 // loop_body
      %s25 = ssub.s32 %s20, 1
      %s26 = ssub.s32 %s20, 2
      %s27 = sadd.s32 %s20, 1
      %s28 = ssub.s32 %s20, %s27
      %p29 = scmp.eq.s32.totalorder %s28, 0
      %s31 = sadd.s32 %s30, 1
      %s32 = scalar_select %p29, %s30, %s31
      %p35 = pneg %p29
      %p36 = scmp.eq.s32.totalorder %s20, 1
      %p37 = por %p35, %p36
      %p38 = scmp.ne.s32.totalorder %s30, %s33
      %p39 = scmp.eq.s32.totalorder %s20, 0
      %p40 = por %p38, %p39
      %p41 = scmp.ne.s32.totalorder %s30, %s33
      %p42 = scmp.eq.s32.totalorder %s25, 1
      %p43 = por %p41, %p42
      %p44 = scmp.ne.s32.totalorder %s33, %s34
      %p45 = scmp.eq.s32.totalorder %s25, 0
      %p46 = por %p44, %p45
      %p47 = scmp.ne.s32.totalorder %s33, %s34
      %p48 = scmp.eq.s32.totalorder %s26, 1
      %p49 = por %p47, %p48
      %p51 = scmp.ne.s32.totalorder %s34, %s50
      %p52 = scmp.eq.s32.totalorder %s26, 0
      %p53 = por %p51, %p52
      %s55 = sadd.s32 %s54, 1
      %p58 = scmp.eq.s32.totalorder %s20, 1
      %p59 = scmp.ne.s32.totalorder %s54, %s56
      %p60 = scmp.eq.s32.totalorder %s20, 0
      %p61 = por %p59, %p60
      %p62 = scmp.ne.s32.totalorder %s54, %s56
      %p63 = scmp.eq.s32.totalorder %s25, 1
      %p64 = por %p62, %p63
      %p65 = scmp.ne.s32.totalorder %s56, %s57
      %p66 = scmp.eq.s32.totalorder %s25, 0
      %p67 = por %p65, %p66
      %p68 = scmp.ne.s32.totalorder %s56, %s57
      %p69 = scmp.eq.s32.totalorder %s26, 1
      %p70 = por %p68, %p69
      %p72 = scmp.ne.s32.totalorder %s57, %s71
      %p73 = scmp.eq.s32.totalorder %s26, 0
      %p74 = por %p72, %p73
      %s76 = sadd.s32 %s75, 1
      %p79 = scmp.eq.s32.totalorder %s20, 1
      %p80 = scmp.ne.s32.totalorder %s75, %s77
      %p81 = scmp.eq.s32.totalorder %s20, 0
      %p82 = por %p80, %p81
      %p83 = scmp.ne.s32.totalorder %s75, %s77
      %p84 = scmp.eq.s32.totalorder %s25, 1
      %p85 = por %p83, %p84
      %p86 = scmp.ne.s32.totalorder %s77, %s78
      %p87 = scmp.eq.s32.totalorder %s25, 0
      %p88 = por %p86, %p87
      %p89 = scmp.ne.s32.totalorder %s77, %s78
      %p90 = scmp.eq.s32.totalorder %s26, 1
      %p91 = por %p89, %p90
      %p93 = scmp.ne.s32.totalorder %s78, %s92
      %p94 = scmp.eq.s32.totalorder %s26, 0
      %p95 = por %p93, %p94
      %s97 = sadd.s32 %s96, 1
      %p100 = scmp.eq.s32.totalorder %s20, 1
      %p101 = scmp.ne.s32.totalorder %s96, %s98
      %p102 = scmp.eq.s32.totalorder %s20, 0
      %p103 = por %p101, %p102
      %p104 = scmp.ne.s32.totalorder %s96, %s98
      %p105 = scmp.eq.s32.totalorder %s25, 1
      %p106 = por %p104, %p105
      %p107 = scmp.ne.s32.totalorder %s98, %s99
      %p108 = scmp.eq.s32.totalorder %s25, 0
      %p109 = por %p107, %p108
      %p110 = scmp.ne.s32.totalorder %s98, %s99
      %p111 = scmp.eq.s32.totalorder %s26, 1
      %p112 = por %p110, %p111
      %p114 = scmp.ne.s32.totalorder %s99, %s113
      %p115 = scmp.eq.s32.totalorder %s26, 0
      %p116 = por %p114, %p115
      %s118 = sadd.s32 %s117, 1
      %p121 = scmp.eq.s32.totalorder %s20, 1
      %p122 = scmp.ne.s32.totalorder %s117, %s119
      %p123 = scmp.eq.s32.totalorder %s20, 0
      %p124 = por %p122, %p123
      %p125 = scmp.ne.s32.totalorder %s117, %s119
      %p126 = scmp.eq.s32.totalorder %s25, 1
      %p127 = por %p125, %p126
      %p128 = scmp.ne.s32.totalorder %s119, %s120
      %p129 = scmp.eq.s32.totalorder %s25, 0
      %p130 = por %p128, %p129
      %p131 = scmp.ne.s32.totalorder %s119, %s120
      %p132 = scmp.eq.s32.totalorder %s26, 1
      %p133 = por %p131, %p132
      %p135 = scmp.ne.s32.totalorder %s120, %s134
      %p136 = scmp.eq.s32.totalorder %s26, 0
      %p137 = por %p135, %p136
      %s139 = sadd.s32 %s138, 1
      %p142 = scmp.eq.s32.totalorder %s20, 1
      %p143 = scmp.ne.s32.totalorder %s138, %s140
      %p144 = scmp.eq.s32.totalorder %s20, 0
      %p145 = por %p143, %p144
      %p146 = scmp.ne.s32.totalorder %s138, %s140
      %p147 = scmp.eq.s32.totalorder %s25, 1
      %p148 = por %p146, %p147
      %p149 = scmp.ne.s32.totalorder %s140, %s141
      %p150 = scmp.eq.s32.totalorder %s25, 0
      %p151 = por %p149, %p150
      %p152 = scmp.ne.s32.totalorder %s140, %s141
      %p153 = scmp.eq.s32.totalorder %s26, 1
      %p154 = por %p152, %p153
      %p156 = scmp.ne.s32.totalorder %s141, %s155
      %p157 = scmp.eq.s32.totalorder %s26, 0
      %p158 = por %p156, %p157
      %s160 = sadd.s32 %s159, 1
      %p163 = scmp.eq.s32.totalorder %s20, 1
      %p164 = scmp.ne.s32.totalorder %s159, %s161
      %p165 = scmp.eq.s32.totalorder %s20, 0
      %p166 = por %p164, %p165
      %p167 = scmp.ne.s32.totalorder %s159, %s161
      %p168 = scmp.eq.s32.totalorder %s25, 1
      %p169 = por %p167, %p168
      %p170 = scmp.ne.s32.totalorder %s161, %s162
      %p171 = scmp.eq.s32.totalorder %s25, 0
      %p172 = por %p170, %p171
      %p173 = scmp.ne.s32.totalorder %s161, %s162
      %p174 = scmp.eq.s32.totalorder %s26, 1
      %p175 = por %p173, %p174
      %p177 = scmp.ne.s32.totalorder %s162, %s176
      %p178 = scmp.eq.s32.totalorder %s26, 0
      %p179 = por %p177, %p178
      %s180 = ssub.s32 %s20, %s27
      %p181 = scmp.eq.s32.totalorder %s180, 0
      %s183 = sadd.s32 %s182, 1
      %s184 = scalar_select %p181, %s182, %s183
      %p187 = pneg %p181
      %p188 = scmp.eq.s32.totalorder %s20, 1
      %p189 = por %p187, %p188
      %p190 = scmp.ne.s32.totalorder %s182, %s185
      %p191 = scmp.eq.s32.totalorder %s20, 0
      %p192 = por %p190, %p191
      %p193 = scmp.ne.s32.totalorder %s182, %s185
      %p194 = scmp.eq.s32.totalorder %s25, 1
      %p195 = por %p193, %p194
      %p196 = scmp.ne.s32.totalorder %s185, %s186
      %p197 = scmp.eq.s32.totalorder %s25, 0
      %p198 = por %p196, %p197
      %p199 = scmp.ne.s32.totalorder %s185, %s186
      %p200 = scmp.eq.s32.totalorder %s26, 1
      %p201 = por %p199, %p200
      %p203 = scmp.ne.s32.totalorder %s186, %s202
      %p204 = scmp.eq.s32.totalorder %s26, 0
      %p205 = por %p203, %p204
      %p206 = scmp.le.s32.totalorder 1, %s20
      %p207 = scmp.lt.s32.totalorder %s20, 3
      %p208 = pnand %p206, %p207
      %p209 = pneg %p208
      // Predicated region
      $region9: #{tpu_custom_call.1} parent=5 // pred_check
        _
      $region10: #{tpu_custom_call.1} parent=5 // pred_check_branch
        %211 = sbr.rel (%p208) target = $region12
      $region11: #{tpu_custom_call.1} parent=5 // pred_region
        %s212 = ssub.s32 %s20, 1
        // Predicated region
        $region13: #{tpu_custom_call.1} parent=11 // pred_check
          %p213 = pneg %p67
        $region14: #{tpu_custom_call.1} parent=11 // pred_check_branch
          %215 = sbr.rel (%p213) target = $region16
        $region15: #{tpu_custom_call.1} parent=11 // pred_region
          %217 = vsyncadd [#allocation6], 0
          %s218 = sshll.u32 %s1, 4
          %s219 = int_to_ptr.hbm [resolvable:$true] %s218
          %s220 = sshll.u32 [#allocation5], 4
          %s221 = int_to_ptr.vmem [resolvable:$true] %s220
          %226 = dma.hbm_to_vmem [thread:$0]  %s219, 1024, %s221, [#allocation6], 64, 64, 4
        $region16: #{tpu_custom_call.1} parent=11 // pred_fallthru
          _
        // Predicated region
        $region17: #{tpu_custom_call.1} parent=11 // pred_check
          %p227 = pneg %p88
        $region18: #{tpu_custom_call.1} parent=11 // pred_check_branch
          %229 = sbr.rel (%p227) target = $region20
        $region19: #{tpu_custom_call.1} parent=11 // pred_region
          _
        $region20: #{tpu_custom_call.1} parent=11 // pred_fallthru
          _
        // Predicated region
        $region21: #{tpu_custom_call.1} parent=11 // pred_check
          %p230 = pneg %p109
        $region22: #{tpu_custom_call.1} parent=11 // pred_check_branch
          %232 = sbr.rel (%p230) target = $region24
        $region23: #{tpu_custom_call.1} parent=11 // pred_region
          _
        $region24: #{tpu_custom_call.1} parent=11 // pred_fallthru
          _
        // Predicated region
        $region25: #{tpu_custom_call.1} parent=11 // pred_check
          %p233 = pneg %p130
        $region26: #{tpu_custom_call.1} parent=11 // pred_check_branch
          %235 = sbr.rel (%p233) target = $region28
        $region27: #{tpu_custom_call.1} parent=11 // pred_region
          %237 = vsyncadd [#allocation6], 0
          %s238 = sshll.u32 %s4, 4
          %s239 = int_to_ptr.hbm [resolvable:$true] %s238
          %s240 = sshll.u32 [#allocation7], 4
          %s241 = int_to_ptr.vmem [resolvable:$true] %s240
          %246 = dma.hbm_to_vmem [thread:$0]  %s239, 1024, %s241, [#allocation6], 64, 64, 4
        $region28: #{tpu_custom_call.1} parent=11 // pred_fallthru
          _
        // Predicated region
        $region29: #{tpu_custom_call.1} parent=11 // pred_check
          %p247 = pneg %p151
        $region30: #{tpu_custom_call.1} parent=11 // pred_check_branch
          %249 = sbr.rel (%p247) target = $region32
        $region31: #{tpu_custom_call.1} parent=11 // pred_region
          _
        $region32: #{tpu_custom_call.1} parent=11 // pred_fallthru
          _
        // Predicated region
        $region33: #{tpu_custom_call.1} parent=11 // pred_check
          %p250 = pneg %p172
        $region34: #{tpu_custom_call.1} parent=11 // pred_check_branch
          %252 = sbr.rel (%p250) target = $region36
        $region35: #{tpu_custom_call.1} parent=11 // pred_region
          _
        $region36: #{tpu_custom_call.1} parent=11 // pred_fallthru
          _
      $region12: #{tpu_custom_call.1} parent=5 // pred_fallthru
        _
      %p253 = scmp.lt.s32.totalorder %s20, 2
      // Predicated region
      $region37: #{tpu_custom_call.1} parent=5 // pred_check
        %p254 = pneg %p253
      $region38: #{tpu_custom_call.1} parent=5 // pred_check_branch
        %256 = sbr.rel (%p254) target = $region40
      $region39: #{tpu_custom_call.1} parent=5 // pred_region
        // Predicated region
        $region41: #{tpu_custom_call.1} parent=39 // pred_check
          %p257 = pneg %p40
        $region42: #{tpu_custom_call.1} parent=39 // pred_check_branch
          %259 = sbr.rel (%p257) target = $region44
        $region43: #{tpu_custom_call.1} parent=39 // pred_region
          %s260 = sand.u32 %s30, 1
          %s261 = scalar_lea.sflag [#allocation3], %s260
          %s262 = sand.u32 %s30, 1
          %s263 = smul.addr %s262, 128
          %s264 = scalar_lea.vmem [#allocation2], %s263
          %s265 = smul.u32 32, %s20
          %267 = vsyncadd %s261, 0
          %s268 = smul.addr %s265, 4
          %s269 = scalar_lea.hbm %s0, %s268
          %s270 = sshll.u32 %s269, 4
          %s271 = int_to_ptr.hbm [resolvable:$true] %s270
          %s272 = sshll.u32 %s264, 4
          %s273 = int_to_ptr.vmem [resolvable:$true] %s272
          %278 = dma.hbm_to_vmem [thread:$0]  %s271, 2048, %s273, %s261, 64, 64, 4
        $region44: #{tpu_custom_call.1} parent=39 // pred_fallthru
          _
      $region40: #{tpu_custom_call.1} parent=5 // pred_fallthru
        _
      %p279 = scmp.le.s32.totalorder 1, %s20
      %p280 = scmp.lt.s32.totalorder %s20, 3
      %p281 = pnand %p279, %p280
      %p282 = pneg %p281
      // Predicated region
      $region45: #{tpu_custom_call.1} parent=5 // pred_check
        _
      $region46: #{tpu_custom_call.1} parent=5 // pred_check_branch
        %284 = sbr.rel (%p281) target = $region48
      $region47: #{tpu_custom_call.1} parent=5 // pred_region
        %s285 = ssub.s32 %s20, 1
        %s286 = sand.u32 %s33, 1
        %s287 = scalar_lea.sflag [#allocation3], %s286
        %s288 = sand.u32 %s33, 1
        %s289 = smul.addr %s288, 128
        %s290 = scalar_lea.vmem [#allocation2], %s289
        // Predicated region
        $region49: #{tpu_custom_call.1} parent=47 // pred_check
          %p291 = pneg %p46
        $region50: #{tpu_custom_call.1} parent=47 // pred_check_branch
          %293 = sbr.rel (%p291) target = $region52
        $region51: #{tpu_custom_call.1} parent=47 // pred_region
          %295 = dma.done %s287, 2048
        $region52: #{tpu_custom_call.1} parent=47 // pred_fallthru
          _
        // Predicated region
        $region53: #{tpu_custom_call.1} parent=47 // pred_check
          %p296 = pneg %p67
        $region54: #{tpu_custom_call.1} parent=47 // pred_check_branch
          %298 = sbr.rel (%p296) target = $region56
        $region55: #{tpu_custom_call.1} parent=47 // pred_region
          %300 = dma.done [#allocation6], 1024
        $region56: #{tpu_custom_call.1} parent=47 // pred_fallthru
          _
        // Predicated region
        $region57: #{tpu_custom_call.1} parent=47 // pred_check
          %p301 = pneg %p130
        $region58: #{tpu_custom_call.1} parent=47 // pred_check_branch
          %303 = sbr.rel (%p301) target = $region60
        $region59: #{tpu_custom_call.1} parent=47 // pred_region
          %305 = dma.done [#allocation6], 1024
        $region60: #{tpu_custom_call.1} parent=47 // pred_fallthru
          _
        %s306 = sand.u32 %s33, 1
        %s307 = scalar_lea.sflag [#allocation3], %s306
        %s308 = sand.u32 %s33, 1
        %s309 = smul.addr %s308, 128
        %s310 = scalar_lea.vmem [#allocation2], %s309
        %p311 = pneg %p46
        %p312 = pneg %p43
        %p313 = pneg %p67
        %p314 = pneg %p64
        %p315 = pneg %p88
        %p316 = pneg %p85
        %p317 = pneg %p109
        %p318 = pneg %p106
        %p319 = pneg %p130
        %p320 = pneg %p127
        %p321 = pneg %p151
        %p322 = pneg %p148
        %p323 = pneg %p172
        %p324 = pneg %p169
        %p325 = pneg %p198
        %p326 = pneg %p195
        %s327 = sand.u32 %s185, 1
        %s328 = scalar_lea.sflag [#allocation4], %s327
        %s329 = sand.u32 %s185, 1
        %s330 = smul.addr %s329, 256
        %s331 = scalar_lea.vmem [#allocation8], %s330
        %s332 = smul.u32 32, %s25
        %s333 = smul.u32 32, %s25
        %v334 = vld [vmem:[%s2] sm:$0x1]
        %v335 = vld [vmem:[%s3] sm:$0x1]
        %v336 = vld [vmem:[%s5] sm:$0x1]
        %v337 = vld [vmem:[%s6] sm:$0x1]
        %v338 = vld [vmem:[%s290] sm:$0xf]
        %v339 = vld [vmem:[%s290 + $0x4] sm:$0xf]
        %v340 = vld [vmem:[%s290 + $0x8] sm:$0xf]
        %v341 = vld [vmem:[%s290 + $0xc] sm:$0xf]
        %v342 = vld [vmem:[%s290 + $0x10] sm:$0xf]
        %v343 = vld [vmem:[%s290 + $0x14] sm:$0xf]
        %v344 = vld [vmem:[%s290 + $0x18] sm:$0xf]
        %v345 = vld [vmem:[%s290 + $0x1c] sm:$0xf]
        %v346 = vld [vmem:[%s290 + $0x20] sm:$0xf]
        %v347 = vld [vmem:[%s290 + $0x24] sm:$0xf]
        %v348 = vld [vmem:[%s290 + $0x28] sm:$0xf]
        %v349 = vld [vmem:[%s290 + $0x2c] sm:$0xf]
        %v350 = vld [vmem:[%s290 + $0x30] sm:$0xf]
        %v351 = vld [vmem:[%s290 + $0x34] sm:$0xf]
        %v352 = vld [vmem:[%s290 + $0x38] sm:$0xf]
        %v353 = vld [vmem:[%s290 + $0x3c] sm:$0xf]
        %v354 = vld [vmem:[%s290 + $0x40] sm:$0xf]
        %v355 = vld [vmem:[%s290 + $0x44] sm:$0xf]
        %v356 = vld [vmem:[%s290 + $0x48] sm:$0xf]
        %v357 = vld [vmem:[%s290 + $0x4c] sm:$0xf]
        %v358 = vld [vmem:[%s290 + $0x50] sm:$0xf]
        %v359 = vld [vmem:[%s290 + $0x54] sm:$0xf]
        %v360 = vld [vmem:[%s290 + $0x58] sm:$0xf]
        %v361 = vld [vmem:[%s290 + $0x5c] sm:$0xf]
        %v362 = vld [vmem:[%s290 + $0x60] sm:$0xf]
        %v363 = vld [vmem:[%s290 + $0x64] sm:$0xf]
        %v364 = vld [vmem:[%s290 + $0x68] sm:$0xf]
        %v365 = vld [vmem:[%s290 + $0x6c] sm:$0xf]
        %v366 = vld [vmem:[%s290 + $0x70] sm:$0xf]
        %v367 = vld [vmem:[%s290 + $0x74] sm:$0xf]
        %v368 = vld [vmem:[%s290 + $0x78] sm:$0xf]
        %v369 = vld [vmem:[%s290 + $0x7c] sm:$0xf]
        %v370 = vld [vmem:[#allocation5] sm:$0xf]
        %v371 = vld [vmem:[#allocation5 + $0x4] sm:$0xf]
        %v372 = vld [vmem:[#allocation5 + $0x8] sm:$0xf]
        %v373 = vld [vmem:[#allocation5 + $0xc] sm:$0xf]
        %v374 = vld [vmem:[#allocation5 + $0x10] sm:$0xf]
        %v375 = vld [vmem:[#allocation5 + $0x14] sm:$0xf]
        %v376 = vld [vmem:[#allocation5 + $0x18] sm:$0xf]
        %v377 = vld [vmem:[#allocation5 + $0x1c] sm:$0xf]
        %v378 = vld [vmem:[#allocation5 + $0x20] sm:$0xf]
        %v379 = vld [vmem:[#allocation5 + $0x24] sm:$0xf]
        %v380 = vld [vmem:[#allocation5 + $0x28] sm:$0xf]
        %v381 = vld [vmem:[#allocation5 + $0x2c] sm:$0xf]
        %v382 = vld [vmem:[#allocation5 + $0x30] sm:$0xf]
        %v383 = vld [vmem:[#allocation5 + $0x34] sm:$0xf]
        %v384 = vld [vmem:[#allocation5 + $0x38] sm:$0xf]
        %v385 = vld [vmem:[#allocation5 + $0x3c] sm:$0xf]
        %v418 = vunpack.c.l.b16 %v338
        %v419 = vunpack.c.l.b16 %v339
        %v420 = vunpack.c.l.b16 %v340
        %v421 = vunpack.c.l.b16 %v341
        %v422 = vunpack.c.l.b16 %v342
        %v423 = vunpack.c.l.b16 %v343
        %v424 = vunpack.c.l.b16 %v344
        %v425 = vunpack.c.l.b16 %v345
        %v426 = vunpack.c.l.b16 %v346
        %v427 = vunpack.c.l.b16 %v347
        %v428 = vunpack.c.l.b16 %v348
        %v429 = vunpack.c.l.b16 %v349
        %v430 = vunpack.c.l.b16 %v350
        %v431 = vunpack.c.l.b16 %v351
        %v432 = vunpack.c.l.b16 %v352
        %v433 = vunpack.c.l.b16 %v353
        %v434 = vunpack.c.l.b16 %v354
        %v435 = vunpack.c.l.b16 %v355
        %v436 = vunpack.c.l.b16 %v356
        %v437 = vunpack.c.l.b16 %v357
        %v438 = vunpack.c.l.b16 %v358
        %v439 = vunpack.c.l.b16 %v359
        %v440 = vunpack.c.l.b16 %v360
        %v441 = vunpack.c.l.b16 %v361
        %v442 = vunpack.c.l.b16 %v362
        %v443 = vunpack.c.l.b16 %v363
        %v444 = vunpack.c.l.b16 %v364
        %v445 = vunpack.c.l.b16 %v365
        %v446 = vunpack.c.l.b16 %v366
        %v447 = vunpack.c.l.b16 %v367
        %v448 = vunpack.c.l.b16 %v368
        %v449 = vunpack.c.l.b16 %v369
        %v450 = vpack.c.b16 %v419, %v418
        %v451 = vpack.c.b16 %v421, %v420
        %v452 = vpack.c.b16 %v423, %v422
        %v453 = vpack.c.b16 %v425, %v424
        %v454 = vpack.c.b16 %v427, %v426
        %v455 = vpack.c.b16 %v429, %v428
        %v456 = vpack.c.b16 %v431, %v430
        %v457 = vpack.c.b16 %v433, %v432
        %v458 = vpack.c.b16 %v435, %v434
        %v459 = vpack.c.b16 %v437, %v436
        %v460 = vpack.c.b16 %v439, %v438
        %v461 = vpack.c.b16 %v441, %v440
        %v462 = vpack.c.b16 %v443, %v442
        %v463 = vpack.c.b16 %v445, %v444
        %v464 = vpack.c.b16 %v447, %v446
        %v465 = vpack.c.b16 %v449, %v448
        %v498 = vunpack.c.l.b16 %v370
        %v499 = vunpack.c.l.b16 %v371
        %v500 = vunpack.c.l.b16 %v372
        %v501 = vunpack.c.l.b16 %v373
        %v502 = vunpack.c.l.b16 %v374
        %v503 = vunpack.c.l.b16 %v375
        %v504 = vunpack.c.l.b16 %v376
        %v505 = vunpack.c.l.b16 %v377
        %v506 = vunpack.c.l.b16 %v378
        %v507 = vunpack.c.l.b16 %v379
        %v508 = vunpack.c.l.b16 %v380
        %v509 = vunpack.c.l.b16 %v381
        %v510 = vunpack.c.l.b16 %v382
        %v511 = vunpack.c.l.b16 %v383
        %v512 = vunpack.c.l.b16 %v384
        %v513 = vunpack.c.l.b16 %v385
        %v514 = vpack.c.b16 %v499, %v498
        %v515 = vpack.c.b16 %v501, %v500
        %v516 = vpack.c.b16 %v503, %v502
        %v517 = vpack.c.b16 %v505, %v504
        %v518 = vpack.c.b16 %v507, %v506
        %v519 = vpack.c.b16 %v509, %v508
        %v520 = vpack.c.b16 %v511, %v510
        %v521 = vpack.c.b16 %v513, %v512
        %530 = vmatpush.bf16.msra.mxu0 %v521
        %531 = vmatpush.bf16.msra.mxu0 %v520
        %532 = vmatpush.bf16.msra.mxu0 %v519
        %533 = vmatpush.bf16.msra.mxu0 %v518
        %534 = vmatpush.bf16.msra.mxu0 %v517
        %535 = vmatpush.bf16.msra.mxu0 %v516
        %536 = vmatpush.bf16.msra.mxu0 %v515
        %537 = vmatpush.bf16.msra.mxu0 %v514
        %538 = vmatmul.bf16.gmra.mxu0 %v450
        %v539 = vpop.f32.mrf.mxu0
        %v540 = vadd.f32 0.0, %v539
        %v541 = vpop.f32.mrf.mxu0
        %v542 = vadd.f32 0.0, %v541
        %543 = vmatmul.bf16.gmra.mxu0 %v451
        %v544 = vpop.f32.mrf.mxu0
        %v545 = vadd.f32 0.0, %v544
        %v546 = vpop.f32.mrf.mxu0
        %v547 = vadd.f32 0.0, %v546
        %548 = vmatmul.bf16.gmra.mxu0 %v452
        %v549 = vpop.f32.mrf.mxu0
        %v550 = vadd.f32 0.0, %v549
        %v551 = vpop.f32.mrf.mxu0
        %v552 = vadd.f32 0.0, %v551
        %553 = vmatmul.bf16.gmra.mxu0 %v453
        %v554 = vpop.f32.mrf.mxu0
        %v555 = vadd.f32 0.0, %v554
        %v556 = vpop.f32.mrf.mxu0
        %v557 = vadd.f32 0.0, %v556
        %558 = vmatmul.bf16.gmra.mxu0 %v454
        %v559 = vpop.f32.mrf.mxu0
        %v560 = vadd.f32 0.0, %v559
        %v561 = vpop.f32.mrf.mxu0
        %v562 = vadd.f32 0.0, %v561
        %563 = vmatmul.bf16.gmra.mxu0 %v455
        %v564 = vpop.f32.mrf.mxu0
        %v565 = vadd.f32 0.0, %v564
        %v566 = vpop.f32.mrf.mxu0
        %v567 = vadd.f32 0.0, %v566
        %568 = vmatmul.bf16.gmra.mxu0 %v456
        %v569 = vpop.f32.mrf.mxu0
        %v570 = vadd.f32 0.0, %v569
        %v571 = vpop.f32.mrf.mxu0
        %v572 = vadd.f32 0.0, %v571
        %573 = vmatmul.bf16.gmra.mxu0 %v457
        %v574 = vpop.f32.mrf.mxu0
        %v575 = vadd.f32 0.0, %v574
        %v576 = vpop.f32.mrf.mxu0
        %v577 = vadd.f32 0.0, %v576
        %578 = vmatmul.bf16.gmra.mxu0 %v458
        %v579 = vpop.f32.mrf.mxu0
        %v580 = vadd.f32 0.0, %v579
        %v581 = vpop.f32.mrf.mxu0
        %v582 = vadd.f32 0.0, %v581
        %583 = vmatmul.bf16.gmra.mxu0 %v459
        %v584 = vpop.f32.mrf.mxu0
        %v585 = vadd.f32 0.0, %v584
        %v586 = vpop.f32.mrf.mxu0
        %v587 = vadd.f32 0.0, %v586
        %588 = vmatmul.bf16.gmra.mxu0 %v460
        %v589 = vpop.f32.mrf.mxu0
        %v590 = vadd.f32 0.0, %v589
        %v591 = vpop.f32.mrf.mxu0
        %v592 = vadd.f32 0.0, %v591
        %593 = vmatmul.bf16.gmra.mxu0 %v461
        %v594 = vpop.f32.mrf.mxu0
        %v595 = vadd.f32 0.0, %v594
        %v596 = vpop.f32.mrf.mxu0
        %v597 = vadd.f32 0.0, %v596
        %598 = vmatmul.bf16.gmra.mxu0 %v462
        %v599 = vpop.f32.mrf.mxu0
        %v600 = vadd.f32 0.0, %v599
        %v601 = vpop.f32.mrf.mxu0
        %v602 = vadd.f32 0.0, %v601
        %603 = vmatmul.bf16.gmra.mxu0 %v463
        %v604 = vpop.f32.mrf.mxu0
        %v605 = vadd.f32 0.0, %v604
        %v606 = vpop.f32.mrf.mxu0
        %v607 = vadd.f32 0.0, %v606
        %608 = vmatmul.bf16.gmra.mxu0 %v464
        %v609 = vpop.f32.mrf.mxu0
        %v610 = vadd.f32 0.0, %v609
        %v611 = vpop.f32.mrf.mxu0
        %v612 = vadd.f32 0.0, %v611
        %613 = vmatmul.bf16.gmra.mxu0 %v465
        %v614 = vpop.f32.mrf.mxu0
        %v615 = vadd.f32 0.0, %v614
        %v616 = vpop.f32.mrf.mxu0
        %v617 = vadd.f32 0.0, %v616
        %618 = vdwg.mxu0
        %619 = vadd.xlane.f32.xlu0 %v540
        %v620 = vpop.xlane.xlu0 %619
        %621 = vadd.xlane.f32.xlu0 %v542
        %v622 = vpop.xlane.xlu0 %621
        %623 = vadd.xlane.f32.xlu0 %v545
        %v624 = vpop.xlane.xlu0 %623
        %625 = vadd.xlane.f32.xlu0 %v547
        %v626 = vpop.xlane.xlu0 %625
        %627 = vadd.xlane.f32.xlu0 %v550
        %v628 = vpop.xlane.xlu0 %627
        %629 = vadd.xlane.f32.xlu0 %v552
        %v630 = vpop.xlane.xlu0 %629
        %631 = vadd.xlane.f32.xlu0 %v555
        %v632 = vpop.xlane.xlu0 %631
        %633 = vadd.xlane.f32.xlu0 %v557
        %v634 = vpop.xlane.xlu0 %633
        %635 = vadd.xlane.f32.xlu0 %v560
        %v636 = vpop.xlane.xlu0 %635
        %637 = vadd.xlane.f32.xlu0 %v562
        %v638 = vpop.xlane.xlu0 %637
        %639 = vadd.xlane.f32.xlu0 %v565
        %v640 = vpop.xlane.xlu0 %639
        %641 = vadd.xlane.f32.xlu0 %v567
        %v642 = vpop.xlane.xlu0 %641
        %643 = vadd.xlane.f32.xlu0 %v570
        %v644 = vpop.xlane.xlu0 %643
        %645 = vadd.xlane.f32.xlu0 %v572
        %v646 = vpop.xlane.xlu0 %645
        %647 = vadd.xlane.f32.xlu0 %v575
        %v648 = vpop.xlane.xlu0 %647
        %649 = vadd.xlane.f32.xlu0 %v577
        %v650 = vpop.xlane.xlu0 %649
        %651 = vadd.xlane.f32.xlu0 %v580
        %v652 = vpop.xlane.xlu0 %651
        %653 = vadd.xlane.f32.xlu0 %v582
        %v654 = vpop.xlane.xlu0 %653
        %655 = vadd.xlane.f32.xlu0 %v585
        %v656 = vpop.xlane.xlu0 %655
        %657 = vadd.xlane.f32.xlu0 %v587
        %v658 = vpop.xlane.xlu0 %657
        %659 = vadd.xlane.f32.xlu0 %v590
        %v660 = vpop.xlane.xlu0 %659
        %661 = vadd.xlane.f32.xlu0 %v592
        %v662 = vpop.xlane.xlu0 %661
        %663 = vadd.xlane.f32.xlu0 %v595
        %v664 = vpop.xlane.xlu0 %663
        %665 = vadd.xlane.f32.xlu0 %v597
        %v666 = vpop.xlane.xlu0 %665
        %667 = vadd.xlane.f32.xlu0 %v600
        %v668 = vpop.xlane.xlu0 %667
        %669 = vadd.xlane.f32.xlu0 %v602
        %v670 = vpop.xlane.xlu0 %669
        %671 = vadd.xlane.f32.xlu0 %v605
        %v672 = vpop.xlane.xlu0 %671
        %673 = vadd.xlane.f32.xlu0 %v607
        %v674 = vpop.xlane.xlu0 %673
        %675 = vadd.xlane.f32.xlu0 %v610
        %v676 = vpop.xlane.xlu0 %675
        %677 = vadd.xlane.f32.xlu0 %v612
        %v678 = vpop.xlane.xlu0 %677
        %679 = vadd.xlane.f32.xlu0 %v615
        %v680 = vpop.xlane.xlu0 %679
        %681 = vadd.xlane.f32.xlu0 %v617
        %v682 = vpop.xlane.xlu0 %681
        %v683 = vmul.f32 %v620, 0.015625
        %v684 = vmul.f32 %v622, 0.015625
        %v685 = vmul.f32 %v624, 0.015625
        %v686 = vmul.f32 %v626, 0.015625
        %v687 = vmul.f32 %v628, 0.015625
        %v688 = vmul.f32 %v630, 0.015625
        %v689 = vmul.f32 %v632, 0.015625
        %v690 = vmul.f32 %v634, 0.015625
        %v691 = vmul.f32 %v636, 0.015625
        %v692 = vmul.f32 %v638, 0.015625
        %v693 = vmul.f32 %v640, 0.015625
        %v694 = vmul.f32 %v642, 0.015625
        %v695 = vmul.f32 %v644, 0.015625
        %v696 = vmul.f32 %v646, 0.015625
        %v697 = vmul.f32 %v648, 0.015625
        %v698 = vmul.f32 %v650, 0.015625
        %v699 = vmul.f32 %v652, 0.015625
        %v700 = vmul.f32 %v654, 0.015625
        %v701 = vmul.f32 %v656, 0.015625
        %v702 = vmul.f32 %v658, 0.015625
        %v703 = vmul.f32 %v660, 0.015625
        %v704 = vmul.f32 %v662, 0.015625
        %v705 = vmul.f32 %v664, 0.015625
        %v706 = vmul.f32 %v666, 0.015625
        %v707 = vmul.f32 %v668, 0.015625
        %v708 = vmul.f32 %v670, 0.015625
        %v709 = vmul.f32 %v672, 0.015625
        %v710 = vmul.f32 %v674, 0.015625
        %v711 = vmul.f32 %v676, 0.015625
        %v712 = vmul.f32 %v678, 0.015625
        %v713 = vmul.f32 %v680, 0.015625
        %v714 = vmul.f32 %v682, 0.015625
        %v715 = vsub.f32 %v540, %v683
        %v716 = vsub.f32 %v542, %v684
        %v717 = vsub.f32 %v545, %v685
        %v718 = vsub.f32 %v547, %v686
        %v719 = vsub.f32 %v550, %v687
        %v720 = vsub.f32 %v552, %v688
        %v721 = vsub.f32 %v555, %v689
        %v722 = vsub.f32 %v557, %v690
        %v723 = vsub.f32 %v560, %v691
        %v724 = vsub.f32 %v562, %v692
        %v725 = vsub.f32 %v565, %v693
        %v726 = vsub.f32 %v567, %v694
        %v727 = vsub.f32 %v570, %v695
        %v728 = vsub.f32 %v572, %v696
        %v729 = vsub.f32 %v575, %v697
        %v730 = vsub.f32 %v577, %v698
        %v731 = vsub.f32 %v580, %v699
        %v732 = vsub.f32 %v582, %v700
        %v733 = vsub.f32 %v585, %v701
        %v734 = vsub.f32 %v587, %v702
        %v735 = vsub.f32 %v590, %v703
        %v736 = vsub.f32 %v592, %v704
        %v737 = vsub.f32 %v595, %v705
        %v738 = vsub.f32 %v597, %v706
        %v739 = vsub.f32 %v600, %v707
        %v740 = vsub.f32 %v602, %v708
        %v741 = vsub.f32 %v605, %v709
        %v742 = vsub.f32 %v607, %v710
        %v743 = vsub.f32 %v610, %v711
        %v744 = vsub.f32 %v612, %v712
        %v745 = vsub.f32 %v615, %v713
        %v746 = vsub.f32 %v617, %v714
        %v747 = vlaneseq
        %v748 = vand.u32 %v747, 127
        %vm749 = vcmp.lt.s32.totalorder %v748, 64
        %v750 = vmul.f32 %v715, %v715
        %v751 = vmul.f32 %v716, %v716
        %v752 = vmul.f32 %v717, %v717
        %v753 = vmul.f32 %v718, %v718
        %v754 = vmul.f32 %v719, %v719
        %v755 = vmul.f32 %v720, %v720
        %v756 = vmul.f32 %v721, %v721
        %v757 = vmul.f32 %v722, %v722
        %v758 = vmul.f32 %v723, %v723
        %v759 = vmul.f32 %v724, %v724
        %v760 = vmul.f32 %v725, %v725
        %v761 = vmul.f32 %v726, %v726
        %v762 = vmul.f32 %v727, %v727
        %v763 = vmul.f32 %v728, %v728
        %v764 = vmul.f32 %v729, %v729
        %v765 = vmul.f32 %v730, %v730
        %v766 = vmul.f32 %v731, %v731
        %v767 = vmul.f32 %v732, %v732
        %v768 = vmul.f32 %v733, %v733
        %v769 = vmul.f32 %v734, %v734
        %v770 = vmul.f32 %v735, %v735
        %v771 = vmul.f32 %v736, %v736
        %v772 = vmul.f32 %v737, %v737
        %v773 = vmul.f32 %v738, %v738
        %v774 = vmul.f32 %v739, %v739
        %v775 = vmul.f32 %v740, %v740
        %v776 = vmul.f32 %v741, %v741
        %v777 = vmul.f32 %v742, %v742
        %v778 = vmul.f32 %v743, %v743
        %v779 = vmul.f32 %v744, %v744
        %v780 = vmul.f32 %v745, %v745
        %v781 = vmul.f32 %v746, %v746
        %v782 = vsel %vm749, 1, 0
        %vm783 = vcmp.eq.s32.totalorder %v782, 1
        %v784 = vsel %vm783, %v750, 0.0
        %v785 = vsel %vm783, %v751, 0.0
        %v786 = vsel %vm783, %v752, 0.0
        %v787 = vsel %vm783, %v753, 0.0
        %v788 = vsel %vm783, %v754, 0.0
        %v789 = vsel %vm783, %v755, 0.0
        %v790 = vsel %vm783, %v756, 0.0
        %v791 = vsel %vm783, %v757, 0.0
        %v792 = vsel %vm783, %v758, 0.0
        %v793 = vsel %vm783, %v759, 0.0
        %v794 = vsel %vm783, %v760, 0.0
        %v795 = vsel %vm783, %v761, 0.0
        %v796 = vsel %vm783, %v762, 0.0
        %v797 = vsel %vm783, %v763, 0.0
        %v798 = vsel %vm783, %v764, 0.0
        %v799 = vsel %vm783, %v765, 0.0
        %v800 = vsel %vm783, %v766, 0.0
        %v801 = vsel %vm783, %v767, 0.0
        %v802 = vsel %vm783, %v768, 0.0
        %v803 = vsel %vm783, %v769, 0.0
        %v804 = vsel %vm783, %v770, 0.0
        %v805 = vsel %vm783, %v771, 0.0
        %v806 = vsel %vm783, %v772, 0.0
        %v807 = vsel %vm783, %v773, 0.0
        %v808 = vsel %vm783, %v774, 0.0
        %v809 = vsel %vm783, %v775, 0.0
        %v810 = vsel %vm783, %v776, 0.0
        %v811 = vsel %vm783, %v777, 0.0
        %v812 = vsel %vm783, %v778, 0.0
        %v813 = vsel %vm783, %v779, 0.0
        %v814 = vsel %vm783, %v780, 0.0
        %v815 = vsel %vm783, %v781, 0.0
        %816 = vadd.xlane.f32.xlu0 %v784
        %v817 = vpop.xlane.xlu0 %816
        %818 = vadd.xlane.f32.xlu0 %v785
        %v819 = vpop.xlane.xlu0 %818
        %820 = vadd.xlane.f32.xlu0 %v786
        %v821 = vpop.xlane.xlu0 %820
        %822 = vadd.xlane.f32.xlu0 %v787
        %v823 = vpop.xlane.xlu0 %822
        %824 = vadd.xlane.f32.xlu0 %v788
        %v825 = vpop.xlane.xlu0 %824
        %826 = vadd.xlane.f32.xlu0 %v789
        %v827 = vpop.xlane.xlu0 %826
        %828 = vadd.xlane.f32.xlu0 %v790
        %v829 = vpop.xlane.xlu0 %828
        %830 = vadd.xlane.f32.xlu0 %v791
        %v831 = vpop.xlane.xlu0 %830
        %832 = vadd.xlane.f32.xlu0 %v792
        %v833 = vpop.xlane.xlu0 %832
        %834 = vadd.xlane.f32.xlu0 %v793
        %v835 = vpop.xlane.xlu0 %834
        %836 = vadd.xlane.f32.xlu0 %v794
        %v837 = vpop.xlane.xlu0 %836
        %838 = vadd.xlane.f32.xlu0 %v795
        %v839 = vpop.xlane.xlu0 %838
        %840 = vadd.xlane.f32.xlu0 %v796
        %v841 = vpop.xlane.xlu0 %840
        %842 = vadd.xlane.f32.xlu0 %v797
        %v843 = vpop.xlane.xlu0 %842
        %844 = vadd.xlane.f32.xlu0 %v798
        %v845 = vpop.xlane.xlu0 %844
        %846 = vadd.xlane.f32.xlu0 %v799
        %v847 = vpop.xlane.xlu0 %846
        %848 = vadd.xlane.f32.xlu0 %v800
        %v849 = vpop.xlane.xlu0 %848
        %850 = vadd.xlane.f32.xlu0 %v801
        %v851 = vpop.xlane.xlu0 %850
        %852 = vadd.xlane.f32.xlu0 %v802
        %v853 = vpop.xlane.xlu0 %852
        %854 = vadd.xlane.f32.xlu0 %v803
        %v855 = vpop.xlane.xlu0 %854
        %856 = vadd.xlane.f32.xlu0 %v804
        %v857 = vpop.xlane.xlu0 %856
        %858 = vadd.xlane.f32.xlu0 %v805
        %v859 = vpop.xlane.xlu0 %858
        %860 = vadd.xlane.f32.xlu0 %v806
        %v861 = vpop.xlane.xlu0 %860
        %862 = vadd.xlane.f32.xlu0 %v807
        %v863 = vpop.xlane.xlu0 %862
        %864 = vadd.xlane.f32.xlu0 %v808
        %v865 = vpop.xlane.xlu0 %864
        %866 = vadd.xlane.f32.xlu0 %v809
        %v867 = vpop.xlane.xlu0 %866
        %868 = vadd.xlane.f32.xlu0 %v810
        %v869 = vpop.xlane.xlu0 %868
        %870 = vadd.xlane.f32.xlu0 %v811
        %v871 = vpop.xlane.xlu0 %870
        %872 = vadd.xlane.f32.xlu0 %v812
        %v873 = vpop.xlane.xlu0 %872
        %874 = vadd.xlane.f32.xlu0 %v813
        %v875 = vpop.xlane.xlu0 %874
        %876 = vadd.xlane.f32.xlu0 %v814
        %v877 = vpop.xlane.xlu0 %876
        %878 = vadd.xlane.f32.xlu0 %v815
        %v879 = vpop.xlane.xlu0 %878
        %v880 = vmul.f32 %v817, 0.015625
        %v881 = vmul.f32 %v819, 0.015625
        %v882 = vmul.f32 %v821, 0.015625
        %v883 = vmul.f32 %v823, 0.015625
        %v884 = vmul.f32 %v825, 0.015625
        %v885 = vmul.f32 %v827, 0.015625
        %v886 = vmul.f32 %v829, 0.015625
        %v887 = vmul.f32 %v831, 0.015625
        %v888 = vmul.f32 %v833, 0.015625
        %v889 = vmul.f32 %v835, 0.015625
        %v890 = vmul.f32 %v837, 0.015625
        %v891 = vmul.f32 %v839, 0.015625
        %v892 = vmul.f32 %v841, 0.015625
        %v893 = vmul.f32 %v843, 0.015625
        %v894 = vmul.f32 %v845, 0.015625
        %v895 = vmul.f32 %v847, 0.015625
        %v896 = vmul.f32 %v849, 0.015625
        %v897 = vmul.f32 %v851, 0.015625
        %v898 = vmul.f32 %v853, 0.015625
        %v899 = vmul.f32 %v855, 0.015625
        %v900 = vmul.f32 %v857, 0.015625
        %v901 = vmul.f32 %v859, 0.015625
        %v902 = vmul.f32 %v861, 0.015625
        %v903 = vmul.f32 %v863, 0.015625
        %v904 = vmul.f32 %v865, 0.015625
        %v905 = vmul.f32 %v867, 0.015625
        %v906 = vmul.f32 %v869, 0.015625
        %v907 = vmul.f32 %v871, 0.015625
        %v908 = vmul.f32 %v873, 0.015625
        %v909 = vmul.f32 %v875, 0.015625
        %v910 = vmul.f32 %v877, 0.015625
        %v911 = vmul.f32 %v879, 0.015625
        %v912 = vadd.f32 %v880, 1e-05
        %v913 = vadd.f32 %v881, 1e-05
        %v914 = vadd.f32 %v882, 1e-05
        %v915 = vadd.f32 %v883, 1e-05
        %v916 = vadd.f32 %v884, 1e-05
        %v917 = vadd.f32 %v885, 1e-05
        %v918 = vadd.f32 %v886, 1e-05
        %v919 = vadd.f32 %v887, 1e-05
        %v920 = vadd.f32 %v888, 1e-05
        %v921 = vadd.f32 %v889, 1e-05
        %v922 = vadd.f32 %v890, 1e-05
        %v923 = vadd.f32 %v891, 1e-05
        %v924 = vadd.f32 %v892, 1e-05
        %v925 = vadd.f32 %v893, 1e-05
        %v926 = vadd.f32 %v894, 1e-05
        %v927 = vadd.f32 %v895, 1e-05
        %v928 = vadd.f32 %v896, 1e-05
        %v929 = vadd.f32 %v897, 1e-05
        %v930 = vadd.f32 %v898, 1e-05
        %v931 = vadd.f32 %v899, 1e-05
        %v932 = vadd.f32 %v900, 1e-05
        %v933 = vadd.f32 %v901, 1e-05
        %v934 = vadd.f32 %v902, 1e-05
        %v935 = vadd.f32 %v903, 1e-05
        %v936 = vadd.f32 %v904, 1e-05
        %v937 = vadd.f32 %v905, 1e-05
        %v938 = vadd.f32 %v906, 1e-05
        %v939 = vadd.f32 %v907, 1e-05
        %v940 = vadd.f32 %v908, 1e-05
        %v941 = vadd.f32 %v909, 1e-05
        %v942 = vadd.f32 %v910, 1e-05
        %v943 = vadd.f32 %v911, 1e-05
        %v944 = vrsqrt.pop %v912
        %v945 = vmul.f32 %v944, %v912
        %v946 = vmul.f32 %v945, %v944
        %v947 = vmul.f32 0.5, %v946
        %v948 = vsub.f32 1.5, %v947
        %v949 = vmul.f32 %v944, %v948
        %vm950 = vweird.f32 %v912
        %vm951 = vweird.f32 %v944
        %vm952 = vmor %vm950, %vm951
        %v953 = vsel %vm952, %v944, %v949
        %v954 = vrsqrt.pop %v913
        %v955 = vmul.f32 %v954, %v913
        %v956 = vmul.f32 %v955, %v954
        %v957 = vmul.f32 0.5, %v956
        %v958 = vsub.f32 1.5, %v957
        %v959 = vmul.f32 %v954, %v958
        %vm960 = vweird.f32 %v913
        %vm961 = vweird.f32 %v954
        %vm962 = vmor %vm960, %vm961
        %v963 = vsel %vm962, %v954, %v959
        %v964 = vrsqrt.pop %v914
        %v965 = vmul.f32 %v964, %v914
        %v966 = vmul.f32 %v965, %v964
        %v967 = vmul.f32 0.5, %v966
        %v968 = vsub.f32 1.5, %v967
        %v969 = vmul.f32 %v964, %v968
        %vm970 = vweird.f32 %v914
        %vm971 = vweird.f32 %v964
        %vm972 = vmor %vm970, %vm971
        %v973 = vsel %vm972, %v964, %v969
        %v974 = vrsqrt.pop %v915
        %v975 = vmul.f32 %v974, %v915
        %v976 = vmul.f32 %v975, %v974
        %v977 = vmul.f32 0.5, %v976
        %v978 = vsub.f32 1.5, %v977
        %v979 = vmul.f32 %v974, %v978
        %vm980 = vweird.f32 %v915
        %vm981 = vweird.f32 %v974
        %vm982 = vmor %vm980, %vm981
        %v983 = vsel %vm982, %v974, %v979
        %v984 = vrsqrt.pop %v916
        %v985 = vmul.f32 %v984, %v916
        %v986 = vmul.f32 %v985, %v984
        %v987 = vmul.f32 0.5, %v986
        %v988 = vsub.f32 1.5, %v987
        %v989 = vmul.f32 %v984, %v988
        %vm990 = vweird.f32 %v916
        %vm991 = vweird.f32 %v984
        %vm992 = vmor %vm990, %vm991
        %v993 = vsel %vm992, %v984, %v989
        %v994 = vrsqrt.pop %v917
        %v995 = vmul.f32 %v994, %v917
        %v996 = vmul.f32 %v995, %v994
        %v997 = vmul.f32 0.5, %v996
        %v998 = vsub.f32 1.5, %v997
        %v999 = vmul.f32 %v994, %v998
        %vm1000 = vweird.f32 %v917
        %vm1001 = vweird.f32 %v994
        %vm1002 = vmor %vm1000, %vm1001
        %v1003 = vsel %vm1002, %v994, %v999
        %v1004 = vrsqrt.pop %v918
        %v1005 = vmul.f32 %v1004, %v918
        %v1006 = vmul.f32 %v1005, %v1004
        %v1007 = vmul.f32 0.5, %v1006
        %v1008 = vsub.f32 1.5, %v1007
        %v1009 = vmul.f32 %v1004, %v1008
        %vm1010 = vweird.f32 %v918
        %vm1011 = vweird.f32 %v1004
        %vm1012 = vmor %vm1010, %vm1011
        %v1013 = vsel %vm1012, %v1004, %v1009
        %v1014 = vrsqrt.pop %v919
        %v1015 = vmul.f32 %v1014, %v919
        %v1016 = vmul.f32 %v1015, %v1014
        %v1017 = vmul.f32 0.5, %v1016
        %v1018 = vsub.f32 1.5, %v1017
        %v1019 = vmul.f32 %v1014, %v1018
        %vm1020 = vweird.f32 %v919
        %vm1021 = vweird.f32 %v1014
        %vm1022 = vmor %vm1020, %vm1021
        %v1023 = vsel %vm1022, %v1014, %v1019
        %v1024 = vrsqrt.pop %v920
        %v1025 = vmul.f32 %v1024, %v920
        %v1026 = vmul.f32 %v1025, %v1024
        %v1027 = vmul.f32 0.5, %v1026
        %v1028 = vsub.f32 1.5, %v1027
        %v1029 = vmul.f32 %v1024, %v1028
        %vm1030 = vweird.f32 %v920
        %vm1031 = vweird.f32 %v1024
        %vm1032 = vmor %vm1030, %vm1031
        %v1033 = vsel %vm1032, %v1024, %v1029
        %v1034 = vrsqrt.pop %v921
        %v1035 = vmul.f32 %v1034, %v921
        %v1036 = vmul.f32 %v1035, %v1034
        %v1037 = vmul.f32 0.5, %v1036
        %v1038 = vsub.f32 1.5, %v1037
        %v1039 = vmul.f32 %v1034, %v1038
        %vm1040 = vweird.f32 %v921
        %vm1041 = vweird.f32 %v1034
        %vm1042 = vmor %vm1040, %vm1041
        %v1043 = vsel %vm1042, %v1034, %v1039
        %v1044 = vrsqrt.pop %v922
        %v1045 = vmul.f32 %v1044, %v922
        %v1046 = vmul.f32 %v1045, %v1044
        %v1047 = vmul.f32 0.5, %v1046
        %v1048 = vsub.f32 1.5, %v1047
        %v1049 = vmul.f32 %v1044, %v1048
        %vm1050 = vweird.f32 %v922
        %vm1051 = vweird.f32 %v1044
        %vm1052 = vmor %vm1050, %vm1051
        %v1053 = vsel %vm1052, %v1044, %v1049
        %v1054 = vrsqrt.pop %v923
        %v1055 = vmul.f32 %v1054, %v923
        %v1056 = vmul.f32 %v1055, %v1054
        %v1057 = vmul.f32 0.5, %v1056
        %v1058 = vsub.f32 1.5, %v1057
        %v1059 = vmul.f32 %v1054, %v1058
        %vm1060 = vweird.f32 %v923
        %vm1061 = vweird.f32 %v1054
        %vm1062 = vmor %vm1060, %vm1061
        %v1063 = vsel %vm1062, %v1054, %v1059
        %v1064 = vrsqrt.pop %v924
        %v1065 = vmul.f32 %v1064, %v924
        %v1066 = vmul.f32 %v1065, %v1064
        %v1067 = vmul.f32 0.5, %v1066
        %v1068 = vsub.f32 1.5, %v1067
        %v1069 = vmul.f32 %v1064, %v1068
        %vm1070 = vweird.f32 %v924
        %vm1071 = vweird.f32 %v1064
        %vm1072 = vmor %vm1070, %vm1071
        %v1073 = vsel %vm1072, %v1064, %v1069
        %v1074 = vrsqrt.pop %v925
        %v1075 = vmul.f32 %v1074, %v925
        %v1076 = vmul.f32 %v1075, %v1074
        %v1077 = vmul.f32 0.5, %v1076
        %v1078 = vsub.f32 1.5, %v1077
        %v1079 = vmul.f32 %v1074, %v1078
        %vm1080 = vweird.f32 %v925
        %vm1081 = vweird.f32 %v1074
        %vm1082 = vmor %vm1080, %vm1081
        %v1083 = vsel %vm1082, %v1074, %v1079
        %v1084 = vrsqrt.pop %v926
        %v1085 = vmul.f32 %v1084, %v926
        %v1086 = vmul.f32 %v1085, %v1084
        %v1087 = vmul.f32 0.5, %v1086
        %v1088 = vsub.f32 1.5, %v1087
        %v1089 = vmul.f32 %v1084, %v1088
        %vm1090 = vweird.f32 %v926
        %vm1091 = vweird.f32 %v1084
        %vm1092 = vmor %vm1090, %vm1091
        %v1093 = vsel %vm1092, %v1084, %v1089
        %v1094 = vrsqrt.pop %v927
        %v1095 = vmul.f32 %v1094, %v927
        %v1096 = vmul.f32 %v1095, %v1094
        %v1097 = vmul.f32 0.5, %v1096
        %v1098 = vsub.f32 1.5, %v1097
        %v1099 = vmul.f32 %v1094, %v1098
        %vm1100 = vweird.f32 %v927
        %vm1101 = vweird.f32 %v1094
        %vm1102 = vmor %vm1100, %vm1101
        %v1103 = vsel %vm1102, %v1094, %v1099
        %v1104 = vrsqrt.pop %v928
        %v1105 = vmul.f32 %v1104, %v928
        %v1106 = vmul.f32 %v1105, %v1104
        %v1107 = vmul.f32 0.5, %v1106
        %v1108 = vsub.f32 1.5, %v1107
        %v1109 = vmul.f32 %v1104, %v1108
        %vm1110 = vweird.f32 %v928
        %vm1111 = vweird.f32 %v1104
        %vm1112 = vmor %vm1110, %vm1111
        %v1113 = vsel %vm1112, %v1104, %v1109
        %v1114 = vrsqrt.pop %v929
        %v1115 = vmul.f32 %v1114, %v929
        %v1116 = vmul.f32 %v1115, %v1114
        %v1117 = vmul.f32 0.5, %v1116
        %v1118 = vsub.f32 1.5, %v1117
        %v1119 = vmul.f32 %v1114, %v1118
        %vm1120 = vweird.f32 %v929
        %vm1121 = vweird.f32 %v1114
        %vm1122 = vmor %vm1120, %vm1121
        %v1123 = vsel %vm1122, %v1114, %v1119
        %v1124 = vrsqrt.pop %v930
        %v1125 = vmul.f32 %v1124, %v930
        %v1126 = vmul.f32 %v1125, %v1124
        %v1127 = vmul.f32 0.5, %v1126
        %v1128 = vsub.f32 1.5, %v1127
        %v1129 = vmul.f32 %v1124, %v1128
        %vm1130 = vweird.f32 %v930
        %vm1131 = vweird.f32 %v1124
        %vm1132 = vmor %vm1130, %vm1131
        %v1133 = vsel %vm1132, %v1124, %v1129
        %v1134 = vrsqrt.pop %v931
        %v1135 = vmul.f32 %v1134, %v931
        %v1136 = vmul.f32 %v1135, %v1134
        %v1137 = vmul.f32 0.5, %v1136
        %v1138 = vsub.f32 1.5, %v1137
        %v1139 = vmul.f32 %v1134, %v1138
        %vm1140 = vweird.f32 %v931
        %vm1141 = vweird.f32 %v1134
        %vm1142 = vmor %vm1140, %vm1141
        %v1143 = vsel %vm1142, %v1134, %v1139
        %v1144 = vrsqrt.pop %v932
        %v1145 = vmul.f32 %v1144, %v932
        %v1146 = vmul.f32 %v1145, %v1144
        %v1147 = vmul.f32 0.5, %v1146
        %v1148 = vsub.f32 1.5, %v1147
        %v1149 = vmul.f32 %v1144, %v1148
        %vm1150 = vweird.f32 %v932
        %vm1151 = vweird.f32 %v1144
        %vm1152 = vmor %vm1150, %vm1151
        %v1153 = vsel %vm1152, %v1144, %v1149
        %v1154 = vrsqrt.pop %v933
        %v1155 = vmul.f32 %v1154, %v933
        %v1156 = vmul.f32 %v1155, %v1154
        %v1157 = vmul.f32 0.5, %v1156
        %v1158 = vsub.f32 1.5, %v1157
        %v1159 = vmul.f32 %v1154, %v1158
        %vm1160 = vweird.f32 %v933
        %vm1161 = vweird.f32 %v1154
        %vm1162 = vmor %vm1160, %vm1161
        %v1163 = vsel %vm1162, %v1154, %v1159
        %v1164 = vrsqrt.pop %v934
        %v1165 = vmul.f32 %v1164, %v934
        %v1166 = vmul.f32 %v1165, %v1164
        %v1167 = vmul.f32 0.5, %v1166
        %v1168 = vsub.f32 1.5, %v1167
        %v1169 = vmul.f32 %v1164, %v1168
        %vm1170 = vweird.f32 %v934
        %vm1171 = vweird.f32 %v1164
        %vm1172 = vmor %vm1170, %vm1171
        %v1173 = vsel %vm1172, %v1164, %v1169
        %v1174 = vrsqrt.pop %v935
        %v1175 = vmul.f32 %v1174, %v935
        %v1176 = vmul.f32 %v1175, %v1174
        %v1177 = vmul.f32 0.5, %v1176
        %v1178 = vsub.f32 1.5, %v1177
        %v1179 = vmul.f32 %v1174, %v1178
        %vm1180 = vweird.f32 %v935
        %vm1181 = vweird.f32 %v1174
        %vm1182 = vmor %vm1180, %vm1181
        %v1183 = vsel %vm1182, %v1174, %v1179
        %v1184 = vrsqrt.pop %v936
        %v1185 = vmul.f32 %v1184, %v936
        %v1186 = vmul.f32 %v1185, %v1184
        %v1187 = vmul.f32 0.5, %v1186
        %v1188 = vsub.f32 1.5, %v1187
        %v1189 = vmul.f32 %v1184, %v1188
        %vm1190 = vweird.f32 %v936
        %vm1191 = vweird.f32 %v1184
        %vm1192 = vmor %vm1190, %vm1191
        %v1193 = vsel %vm1192, %v1184, %v1189
        %v1194 = vrsqrt.pop %v937
        %v1195 = vmul.f32 %v1194, %v937
        %v1196 = vmul.f32 %v1195, %v1194
        %v1197 = vmul.f32 0.5, %v1196
        %v1198 = vsub.f32 1.5, %v1197
        %v1199 = vmul.f32 %v1194, %v1198
        %vm1200 = vweird.f32 %v937
        %vm1201 = vweird.f32 %v1194
        %vm1202 = vmor %vm1200, %vm1201
        %v1203 = vsel %vm1202, %v1194, %v1199
        %v1204 = vrsqrt.pop %v938
        %v1205 = vmul.f32 %v1204, %v938
        %v1206 = vmul.f32 %v1205, %v1204
        %v1207 = vmul.f32 0.5, %v1206
        %v1208 = vsub.f32 1.5, %v1207
        %v1209 = vmul.f32 %v1204, %v1208
        %vm1210 = vweird.f32 %v938
        %vm1211 = vweird.f32 %v1204
        %vm1212 = vmor %vm1210, %vm1211
        %v1213 = vsel %vm1212, %v1204, %v1209
        %v1214 = vrsqrt.pop %v939
        %v1215 = vmul.f32 %v1214, %v939
        %v1216 = vmul.f32 %v1215, %v1214
        %v1217 = vmul.f32 0.5, %v1216
        %v1218 = vsub.f32 1.5, %v1217
        %v1219 = vmul.f32 %v1214, %v1218
        %vm1220 = vweird.f32 %v939
        %vm1221 = vweird.f32 %v1214
        %vm1222 = vmor %vm1220, %vm1221
        %v1223 = vsel %vm1222, %v1214, %v1219
        %v1224 = vrsqrt.pop %v940
        %v1225 = vmul.f32 %v1224, %v940
        %v1226 = vmul.f32 %v1225, %v1224
        %v1227 = vmul.f32 0.5, %v1226
        %v1228 = vsub.f32 1.5, %v1227
        %v1229 = vmul.f32 %v1224, %v1228
        %vm1230 = vweird.f32 %v940
        %vm1231 = vweird.f32 %v1224
        %vm1232 = vmor %vm1230, %vm1231
        %v1233 = vsel %vm1232, %v1224, %v1229
        %v1234 = vrsqrt.pop %v941
        %v1235 = vmul.f32 %v1234, %v941
        %v1236 = vmul.f32 %v1235, %v1234
        %v1237 = vmul.f32 0.5, %v1236
        %v1238 = vsub.f32 1.5, %v1237
        %v1239 = vmul.f32 %v1234, %v1238
        %vm1240 = vweird.f32 %v941
        %vm1241 = vweird.f32 %v1234
        %vm1242 = vmor %vm1240, %vm1241
        %v1243 = vsel %vm1242, %v1234, %v1239
        %v1244 = vrsqrt.pop %v942
        %v1245 = vmul.f32 %v1244, %v942
        %v1246 = vmul.f32 %v1245, %v1244
        %v1247 = vmul.f32 0.5, %v1246
        %v1248 = vsub.f32 1.5, %v1247
        %v1249 = vmul.f32 %v1244, %v1248
        %vm1250 = vweird.f32 %v942
        %vm1251 = vweird.f32 %v1244
        %vm1252 = vmor %vm1250, %vm1251
        %v1253 = vsel %vm1252, %v1244, %v1249
        %v1254 = vrsqrt.pop %v943
        %v1255 = vmul.f32 %v1254, %v943
        %v1256 = vmul.f32 %v1255, %v1254
        %v1257 = vmul.f32 0.5, %v1256
        %v1258 = vsub.f32 1.5, %v1257
        %v1259 = vmul.f32 %v1254, %v1258
        %vm1260 = vweird.f32 %v943
        %vm1261 = vweird.f32 %v1254
        %vm1262 = vmor %vm1260, %vm1261
        %v1263 = vsel %vm1262, %v1254, %v1259
        %v1264 = vmul.f32 %v715, %v953
        %v1265 = vmul.f32 %v716, %v963
        %v1266 = vmul.f32 %v717, %v973
        %v1267 = vmul.f32 %v718, %v983
        %v1268 = vmul.f32 %v719, %v993
        %v1269 = vmul.f32 %v720, %v1003
        %v1270 = vmul.f32 %v721, %v1013
        %v1271 = vmul.f32 %v722, %v1023
        %v1272 = vmul.f32 %v723, %v1033
        %v1273 = vmul.f32 %v724, %v1043
        %v1274 = vmul.f32 %v725, %v1053
        %v1275 = vmul.f32 %v726, %v1063
        %v1276 = vmul.f32 %v727, %v1073
        %v1277 = vmul.f32 %v728, %v1083
        %v1278 = vmul.f32 %v729, %v1093
        %v1279 = vmul.f32 %v730, %v1103
        %v1280 = vmul.f32 %v731, %v1113
        %v1281 = vmul.f32 %v732, %v1123
        %v1282 = vmul.f32 %v733, %v1133
        %v1283 = vmul.f32 %v734, %v1143
        %v1284 = vmul.f32 %v735, %v1153
        %v1285 = vmul.f32 %v736, %v1163
        %v1286 = vmul.f32 %v737, %v1173
        %v1287 = vmul.f32 %v738, %v1183
        %v1288 = vmul.f32 %v739, %v1193
        %v1289 = vmul.f32 %v740, %v1203
        %v1290 = vmul.f32 %v741, %v1213
        %v1291 = vmul.f32 %v742, %v1223
        %v1292 = vmul.f32 %v743, %v1233
        %v1293 = vmul.f32 %v744, %v1243
        %v1294 = vmul.f32 %v745, %v1253
        %v1295 = vmul.f32 %v746, %v1263
        %v1297 = vperm.slane %v334, 0
        %v1299 = vmul.f32 %v1264, %v1297
        %v1300 = vmul.f32 %v1265, %v1297
        %v1301 = vmul.f32 %v1266, %v1297
        %v1302 = vmul.f32 %v1267, %v1297
        %v1303 = vmul.f32 %v1268, %v1297
        %v1304 = vmul.f32 %v1269, %v1297
        %v1305 = vmul.f32 %v1270, %v1297
        %v1306 = vmul.f32 %v1271, %v1297
        %v1307 = vmul.f32 %v1272, %v1297
        %v1308 = vmul.f32 %v1273, %v1297
        %v1309 = vmul.f32 %v1274, %v1297
        %v1310 = vmul.f32 %v1275, %v1297
        %v1311 = vmul.f32 %v1276, %v1297
        %v1312 = vmul.f32 %v1277, %v1297
        %v1313 = vmul.f32 %v1278, %v1297
        %v1314 = vmul.f32 %v1279, %v1297
        %v1315 = vmul.f32 %v1280, %v1297
        %v1316 = vmul.f32 %v1281, %v1297
        %v1317 = vmul.f32 %v1282, %v1297
        %v1318 = vmul.f32 %v1283, %v1297
        %v1319 = vmul.f32 %v1284, %v1297
        %v1320 = vmul.f32 %v1285, %v1297
        %v1321 = vmul.f32 %v1286, %v1297
        %v1322 = vmul.f32 %v1287, %v1297
        %v1323 = vmul.f32 %v1288, %v1297
        %v1324 = vmul.f32 %v1289, %v1297
        %v1325 = vmul.f32 %v1290, %v1297
        %v1326 = vmul.f32 %v1291, %v1297
        %v1327 = vmul.f32 %v1292, %v1297
        %v1328 = vmul.f32 %v1293, %v1297
        %v1329 = vmul.f32 %v1294, %v1297
        %v1330 = vmul.f32 %v1295, %v1297
        %v1332 = vperm.slane %v335, 0
        %v1334 = vadd.f32 %v1299, %v1332
        %v1335 = vadd.f32 %v1300, %v1332
        %v1336 = vadd.f32 %v1301, %v1332
        %v1337 = vadd.f32 %v1302, %v1332
        %v1338 = vadd.f32 %v1303, %v1332
        %v1339 = vadd.f32 %v1304, %v1332
        %v1340 = vadd.f32 %v1305, %v1332
        %v1341 = vadd.f32 %v1306, %v1332
        %v1342 = vadd.f32 %v1307, %v1332
        %v1343 = vadd.f32 %v1308, %v1332
        %v1344 = vadd.f32 %v1309, %v1332
        %v1345 = vadd.f32 %v1310, %v1332
        %v1346 = vadd.f32 %v1311, %v1332
        %v1347 = vadd.f32 %v1312, %v1332
        %v1348 = vadd.f32 %v1313, %v1332
        %v1349 = vadd.f32 %v1314, %v1332
        %v1350 = vadd.f32 %v1315, %v1332
        %v1351 = vadd.f32 %v1316, %v1332
        %v1352 = vadd.f32 %v1317, %v1332
        %v1353 = vadd.f32 %v1318, %v1332
        %v1354 = vadd.f32 %v1319, %v1332
        %v1355 = vadd.f32 %v1320, %v1332
        %v1356 = vadd.f32 %v1321, %v1332
        %v1357 = vadd.f32 %v1322, %v1332
        %v1358 = vadd.f32 %v1323, %v1332
        %v1359 = vadd.f32 %v1324, %v1332
        %v1360 = vadd.f32 %v1325, %v1332
        %v1361 = vadd.f32 %v1326, %v1332
        %v1362 = vadd.f32 %v1327, %v1332
        %v1363 = vadd.f32 %v1328, %v1332
        %v1364 = vadd.f32 %v1329, %v1332
        %v1365 = vadd.f32 %v1330, %v1332
        %v1366 = vmax.f32 %v1334, 0.0
        %v1367 = vmax.f32 %v1335, 0.0
        %v1368 = vmax.f32 %v1336, 0.0
        %v1369 = vmax.f32 %v1337, 0.0
        %v1370 = vmax.f32 %v1338, 0.0
        %v1371 = vmax.f32 %v1339, 0.0
        %v1372 = vmax.f32 %v1340, 0.0
        %v1373 = vmax.f32 %v1341, 0.0
        %v1374 = vmax.f32 %v1342, 0.0
        %v1375 = vmax.f32 %v1343, 0.0
        %v1376 = vmax.f32 %v1344, 0.0
        %v1377 = vmax.f32 %v1345, 0.0
        %v1378 = vmax.f32 %v1346, 0.0
        %v1379 = vmax.f32 %v1347, 0.0
        %v1380 = vmax.f32 %v1348, 0.0
        %v1381 = vmax.f32 %v1349, 0.0
        %v1382 = vmax.f32 %v1350, 0.0
        %v1383 = vmax.f32 %v1351, 0.0
        %v1384 = vmax.f32 %v1352, 0.0
        %v1385 = vmax.f32 %v1353, 0.0
        %v1386 = vmax.f32 %v1354, 0.0
        %v1387 = vmax.f32 %v1355, 0.0
        %v1388 = vmax.f32 %v1356, 0.0
        %v1389 = vmax.f32 %v1357, 0.0
        %v1390 = vmax.f32 %v1358, 0.0
        %v1391 = vmax.f32 %v1359, 0.0
        %v1392 = vmax.f32 %v1360, 0.0
        %v1393 = vmax.f32 %v1361, 0.0
        %v1394 = vmax.f32 %v1362, 0.0
        %v1395 = vmax.f32 %v1363, 0.0
        %v1396 = vmax.f32 %v1364, 0.0
        %v1397 = vmax.f32 %v1365, 0.0
        %v1398 = vpack.c.bf16 %v1367, %v1366
        %v1399 = vpack.c.bf16 %v1369, %v1368
        %v1400 = vpack.c.bf16 %v1371, %v1370
        %v1401 = vpack.c.bf16 %v1373, %v1372
        %v1402 = vpack.c.bf16 %v1375, %v1374
        %v1403 = vpack.c.bf16 %v1377, %v1376
        %v1404 = vpack.c.bf16 %v1379, %v1378
        %v1405 = vpack.c.bf16 %v1381, %v1380
        %v1406 = vpack.c.bf16 %v1383, %v1382
        %v1407 = vpack.c.bf16 %v1385, %v1384
        %v1408 = vpack.c.bf16 %v1387, %v1386
        %v1409 = vpack.c.bf16 %v1389, %v1388
        %v1410 = vpack.c.bf16 %v1391, %v1390
        %v1411 = vpack.c.bf16 %v1393, %v1392
        %v1412 = vpack.c.bf16 %v1395, %v1394
        %v1413 = vpack.c.bf16 %v1397, %v1396
        %v1414 = vld [vmem:[#allocation7] sm:$0xf]
        %v1415 = vld [vmem:[#allocation7 + $0x4] sm:$0xf]
        %v1416 = vld [vmem:[#allocation7 + $0x8] sm:$0xf]
        %v1417 = vld [vmem:[#allocation7 + $0xc] sm:$0xf]
        %v1418 = vld [vmem:[#allocation7 + $0x10] sm:$0xf]
        %v1419 = vld [vmem:[#allocation7 + $0x14] sm:$0xf]
        %v1420 = vld [vmem:[#allocation7 + $0x18] sm:$0xf]
        %v1421 = vld [vmem:[#allocation7 + $0x1c] sm:$0xf]
        %v1422 = vld [vmem:[#allocation7 + $0x20] sm:$0xf]
        %v1423 = vld [vmem:[#allocation7 + $0x24] sm:$0xf]
        %v1424 = vld [vmem:[#allocation7 + $0x28] sm:$0xf]
        %v1425 = vld [vmem:[#allocation7 + $0x2c] sm:$0xf]
        %v1426 = vld [vmem:[#allocation7 + $0x30] sm:$0xf]
        %v1427 = vld [vmem:[#allocation7 + $0x34] sm:$0xf]
        %v1428 = vld [vmem:[#allocation7 + $0x38] sm:$0xf]
        %v1429 = vld [vmem:[#allocation7 + $0x3c] sm:$0xf]
        %v1446 = vunpack.c.l.b16 %v1414
        %v1447 = vunpack.c.l.b16 %v1415
        %v1448 = vunpack.c.l.b16 %v1416
        %v1449 = vunpack.c.l.b16 %v1417
        %v1450 = vunpack.c.l.b16 %v1418
        %v1451 = vunpack.c.l.b16 %v1419
        %v1452 = vunpack.c.l.b16 %v1420
        %v1453 = vunpack.c.l.b16 %v1421
        %v1454 = vunpack.c.l.b16 %v1422
        %v1455 = vunpack.c.l.b16 %v1423
        %v1456 = vunpack.c.l.b16 %v1424
        %v1457 = vunpack.c.l.b16 %v1425
        %v1458 = vunpack.c.l.b16 %v1426
        %v1459 = vunpack.c.l.b16 %v1427
        %v1460 = vunpack.c.l.b16 %v1428
        %v1461 = vunpack.c.l.b16 %v1429
        %v1462 = vpack.c.b16 %v1447, %v1446
        %v1463 = vpack.c.b16 %v1449, %v1448
        %v1464 = vpack.c.b16 %v1451, %v1450
        %v1465 = vpack.c.b16 %v1453, %v1452
        %v1466 = vpack.c.b16 %v1455, %v1454
        %v1467 = vpack.c.b16 %v1457, %v1456
        %v1468 = vpack.c.b16 %v1459, %v1458
        %v1469 = vpack.c.b16 %v1461, %v1460
        %1478 = vmatpush.bf16.msra.mxu0 %v1469
        %1479 = vmatpush.bf16.msra.mxu0 %v1468
        %1480 = vmatpush.bf16.msra.mxu0 %v1467
        %1481 = vmatpush.bf16.msra.mxu0 %v1466
        %1482 = vmatpush.bf16.msra.mxu0 %v1465
        %1483 = vmatpush.bf16.msra.mxu0 %v1464
        %1484 = vmatpush.bf16.msra.mxu0 %v1463
        %1485 = vmatpush.bf16.msra.mxu0 %v1462
        %1486 = vmatmul.bf16.gmra.mxu0 %v1398
        %v1487 = vpop.f32.mrf.mxu0
        %v1488 = vadd.f32 0.0, %v1487
        %v1489 = vpop.f32.mrf.mxu0
        %v1490 = vadd.f32 0.0, %v1489
        %1491 = vmatmul.bf16.gmra.mxu0 %v1399
        %v1492 = vpop.f32.mrf.mxu0
        %v1493 = vadd.f32 0.0, %v1492
        %v1494 = vpop.f32.mrf.mxu0
        %v1495 = vadd.f32 0.0, %v1494
        %1496 = vmatmul.bf16.gmra.mxu0 %v1400
        %v1497 = vpop.f32.mrf.mxu0
        %v1498 = vadd.f32 0.0, %v1497
        %v1499 = vpop.f32.mrf.mxu0
        %v1500 = vadd.f32 0.0, %v1499
        %1501 = vmatmul.bf16.gmra.mxu0 %v1401
        %v1502 = vpop.f32.mrf.mxu0
        %v1503 = vadd.f32 0.0, %v1502
        %v1504 = vpop.f32.mrf.mxu0
        %v1505 = vadd.f32 0.0, %v1504
        %1506 = vmatmul.bf16.gmra.mxu0 %v1402
        %v1507 = vpop.f32.mrf.mxu0
        %v1508 = vadd.f32 0.0, %v1507
        %v1509 = vpop.f32.mrf.mxu0
        %v1510 = vadd.f32 0.0, %v1509
        %1511 = vmatmul.bf16.gmra.mxu0 %v1403
        %v1512 = vpop.f32.mrf.mxu0
        %v1513 = vadd.f32 0.0, %v1512
        %v1514 = vpop.f32.mrf.mxu0
        %v1515 = vadd.f32 0.0, %v1514
        %1516 = vmatmul.bf16.gmra.mxu0 %v1404
        %v1517 = vpop.f32.mrf.mxu0
        %v1518 = vadd.f32 0.0, %v1517
        %v1519 = vpop.f32.mrf.mxu0
        %v1520 = vadd.f32 0.0, %v1519
        %1521 = vmatmul.bf16.gmra.mxu0 %v1405
        %v1522 = vpop.f32.mrf.mxu0
        %v1523 = vadd.f32 0.0, %v1522
        %v1524 = vpop.f32.mrf.mxu0
        %v1525 = vadd.f32 0.0, %v1524
        %1526 = vmatmul.bf16.gmra.mxu0 %v1406
        %v1527 = vpop.f32.mrf.mxu0
        %v1528 = vadd.f32 0.0, %v1527
        %v1529 = vpop.f32.mrf.mxu0
        %v1530 = vadd.f32 0.0, %v1529
        %1531 = vmatmul.bf16.gmra.mxu0 %v1407
        %v1532 = vpop.f32.mrf.mxu0
        %v1533 = vadd.f32 0.0, %v1532
        %v1534 = vpop.f32.mrf.mxu0
        %v1535 = vadd.f32 0.0, %v1534
        %1536 = vmatmul.bf16.gmra.mxu0 %v1408
        %v1537 = vpop.f32.mrf.mxu0
        %v1538 = vadd.f32 0.0, %v1537
        %v1539 = vpop.f32.mrf.mxu0
        %v1540 = vadd.f32 0.0, %v1539
        %1541 = vmatmul.bf16.gmra.mxu0 %v1409
        %v1542 = vpop.f32.mrf.mxu0
        %v1543 = vadd.f32 0.0, %v1542
        %v1544 = vpop.f32.mrf.mxu0
        %v1545 = vadd.f32 0.0, %v1544
        %1546 = vmatmul.bf16.gmra.mxu0 %v1410
        %v1547 = vpop.f32.mrf.mxu0
        %v1548 = vadd.f32 0.0, %v1547
        %v1549 = vpop.f32.mrf.mxu0
        %v1550 = vadd.f32 0.0, %v1549
        %1551 = vmatmul.bf16.gmra.mxu0 %v1411
        %v1552 = vpop.f32.mrf.mxu0
        %v1553 = vadd.f32 0.0, %v1552
        %v1554 = vpop.f32.mrf.mxu0
        %v1555 = vadd.f32 0.0, %v1554
        %1556 = vmatmul.bf16.gmra.mxu0 %v1412
        %v1557 = vpop.f32.mrf.mxu0
        %v1558 = vadd.f32 0.0, %v1557
        %v1559 = vpop.f32.mrf.mxu0
        %v1560 = vadd.f32 0.0, %v1559
        %1561 = vmatmul.bf16.gmra.mxu0 %v1413
        %v1562 = vpop.f32.mrf.mxu0
        %v1563 = vadd.f32 0.0, %v1562
        %v1564 = vpop.f32.mrf.mxu0
        %v1565 = vadd.f32 0.0, %v1564
        %1566 = vdwg.mxu0
        %1567 = vadd.xlane.f32.xlu0 %v1488
        %v1568 = vpop.xlane.xlu0 %1567
        %1569 = vadd.xlane.f32.xlu0 %v1490
        %v1570 = vpop.xlane.xlu0 %1569
        %1571 = vadd.xlane.f32.xlu0 %v1493
        %v1572 = vpop.xlane.xlu0 %1571
        %1573 = vadd.xlane.f32.xlu0 %v1495
        %v1574 = vpop.xlane.xlu0 %1573
        %1575 = vadd.xlane.f32.xlu0 %v1498
        %v1576 = vpop.xlane.xlu0 %1575
        %1577 = vadd.xlane.f32.xlu0 %v1500
        %v1578 = vpop.xlane.xlu0 %1577
        %1579 = vadd.xlane.f32.xlu0 %v1503
        %v1580 = vpop.xlane.xlu0 %1579
        %1581 = vadd.xlane.f32.xlu0 %v1505
        %v1582 = vpop.xlane.xlu0 %1581
        %1583 = vadd.xlane.f32.xlu0 %v1508
        %v1584 = vpop.xlane.xlu0 %1583
        %1585 = vadd.xlane.f32.xlu0 %v1510
        %v1586 = vpop.xlane.xlu0 %1585
        %1587 = vadd.xlane.f32.xlu0 %v1513
        %v1588 = vpop.xlane.xlu0 %1587
        %1589 = vadd.xlane.f32.xlu0 %v1515
        %v1590 = vpop.xlane.xlu0 %1589
        %1591 = vadd.xlane.f32.xlu0 %v1518
        %v1592 = vpop.xlane.xlu0 %1591
        %1593 = vadd.xlane.f32.xlu0 %v1520
        %v1594 = vpop.xlane.xlu0 %1593
        %1595 = vadd.xlane.f32.xlu0 %v1523
        %v1596 = vpop.xlane.xlu0 %1595
        %1597 = vadd.xlane.f32.xlu0 %v1525
        %v1598 = vpop.xlane.xlu0 %1597
        %1599 = vadd.xlane.f32.xlu0 %v1528
        %v1600 = vpop.xlane.xlu0 %1599
        %1601 = vadd.xlane.f32.xlu0 %v1530
        %v1602 = vpop.xlane.xlu0 %1601
        %1603 = vadd.xlane.f32.xlu0 %v1533
        %v1604 = vpop.xlane.xlu0 %1603
        %1605 = vadd.xlane.f32.xlu0 %v1535
        %v1606 = vpop.xlane.xlu0 %1605
        %1607 = vadd.xlane.f32.xlu0 %v1538
        %v1608 = vpop.xlane.xlu0 %1607
        %1609 = vadd.xlane.f32.xlu0 %v1540
        %v1610 = vpop.xlane.xlu0 %1609
        %1611 = vadd.xlane.f32.xlu0 %v1543
        %v1612 = vpop.xlane.xlu0 %1611
        %1613 = vadd.xlane.f32.xlu0 %v1545
        %v1614 = vpop.xlane.xlu0 %1613
        %1615 = vadd.xlane.f32.xlu0 %v1548
        %v1616 = vpop.xlane.xlu0 %1615
        %1617 = vadd.xlane.f32.xlu0 %v1550
        %v1618 = vpop.xlane.xlu0 %1617
        %1619 = vadd.xlane.f32.xlu0 %v1553
        %v1620 = vpop.xlane.xlu0 %1619
        %1621 = vadd.xlane.f32.xlu0 %v1555
        %v1622 = vpop.xlane.xlu0 %1621
        %1623 = vadd.xlane.f32.xlu0 %v1558
        %v1624 = vpop.xlane.xlu0 %1623
        %1625 = vadd.xlane.f32.xlu0 %v1560
        %v1626 = vpop.xlane.xlu0 %1625
        %1627 = vadd.xlane.f32.xlu0 %v1563
        %v1628 = vpop.xlane.xlu0 %1627
        %1629 = vadd.xlane.f32.xlu0 %v1565
        %v1630 = vpop.xlane.xlu0 %1629
        %v1631 = vmul.f32 %v1568, 0.015625
        %v1632 = vmul.f32 %v1570, 0.015625
        %v1633 = vmul.f32 %v1572, 0.015625
        %v1634 = vmul.f32 %v1574, 0.015625
        %v1635 = vmul.f32 %v1576, 0.015625
        %v1636 = vmul.f32 %v1578, 0.015625
        %v1637 = vmul.f32 %v1580, 0.015625
        %v1638 = vmul.f32 %v1582, 0.015625
        %v1639 = vmul.f32 %v1584, 0.015625
        %v1640 = vmul.f32 %v1586, 0.015625
        %v1641 = vmul.f32 %v1588, 0.015625
        %v1642 = vmul.f32 %v1590, 0.015625
        %v1643 = vmul.f32 %v1592, 0.015625
        %v1644 = vmul.f32 %v1594, 0.015625
        %v1645 = vmul.f32 %v1596, 0.015625
        %v1646 = vmul.f32 %v1598, 0.015625
        %v1647 = vmul.f32 %v1600, 0.015625
        %v1648 = vmul.f32 %v1602, 0.015625
        %v1649 = vmul.f32 %v1604, 0.015625
        %v1650 = vmul.f32 %v1606, 0.015625
        %v1651 = vmul.f32 %v1608, 0.015625
        %v1652 = vmul.f32 %v1610, 0.015625
        %v1653 = vmul.f32 %v1612, 0.015625
        %v1654 = vmul.f32 %v1614, 0.015625
        %v1655 = vmul.f32 %v1616, 0.015625
        %v1656 = vmul.f32 %v1618, 0.015625
        %v1657 = vmul.f32 %v1620, 0.015625
        %v1658 = vmul.f32 %v1622, 0.015625
        %v1659 = vmul.f32 %v1624, 0.015625
        %v1660 = vmul.f32 %v1626, 0.015625
        %v1661 = vmul.f32 %v1628, 0.015625
        %v1662 = vmul.f32 %v1630, 0.015625
        %v1663 = vsub.f32 %v1488, %v1631
        %v1664 = vsub.f32 %v1490, %v1632
        %v1665 = vsub.f32 %v1493, %v1633
        %v1666 = vsub.f32 %v1495, %v1634
        %v1667 = vsub.f32 %v1498, %v1635
        %v1668 = vsub.f32 %v1500, %v1636
        %v1669 = vsub.f32 %v1503, %v1637
        %v1670 = vsub.f32 %v1505, %v1638
        %v1671 = vsub.f32 %v1508, %v1639
        %v1672 = vsub.f32 %v1510, %v1640
        %v1673 = vsub.f32 %v1513, %v1641
        %v1674 = vsub.f32 %v1515, %v1642
        %v1675 = vsub.f32 %v1518, %v1643
        %v1676 = vsub.f32 %v1520, %v1644
        %v1677 = vsub.f32 %v1523, %v1645
        %v1678 = vsub.f32 %v1525, %v1646
        %v1679 = vsub.f32 %v1528, %v1647
        %v1680 = vsub.f32 %v1530, %v1648
        %v1681 = vsub.f32 %v1533, %v1649
        %v1682 = vsub.f32 %v1535, %v1650
        %v1683 = vsub.f32 %v1538, %v1651
        %v1684 = vsub.f32 %v1540, %v1652
        %v1685 = vsub.f32 %v1543, %v1653
        %v1686 = vsub.f32 %v1545, %v1654
        %v1687 = vsub.f32 %v1548, %v1655
        %v1688 = vsub.f32 %v1550, %v1656
        %v1689 = vsub.f32 %v1553, %v1657
        %v1690 = vsub.f32 %v1555, %v1658
        %v1691 = vsub.f32 %v1558, %v1659
        %v1692 = vsub.f32 %v1560, %v1660
        %v1693 = vsub.f32 %v1563, %v1661
        %v1694 = vsub.f32 %v1565, %v1662
        %v1695 = vmul.f32 %v1663, %v1663
        %v1696 = vmul.f32 %v1664, %v1664
        %v1697 = vmul.f32 %v1665, %v1665
        %v1698 = vmul.f32 %v1666, %v1666
        %v1699 = vmul.f32 %v1667, %v1667
        %v1700 = vmul.f32 %v1668, %v1668
        %v1701 = vmul.f32 %v1669, %v1669
        %v1702 = vmul.f32 %v1670, %v1670
        %v1703 = vmul.f32 %v1671, %v1671
        %v1704 = vmul.f32 %v1672, %v1672
        %v1705 = vmul.f32 %v1673, %v1673
        %v1706 = vmul.f32 %v1674, %v1674
        %v1707 = vmul.f32 %v1675, %v1675
        %v1708 = vmul.f32 %v1676, %v1676
        %v1709 = vmul.f32 %v1677, %v1677
        %v1710 = vmul.f32 %v1678, %v1678
        %v1711 = vmul.f32 %v1679, %v1679
        %v1712 = vmul.f32 %v1680, %v1680
        %v1713 = vmul.f32 %v1681, %v1681
        %v1714 = vmul.f32 %v1682, %v1682
        %v1715 = vmul.f32 %v1683, %v1683
        %v1716 = vmul.f32 %v1684, %v1684
        %v1717 = vmul.f32 %v1685, %v1685
        %v1718 = vmul.f32 %v1686, %v1686
        %v1719 = vmul.f32 %v1687, %v1687
        %v1720 = vmul.f32 %v1688, %v1688
        %v1721 = vmul.f32 %v1689, %v1689
        %v1722 = vmul.f32 %v1690, %v1690
        %v1723 = vmul.f32 %v1691, %v1691
        %v1724 = vmul.f32 %v1692, %v1692
        %v1725 = vmul.f32 %v1693, %v1693
        %v1726 = vmul.f32 %v1694, %v1694
        %v1727 = vsel %vm783, %v1695, 0.0
        %v1728 = vsel %vm783, %v1696, 0.0
        %v1729 = vsel %vm783, %v1697, 0.0
        %v1730 = vsel %vm783, %v1698, 0.0
        %v1731 = vsel %vm783, %v1699, 0.0
        %v1732 = vsel %vm783, %v1700, 0.0
        %v1733 = vsel %vm783, %v1701, 0.0
        %v1734 = vsel %vm783, %v1702, 0.0
        %v1735 = vsel %vm783, %v1703, 0.0
        %v1736 = vsel %vm783, %v1704, 0.0
        %v1737 = vsel %vm783, %v1705, 0.0
        %v1738 = vsel %vm783, %v1706, 0.0
        %v1739 = vsel %vm783, %v1707, 0.0
        %v1740 = vsel %vm783, %v1708, 0.0
        %v1741 = vsel %vm783, %v1709, 0.0
        %v1742 = vsel %vm783, %v1710, 0.0
        %v1743 = vsel %vm783, %v1711, 0.0
        %v1744 = vsel %vm783, %v1712, 0.0
        %v1745 = vsel %vm783, %v1713, 0.0
        %v1746 = vsel %vm783, %v1714, 0.0
        %v1747 = vsel %vm783, %v1715, 0.0
        %v1748 = vsel %vm783, %v1716, 0.0
        %v1749 = vsel %vm783, %v1717, 0.0
        %v1750 = vsel %vm783, %v1718, 0.0
        %v1751 = vsel %vm783, %v1719, 0.0
        %v1752 = vsel %vm783, %v1720, 0.0
        %v1753 = vsel %vm783, %v1721, 0.0
        %v1754 = vsel %vm783, %v1722, 0.0
        %v1755 = vsel %vm783, %v1723, 0.0
        %v1756 = vsel %vm783, %v1724, 0.0
        %v1757 = vsel %vm783, %v1725, 0.0
        %v1758 = vsel %vm783, %v1726, 0.0
        %1759 = vadd.xlane.f32.xlu0 %v1727
        %v1760 = vpop.xlane.xlu0 %1759
        %1761 = vadd.xlane.f32.xlu0 %v1728
        %v1762 = vpop.xlane.xlu0 %1761
        %1763 = vadd.xlane.f32.xlu0 %v1729
        %v1764 = vpop.xlane.xlu0 %1763
        %1765 = vadd.xlane.f32.xlu0 %v1730
        %v1766 = vpop.xlane.xlu0 %1765
        %1767 = vadd.xlane.f32.xlu0 %v1731
        %v1768 = vpop.xlane.xlu0 %1767
        %1769 = vadd.xlane.f32.xlu0 %v1732
        %v1770 = vpop.xlane.xlu0 %1769
        %1771 = vadd.xlane.f32.xlu0 %v1733
        %v1772 = vpop.xlane.xlu0 %1771
        %1773 = vadd.xlane.f32.xlu0 %v1734
        %v1774 = vpop.xlane.xlu0 %1773
        %1775 = vadd.xlane.f32.xlu0 %v1735
        %v1776 = vpop.xlane.xlu0 %1775
        %1777 = vadd.xlane.f32.xlu0 %v1736
        %v1778 = vpop.xlane.xlu0 %1777
        %1779 = vadd.xlane.f32.xlu0 %v1737
        %v1780 = vpop.xlane.xlu0 %1779
        %1781 = vadd.xlane.f32.xlu0 %v1738
        %v1782 = vpop.xlane.xlu0 %1781
        %1783 = vadd.xlane.f32.xlu0 %v1739
        %v1784 = vpop.xlane.xlu0 %1783
        %1785 = vadd.xlane.f32.xlu0 %v1740
        %v1786 = vpop.xlane.xlu0 %1785
        %1787 = vadd.xlane.f32.xlu0 %v1741
        %v1788 = vpop.xlane.xlu0 %1787
        %1789 = vadd.xlane.f32.xlu0 %v1742
        %v1790 = vpop.xlane.xlu0 %1789
        %1791 = vadd.xlane.f32.xlu0 %v1743
        %v1792 = vpop.xlane.xlu0 %1791
        %1793 = vadd.xlane.f32.xlu0 %v1744
        %v1794 = vpop.xlane.xlu0 %1793
        %1795 = vadd.xlane.f32.xlu0 %v1745
        %v1796 = vpop.xlane.xlu0 %1795
        %1797 = vadd.xlane.f32.xlu0 %v1746
        %v1798 = vpop.xlane.xlu0 %1797
        %1799 = vadd.xlane.f32.xlu0 %v1747
        %v1800 = vpop.xlane.xlu0 %1799
        %1801 = vadd.xlane.f32.xlu0 %v1748
        %v1802 = vpop.xlane.xlu0 %1801
        %1803 = vadd.xlane.f32.xlu0 %v1749
        %v1804 = vpop.xlane.xlu0 %1803
        %1805 = vadd.xlane.f32.xlu0 %v1750
        %v1806 = vpop.xlane.xlu0 %1805
        %1807 = vadd.xlane.f32.xlu0 %v1751
        %v1808 = vpop.xlane.xlu0 %1807
        %1809 = vadd.xlane.f32.xlu0 %v1752
        %v1810 = vpop.xlane.xlu0 %1809
        %1811 = vadd.xlane.f32.xlu0 %v1753
        %v1812 = vpop.xlane.xlu0 %1811
        %1813 = vadd.xlane.f32.xlu0 %v1754
        %v1814 = vpop.xlane.xlu0 %1813
        %1815 = vadd.xlane.f32.xlu0 %v1755
        %v1816 = vpop.xlane.xlu0 %1815
        %1817 = vadd.xlane.f32.xlu0 %v1756
        %v1818 = vpop.xlane.xlu0 %1817
        %1819 = vadd.xlane.f32.xlu0 %v1757
        %v1820 = vpop.xlane.xlu0 %1819
        %1821 = vadd.xlane.f32.xlu0 %v1758
        %v1822 = vpop.xlane.xlu0 %1821
        %v1823 = vmul.f32 %v1760, 0.015625
        %v1824 = vmul.f32 %v1762, 0.015625
        %v1825 = vmul.f32 %v1764, 0.015625
        %v1826 = vmul.f32 %v1766, 0.015625
        %v1827 = vmul.f32 %v1768, 0.015625
        %v1828 = vmul.f32 %v1770, 0.015625
        %v1829 = vmul.f32 %v1772, 0.015625
        %v1830 = vmul.f32 %v1774, 0.015625
        %v1831 = vmul.f32 %v1776, 0.015625
        %v1832 = vmul.f32 %v1778, 0.015625
        %v1833 = vmul.f32 %v1780, 0.015625
        %v1834 = vmul.f32 %v1782, 0.015625
        %v1835 = vmul.f32 %v1784, 0.015625
        %v1836 = vmul.f32 %v1786, 0.015625
        %v1837 = vmul.f32 %v1788, 0.015625
        %v1838 = vmul.f32 %v1790, 0.015625
        %v1839 = vmul.f32 %v1792, 0.015625
        %v1840 = vmul.f32 %v1794, 0.015625
        %v1841 = vmul.f32 %v1796, 0.015625
        %v1842 = vmul.f32 %v1798, 0.015625
        %v1843 = vmul.f32 %v1800, 0.015625
        %v1844 = vmul.f32 %v1802, 0.015625
        %v1845 = vmul.f32 %v1804, 0.015625
        %v1846 = vmul.f32 %v1806, 0.015625
        %v1847 = vmul.f32 %v1808, 0.015625
        %v1848 = vmul.f32 %v1810, 0.015625
        %v1849 = vmul.f32 %v1812, 0.015625
        %v1850 = vmul.f32 %v1814, 0.015625
        %v1851 = vmul.f32 %v1816, 0.015625
        %v1852 = vmul.f32 %v1818, 0.015625
        %v1853 = vmul.f32 %v1820, 0.015625
        %v1854 = vmul.f32 %v1822, 0.015625
        %v1855 = vadd.f32 %v1823, 1e-05
        %v1856 = vadd.f32 %v1824, 1e-05
        %v1857 = vadd.f32 %v1825, 1e-05
        %v1858 = vadd.f32 %v1826, 1e-05
        %v1859 = vadd.f32 %v1827, 1e-05
        %v1860 = vadd.f32 %v1828, 1e-05
        %v1861 = vadd.f32 %v1829, 1e-05
        %v1862 = vadd.f32 %v1830, 1e-05
        %v1863 = vadd.f32 %v1831, 1e-05
        %v1864 = vadd.f32 %v1832, 1e-05
        %v1865 = vadd.f32 %v1833, 1e-05
        %v1866 = vadd.f32 %v1834, 1e-05
        %v1867 = vadd.f32 %v1835, 1e-05
        %v1868 = vadd.f32 %v1836, 1e-05
        %v1869 = vadd.f32 %v1837, 1e-05
        %v1870 = vadd.f32 %v1838, 1e-05
        %v1871 = vadd.f32 %v1839, 1e-05
        %v1872 = vadd.f32 %v1840, 1e-05
        %v1873 = vadd.f32 %v1841, 1e-05
        %v1874 = vadd.f32 %v1842, 1e-05
        %v1875 = vadd.f32 %v1843, 1e-05
        %v1876 = vadd.f32 %v1844, 1e-05
        %v1877 = vadd.f32 %v1845, 1e-05
        %v1878 = vadd.f32 %v1846, 1e-05
        %v1879 = vadd.f32 %v1847, 1e-05
        %v1880 = vadd.f32 %v1848, 1e-05
        %v1881 = vadd.f32 %v1849, 1e-05
        %v1882 = vadd.f32 %v1850, 1e-05
        %v1883 = vadd.f32 %v1851, 1e-05
        %v1884 = vadd.f32 %v1852, 1e-05
        %v1885 = vadd.f32 %v1853, 1e-05
        %v1886 = vadd.f32 %v1854, 1e-05
        %v1887 = vrsqrt.pop %v1855
        %v1888 = vmul.f32 %v1887, %v1855
        %v1889 = vmul.f32 %v1888, %v1887
        %v1890 = vmul.f32 0.5, %v1889
        %v1891 = vsub.f32 1.5, %v1890
        %v1892 = vmul.f32 %v1887, %v1891
        %vm1893 = vweird.f32 %v1855
        %vm1894 = vweird.f32 %v1887
        %vm1895 = vmor %vm1893, %vm1894
        %v1896 = vsel %vm1895, %v1887, %v1892
        %v1897 = vrsqrt.pop %v1856
        %v1898 = vmul.f32 %v1897, %v1856
        %v1899 = vmul.f32 %v1898, %v1897
        %v1900 = vmul.f32 0.5, %v1899
        %v1901 = vsub.f32 1.5, %v1900
        %v1902 = vmul.f32 %v1897, %v1901
        %vm1903 = vweird.f32 %v1856
        %vm1904 = vweird.f32 %v1897
        %vm1905 = vmor %vm1903, %vm1904
        %v1906 = vsel %vm1905, %v1897, %v1902
        %v1907 = vrsqrt.pop %v1857
        %v1908 = vmul.f32 %v1907, %v1857
        %v1909 = vmul.f32 %v1908, %v1907
        %v1910 = vmul.f32 0.5, %v1909
        %v1911 = vsub.f32 1.5, %v1910
        %v1912 = vmul.f32 %v1907, %v1911
        %vm1913 = vweird.f32 %v1857
        %vm1914 = vweird.f32 %v1907
        %vm1915 = vmor %vm1913, %vm1914
        %v1916 = vsel %vm1915, %v1907, %v1912
        %v1917 = vrsqrt.pop %v1858
        %v1918 = vmul.f32 %v1917, %v1858
        %v1919 = vmul.f32 %v1918, %v1917
        %v1920 = vmul.f32 0.5, %v1919
        %v1921 = vsub.f32 1.5, %v1920
        %v1922 = vmul.f32 %v1917, %v1921
        %vm1923 = vweird.f32 %v1858
        %vm1924 = vweird.f32 %v1917
        %vm1925 = vmor %vm1923, %vm1924
        %v1926 = vsel %vm1925, %v1917, %v1922
        %v1927 = vrsqrt.pop %v1859
        %v1928 = vmul.f32 %v1927, %v1859
        %v1929 = vmul.f32 %v1928, %v1927
        %v1930 = vmul.f32 0.5, %v1929
        %v1931 = vsub.f32 1.5, %v1930
        %v1932 = vmul.f32 %v1927, %v1931
        %vm1933 = vweird.f32 %v1859
        %vm1934 = vweird.f32 %v1927
        %vm1935 = vmor %vm1933, %vm1934
        %v1936 = vsel %vm1935, %v1927, %v1932
        %v1937 = vrsqrt.pop %v1860
        %v1938 = vmul.f32 %v1937, %v1860
        %v1939 = vmul.f32 %v1938, %v1937
        %v1940 = vmul.f32 0.5, %v1939
        %v1941 = vsub.f32 1.5, %v1940
        %v1942 = vmul.f32 %v1937, %v1941
        %vm1943 = vweird.f32 %v1860
        %vm1944 = vweird.f32 %v1937
        %vm1945 = vmor %vm1943, %vm1944
        %v1946 = vsel %vm1945, %v1937, %v1942
        %v1947 = vrsqrt.pop %v1861
        %v1948 = vmul.f32 %v1947, %v1861
        %v1949 = vmul.f32 %v1948, %v1947
        %v1950 = vmul.f32 0.5, %v1949
        %v1951 = vsub.f32 1.5, %v1950
        %v1952 = vmul.f32 %v1947, %v1951
        %vm1953 = vweird.f32 %v1861
        %vm1954 = vweird.f32 %v1947
        %vm1955 = vmor %vm1953, %vm1954
        %v1956 = vsel %vm1955, %v1947, %v1952
        %v1957 = vrsqrt.pop %v1862
        %v1958 = vmul.f32 %v1957, %v1862
        %v1959 = vmul.f32 %v1958, %v1957
        %v1960 = vmul.f32 0.5, %v1959
        %v1961 = vsub.f32 1.5, %v1960
        %v1962 = vmul.f32 %v1957, %v1961
        %vm1963 = vweird.f32 %v1862
        %vm1964 = vweird.f32 %v1957
        %vm1965 = vmor %vm1963, %vm1964
        %v1966 = vsel %vm1965, %v1957, %v1962
        %v1967 = vrsqrt.pop %v1863
        %v1968 = vmul.f32 %v1967, %v1863
        %v1969 = vmul.f32 %v1968, %v1967
        %v1970 = vmul.f32 0.5, %v1969
        %v1971 = vsub.f32 1.5, %v1970
        %v1972 = vmul.f32 %v1967, %v1971
        %vm1973 = vweird.f32 %v1863
        %vm1974 = vweird.f32 %v1967
        %vm1975 = vmor %vm1973, %vm1974
        %v1976 = vsel %vm1975, %v1967, %v1972
        %v1977 = vrsqrt.pop %v1864
        %v1978 = vmul.f32 %v1977, %v1864
        %v1979 = vmul.f32 %v1978, %v1977
        %v1980 = vmul.f32 0.5, %v1979
        %v1981 = vsub.f32 1.5, %v1980
        %v1982 = vmul.f32 %v1977, %v1981
        %vm1983 = vweird.f32 %v1864
        %vm1984 = vweird.f32 %v1977
        %vm1985 = vmor %vm1983, %vm1984
        %v1986 = vsel %vm1985, %v1977, %v1982
        %v1987 = vrsqrt.pop %v1865
        %v1988 = vmul.f32 %v1987, %v1865
        %v1989 = vmul.f32 %v1988, %v1987
        %v1990 = vmul.f32 0.5, %v1989
        %v1991 = vsub.f32 1.5, %v1990
        %v1992 = vmul.f32 %v1987, %v1991
        %vm1993 = vweird.f32 %v1865
        %vm1994 = vweird.f32 %v1987
        %vm1995 = vmor %vm1993, %vm1994
        %v1996 = vsel %vm1995, %v1987, %v1992
        %v1997 = vrsqrt.pop %v1866
        %v1998 = vmul.f32 %v1997, %v1866
        %v1999 = vmul.f32 %v1998, %v1997
        %v2000 = vmul.f32 0.5, %v1999
        %v2001 = vsub.f32 1.5, %v2000
        %v2002 = vmul.f32 %v1997, %v2001
        %vm2003 = vweird.f32 %v1866
        %vm2004 = vweird.f32 %v1997
        %vm2005 = vmor %vm2003, %vm2004
        %v2006 = vsel %vm2005, %v1997, %v2002
        %v2007 = vrsqrt.pop %v1867
        %v2008 = vmul.f32 %v2007, %v1867
        %v2009 = vmul.f32 %v2008, %v2007
        %v2010 = vmul.f32 0.5, %v2009
        %v2011 = vsub.f32 1.5, %v2010
        %v2012 = vmul.f32 %v2007, %v2011
        %vm2013 = vweird.f32 %v1867
        %vm2014 = vweird.f32 %v2007
        %vm2015 = vmor %vm2013, %vm2014
        %v2016 = vsel %vm2015, %v2007, %v2012
        %v2017 = vrsqrt.pop %v1868
        %v2018 = vmul.f32 %v2017, %v1868
        %v2019 = vmul.f32 %v2018, %v2017
        %v2020 = vmul.f32 0.5, %v2019
        %v2021 = vsub.f32 1.5, %v2020
        %v2022 = vmul.f32 %v2017, %v2021
        %vm2023 = vweird.f32 %v1868
        %vm2024 = vweird.f32 %v2017
        %vm2025 = vmor %vm2023, %vm2024
        %v2026 = vsel %vm2025, %v2017, %v2022
        %v2027 = vrsqrt.pop %v1869
        %v2028 = vmul.f32 %v2027, %v1869
        %v2029 = vmul.f32 %v2028, %v2027
        %v2030 = vmul.f32 0.5, %v2029
        %v2031 = vsub.f32 1.5, %v2030
        %v2032 = vmul.f32 %v2027, %v2031
        %vm2033 = vweird.f32 %v1869
        %vm2034 = vweird.f32 %v2027
        %vm2035 = vmor %vm2033, %vm2034
        %v2036 = vsel %vm2035, %v2027, %v2032
        %v2037 = vrsqrt.pop %v1870
        %v2038 = vmul.f32 %v2037, %v1870
        %v2039 = vmul.f32 %v2038, %v2037
        %v2040 = vmul.f32 0.5, %v2039
        %v2041 = vsub.f32 1.5, %v2040
        %v2042 = vmul.f32 %v2037, %v2041
        %vm2043 = vweird.f32 %v1870
        %vm2044 = vweird.f32 %v2037
        %vm2045 = vmor %vm2043, %vm2044
        %v2046 = vsel %vm2045, %v2037, %v2042
        %v2047 = vrsqrt.pop %v1871
        %v2048 = vmul.f32 %v2047, %v1871
        %v2049 = vmul.f32 %v2048, %v2047
        %v2050 = vmul.f32 0.5, %v2049
        %v2051 = vsub.f32 1.5, %v2050
        %v2052 = vmul.f32 %v2047, %v2051
        %vm2053 = vweird.f32 %v1871
        %vm2054 = vweird.f32 %v2047
        %vm2055 = vmor %vm2053, %vm2054
        %v2056 = vsel %vm2055, %v2047, %v2052
        %v2057 = vrsqrt.pop %v1872
        %v2058 = vmul.f32 %v2057, %v1872
        %v2059 = vmul.f32 %v2058, %v2057
        %v2060 = vmul.f32 0.5, %v2059
        %v2061 = vsub.f32 1.5, %v2060
        %v2062 = vmul.f32 %v2057, %v2061
        %vm2063 = vweird.f32 %v1872
        %vm2064 = vweird.f32 %v2057
        %vm2065 = vmor %vm2063, %vm2064
        %v2066 = vsel %vm2065, %v2057, %v2062
        %v2067 = vrsqrt.pop %v1873
        %v2068 = vmul.f32 %v2067, %v1873
        %v2069 = vmul.f32 %v2068, %v2067
        %v2070 = vmul.f32 0.5, %v2069
        %v2071 = vsub.f32 1.5, %v2070
        %v2072 = vmul.f32 %v2067, %v2071
        %vm2073 = vweird.f32 %v1873
        %vm2074 = vweird.f32 %v2067
        %vm2075 = vmor %vm2073, %vm2074
        %v2076 = vsel %vm2075, %v2067, %v2072
        %v2077 = vrsqrt.pop %v1874
        %v2078 = vmul.f32 %v2077, %v1874
        %v2079 = vmul.f32 %v2078, %v2077
        %v2080 = vmul.f32 0.5, %v2079
        %v2081 = vsub.f32 1.5, %v2080
        %v2082 = vmul.f32 %v2077, %v2081
        %vm2083 = vweird.f32 %v1874
        %vm2084 = vweird.f32 %v2077
        %vm2085 = vmor %vm2083, %vm2084
        %v2086 = vsel %vm2085, %v2077, %v2082
        %v2087 = vrsqrt.pop %v1875
        %v2088 = vmul.f32 %v2087, %v1875
        %v2089 = vmul.f32 %v2088, %v2087
        %v2090 = vmul.f32 0.5, %v2089
        %v2091 = vsub.f32 1.5, %v2090
        %v2092 = vmul.f32 %v2087, %v2091
        %vm2093 = vweird.f32 %v1875
        %vm2094 = vweird.f32 %v2087
        %vm2095 = vmor %vm2093, %vm2094
        %v2096 = vsel %vm2095, %v2087, %v2092
        %v2097 = vrsqrt.pop %v1876
        %v2098 = vmul.f32 %v2097, %v1876
        %v2099 = vmul.f32 %v2098, %v2097
        %v2100 = vmul.f32 0.5, %v2099
        %v2101 = vsub.f32 1.5, %v2100
        %v2102 = vmul.f32 %v2097, %v2101
        %vm2103 = vweird.f32 %v1876
        %vm2104 = vweird.f32 %v2097
        %vm2105 = vmor %vm2103, %vm2104
        %v2106 = vsel %vm2105, %v2097, %v2102
        %v2107 = vrsqrt.pop %v1877
        %v2108 = vmul.f32 %v2107, %v1877
        %v2109 = vmul.f32 %v2108, %v2107
        %v2110 = vmul.f32 0.5, %v2109
        %v2111 = vsub.f32 1.5, %v2110
        %v2112 = vmul.f32 %v2107, %v2111
        %vm2113 = vweird.f32 %v1877
        %vm2114 = vweird.f32 %v2107
        %vm2115 = vmor %vm2113, %vm2114
        %v2116 = vsel %vm2115, %v2107, %v2112
        %v2117 = vrsqrt.pop %v1878
        %v2118 = vmul.f32 %v2117, %v1878
        %v2119 = vmul.f32 %v2118, %v2117
        %v2120 = vmul.f32 0.5, %v2119
        %v2121 = vsub.f32 1.5, %v2120
        %v2122 = vmul.f32 %v2117, %v2121
        %vm2123 = vweird.f32 %v1878
        %vm2124 = vweird.f32 %v2117
        %vm2125 = vmor %vm2123, %vm2124
        %v2126 = vsel %vm2125, %v2117, %v2122
        %v2127 = vrsqrt.pop %v1879
        %v2128 = vmul.f32 %v2127, %v1879
        %v2129 = vmul.f32 %v2128, %v2127
        %v2130 = vmul.f32 0.5, %v2129
        %v2131 = vsub.f32 1.5, %v2130
        %v2132 = vmul.f32 %v2127, %v2131
        %vm2133 = vweird.f32 %v1879
        %vm2134 = vweird.f32 %v2127
        %vm2135 = vmor %vm2133, %vm2134
        %v2136 = vsel %vm2135, %v2127, %v2132
        %v2137 = vrsqrt.pop %v1880
        %v2138 = vmul.f32 %v2137, %v1880
        %v2139 = vmul.f32 %v2138, %v2137
        %v2140 = vmul.f32 0.5, %v2139
        %v2141 = vsub.f32 1.5, %v2140
        %v2142 = vmul.f32 %v2137, %v2141
        %vm2143 = vweird.f32 %v1880
        %vm2144 = vweird.f32 %v2137
        %vm2145 = vmor %vm2143, %vm2144
        %v2146 = vsel %vm2145, %v2137, %v2142
        %v2147 = vrsqrt.pop %v1881
        %v2148 = vmul.f32 %v2147, %v1881
        %v2149 = vmul.f32 %v2148, %v2147
        %v2150 = vmul.f32 0.5, %v2149
        %v2151 = vsub.f32 1.5, %v2150
        %v2152 = vmul.f32 %v2147, %v2151
        %vm2153 = vweird.f32 %v1881
        %vm2154 = vweird.f32 %v2147
        %vm2155 = vmor %vm2153, %vm2154
        %v2156 = vsel %vm2155, %v2147, %v2152
        %v2157 = vrsqrt.pop %v1882
        %v2158 = vmul.f32 %v2157, %v1882
        %v2159 = vmul.f32 %v2158, %v2157
        %v2160 = vmul.f32 0.5, %v2159
        %v2161 = vsub.f32 1.5, %v2160
        %v2162 = vmul.f32 %v2157, %v2161
        %vm2163 = vweird.f32 %v1882
        %vm2164 = vweird.f32 %v2157
        %vm2165 = vmor %vm2163, %vm2164
        %v2166 = vsel %vm2165, %v2157, %v2162
        %v2167 = vrsqrt.pop %v1883
        %v2168 = vmul.f32 %v2167, %v1883
        %v2169 = vmul.f32 %v2168, %v2167
        %v2170 = vmul.f32 0.5, %v2169
        %v2171 = vsub.f32 1.5, %v2170
        %v2172 = vmul.f32 %v2167, %v2171
        %vm2173 = vweird.f32 %v1883
        %vm2174 = vweird.f32 %v2167
        %vm2175 = vmor %vm2173, %vm2174
        %v2176 = vsel %vm2175, %v2167, %v2172
        %v2177 = vrsqrt.pop %v1884
        %v2178 = vmul.f32 %v2177, %v1884
        %v2179 = vmul.f32 %v2178, %v2177
        %v2180 = vmul.f32 0.5, %v2179
        %v2181 = vsub.f32 1.5, %v2180
        %v2182 = vmul.f32 %v2177, %v2181
        %vm2183 = vweird.f32 %v1884
        %vm2184 = vweird.f32 %v2177
        %vm2185 = vmor %vm2183, %vm2184
        %v2186 = vsel %vm2185, %v2177, %v2182
        %v2187 = vrsqrt.pop %v1885
        %v2188 = vmul.f32 %v2187, %v1885
        %v2189 = vmul.f32 %v2188, %v2187
        %v2190 = vmul.f32 0.5, %v2189
        %v2191 = vsub.f32 1.5, %v2190
        %v2192 = vmul.f32 %v2187, %v2191
        %vm2193 = vweird.f32 %v1885
        %vm2194 = vweird.f32 %v2187
        %vm2195 = vmor %vm2193, %vm2194
        %v2196 = vsel %vm2195, %v2187, %v2192
        %v2197 = vrsqrt.pop %v1886
        %v2198 = vmul.f32 %v2197, %v1886
        %v2199 = vmul.f32 %v2198, %v2197
        %v2200 = vmul.f32 0.5, %v2199
        %v2201 = vsub.f32 1.5, %v2200
        %v2202 = vmul.f32 %v2197, %v2201
        %vm2203 = vweird.f32 %v1886
        %vm2204 = vweird.f32 %v2197
        %vm2205 = vmor %vm2203, %vm2204
        %v2206 = vsel %vm2205, %v2197, %v2202
        %v2207 = vmul.f32 %v1663, %v1896
        %v2208 = vmul.f32 %v1664, %v1906
        %v2209 = vmul.f32 %v1665, %v1916
        %v2210 = vmul.f32 %v1666, %v1926
        %v2211 = vmul.f32 %v1667, %v1936
        %v2212 = vmul.f32 %v1668, %v1946
        %v2213 = vmul.f32 %v1669, %v1956
        %v2214 = vmul.f32 %v1670, %v1966
        %v2215 = vmul.f32 %v1671, %v1976
        %v2216 = vmul.f32 %v1672, %v1986
        %v2217 = vmul.f32 %v1673, %v1996
        %v2218 = vmul.f32 %v1674, %v2006
        %v2219 = vmul.f32 %v1675, %v2016
        %v2220 = vmul.f32 %v1676, %v2026
        %v2221 = vmul.f32 %v1677, %v2036
        %v2222 = vmul.f32 %v1678, %v2046
        %v2223 = vmul.f32 %v1679, %v2056
        %v2224 = vmul.f32 %v1680, %v2066
        %v2225 = vmul.f32 %v1681, %v2076
        %v2226 = vmul.f32 %v1682, %v2086
        %v2227 = vmul.f32 %v1683, %v2096
        %v2228 = vmul.f32 %v1684, %v2106
        %v2229 = vmul.f32 %v1685, %v2116
        %v2230 = vmul.f32 %v1686, %v2126
        %v2231 = vmul.f32 %v1687, %v2136
        %v2232 = vmul.f32 %v1688, %v2146
        %v2233 = vmul.f32 %v1689, %v2156
        %v2234 = vmul.f32 %v1690, %v2166
        %v2235 = vmul.f32 %v1691, %v2176
        %v2236 = vmul.f32 %v1692, %v2186
        %v2237 = vmul.f32 %v1693, %v2196
        %v2238 = vmul.f32 %v1694, %v2206
        %v2240 = vperm.slane %v336, 0
        %v2242 = vmul.f32 %v2207, %v2240
        %v2243 = vmul.f32 %v2208, %v2240
        %v2244 = vmul.f32 %v2209, %v2240
        %v2245 = vmul.f32 %v2210, %v2240
        %v2246 = vmul.f32 %v2211, %v2240
        %v2247 = vmul.f32 %v2212, %v2240
        %v2248 = vmul.f32 %v2213, %v2240
        %v2249 = vmul.f32 %v2214, %v2240
        %v2250 = vmul.f32 %v2215, %v2240
        %v2251 = vmul.f32 %v2216, %v2240
        %v2252 = vmul.f32 %v2217, %v2240
        %v2253 = vmul.f32 %v2218, %v2240
        %v2254 = vmul.f32 %v2219, %v2240
        %v2255 = vmul.f32 %v2220, %v2240
        %v2256 = vmul.f32 %v2221, %v2240
        %v2257 = vmul.f32 %v2222, %v2240
        %v2258 = vmul.f32 %v2223, %v2240
        %v2259 = vmul.f32 %v2224, %v2240
        %v2260 = vmul.f32 %v2225, %v2240
        %v2261 = vmul.f32 %v2226, %v2240
        %v2262 = vmul.f32 %v2227, %v2240
        %v2263 = vmul.f32 %v2228, %v2240
        %v2264 = vmul.f32 %v2229, %v2240
        %v2265 = vmul.f32 %v2230, %v2240
        %v2266 = vmul.f32 %v2231, %v2240
        %v2267 = vmul.f32 %v2232, %v2240
        %v2268 = vmul.f32 %v2233, %v2240
        %v2269 = vmul.f32 %v2234, %v2240
        %v2270 = vmul.f32 %v2235, %v2240
        %v2271 = vmul.f32 %v2236, %v2240
        %v2272 = vmul.f32 %v2237, %v2240
        %v2273 = vmul.f32 %v2238, %v2240
        %v2275 = vperm.slane %v337, 0
        %v2277 = vadd.f32 %v2242, %v2275
        %v2278 = vadd.f32 %v2243, %v2275
        %v2279 = vadd.f32 %v2244, %v2275
        %v2280 = vadd.f32 %v2245, %v2275
        %v2281 = vadd.f32 %v2246, %v2275
        %v2282 = vadd.f32 %v2247, %v2275
        %v2283 = vadd.f32 %v2248, %v2275
        %v2284 = vadd.f32 %v2249, %v2275
        %v2285 = vadd.f32 %v2250, %v2275
        %v2286 = vadd.f32 %v2251, %v2275
        %v2287 = vadd.f32 %v2252, %v2275
        %v2288 = vadd.f32 %v2253, %v2275
        %v2289 = vadd.f32 %v2254, %v2275
        %v2290 = vadd.f32 %v2255, %v2275
        %v2291 = vadd.f32 %v2256, %v2275
        %v2292 = vadd.f32 %v2257, %v2275
        %v2293 = vadd.f32 %v2258, %v2275
        %v2294 = vadd.f32 %v2259, %v2275
        %v2295 = vadd.f32 %v2260, %v2275
        %v2296 = vadd.f32 %v2261, %v2275
        %v2297 = vadd.f32 %v2262, %v2275
        %v2298 = vadd.f32 %v2263, %v2275
        %v2299 = vadd.f32 %v2264, %v2275
        %v2300 = vadd.f32 %v2265, %v2275
        %v2301 = vadd.f32 %v2266, %v2275
        %v2302 = vadd.f32 %v2267, %v2275
        %v2303 = vadd.f32 %v2268, %v2275
        %v2304 = vadd.f32 %v2269, %v2275
        %v2305 = vadd.f32 %v2270, %v2275
        %v2306 = vadd.f32 %v2271, %v2275
        %v2307 = vadd.f32 %v2272, %v2275
        %v2308 = vadd.f32 %v2273, %v2275
        %v2309 = vmax.f32 %v2277, 0.0
        %v2310 = vmax.f32 %v2278, 0.0
        %v2311 = vmax.f32 %v2279, 0.0
        %v2312 = vmax.f32 %v2280, 0.0
        %v2313 = vmax.f32 %v2281, 0.0
        %v2314 = vmax.f32 %v2282, 0.0
        %v2315 = vmax.f32 %v2283, 0.0
        %v2316 = vmax.f32 %v2284, 0.0
        %v2317 = vmax.f32 %v2285, 0.0
        %v2318 = vmax.f32 %v2286, 0.0
        %v2319 = vmax.f32 %v2287, 0.0
        %v2320 = vmax.f32 %v2288, 0.0
        %v2321 = vmax.f32 %v2289, 0.0
        %v2322 = vmax.f32 %v2290, 0.0
        %v2323 = vmax.f32 %v2291, 0.0
        %v2324 = vmax.f32 %v2292, 0.0
        %v2325 = vmax.f32 %v2293, 0.0
        %v2326 = vmax.f32 %v2294, 0.0
        %v2327 = vmax.f32 %v2295, 0.0
        %v2328 = vmax.f32 %v2296, 0.0
        %v2329 = vmax.f32 %v2297, 0.0
        %v2330 = vmax.f32 %v2298, 0.0
        %v2331 = vmax.f32 %v2299, 0.0
        %v2332 = vmax.f32 %v2300, 0.0
        %v2333 = vmax.f32 %v2301, 0.0
        %v2334 = vmax.f32 %v2302, 0.0
        %v2335 = vmax.f32 %v2303, 0.0
        %v2336 = vmax.f32 %v2304, 0.0
        %v2337 = vmax.f32 %v2305, 0.0
        %v2338 = vmax.f32 %v2306, 0.0
        %v2339 = vmax.f32 %v2307, 0.0
        %v2340 = vmax.f32 %v2308, 0.0
        %2341 = vst [vmem:[%s331] sm:$0xff] %v2309
        %2342 = vst [vmem:[%s331 + $0x8] sm:$0xff] %v2310
        %2343 = vst [vmem:[%s331 + $0x10] sm:$0xff] %v2311
        %2344 = vst [vmem:[%s331 + $0x18] sm:$0xff] %v2312
        %2345 = vst [vmem:[%s331 + $0x20] sm:$0xff] %v2313
        %2346 = vst [vmem:[%s331 + $0x28] sm:$0xff] %v2314
        %2347 = vst [vmem:[%s331 + $0x30] sm:$0xff] %v2315
        %2348 = vst [vmem:[%s331 + $0x38] sm:$0xff] %v2316
        %2349 = vst [vmem:[%s331 + $0x40] sm:$0xff] %v2317
        %2350 = vst [vmem:[%s331 + $0x48] sm:$0xff] %v2318
        %2351 = vst [vmem:[%s331 + $0x50] sm:$0xff] %v2319
        %2352 = vst [vmem:[%s331 + $0x58] sm:$0xff] %v2320
        %2353 = vst [vmem:[%s331 + $0x60] sm:$0xff] %v2321
        %2354 = vst [vmem:[%s331 + $0x68] sm:$0xff] %v2322
        %2355 = vst [vmem:[%s331 + $0x70] sm:$0xff] %v2323
        %2356 = vst [vmem:[%s331 + $0x78] sm:$0xff] %v2324
        %2357 = vst [vmem:[%s331 + $0x80] sm:$0xff] %v2325
        %2358 = vst [vmem:[%s331 + $0x88] sm:$0xff] %v2326
        %2359 = vst [vmem:[%s331 + $0x90] sm:$0xff] %v2327
        %2360 = vst [vmem:[%s331 + $0x98] sm:$0xff] %v2328
        %2361 = vst [vmem:[%s331 + $0xa0] sm:$0xff] %v2329
        %2362 = vst [vmem:[%s331 + $0xa8] sm:$0xff] %v2330
        %2363 = vst [vmem:[%s331 + $0xb0] sm:$0xff] %v2331
        %2364 = vst [vmem:[%s331 + $0xb8] sm:$0xff] %v2332
        %2365 = vst [vmem:[%s331 + $0xc0] sm:$0xff] %v2333
        %2366 = vst [vmem:[%s331 + $0xc8] sm:$0xff] %v2334
        %2367 = vst [vmem:[%s331 + $0xd0] sm:$0xff] %v2335
        %2368 = vst [vmem:[%s331 + $0xd8] sm:$0xff] %v2336
        %2369 = vst [vmem:[%s331 + $0xe0] sm:$0xff] %v2337
        %2370 = vst [vmem:[%s331 + $0xe8] sm:$0xff] %v2338
        %2371 = vst [vmem:[%s331 + $0xf0] sm:$0xff] %v2339
        %2372 = vst [vmem:[%s331 + $0xf8] sm:$0xff] %v2340
        %s2373 = sand.u32 %s185, 1
        %s2374 = scalar_lea.sflag [#allocation4], %s2373
        %s2375 = sand.u32 %s185, 1
        %s2376 = smul.addr %s2375, 256
        %s2377 = scalar_lea.vmem [#allocation8], %s2376
        // Predicated region
        $region61: #{tpu_custom_call.1} parent=47 // pred_check
          %p2378 = pneg %p195
        $region62: #{tpu_custom_call.1} parent=47 // pred_check_branch
          %2380 = sbr.rel (%p2378) target = $region64
        $region63: #{tpu_custom_call.1} parent=47 // pred_region
          %s2381 = smul.u32 32, %s25
          %2383 = vsyncadd %s2374, 0
          %s2384 = smul.addr %s2381, 8
          %s2385 = scalar_lea.hbm %s7, %s2384
          %s2386 = sshll.u32 %s2377, 4
          %s2387 = int_to_ptr.vmem [resolvable:$true] %s2386
          %s2388 = sshll.u32 %s2385, 4
          %s2389 = int_to_ptr.hbm [resolvable:$true] %s2388
          %2394 = dma.vmem_to_hbm [thread:$0]  %s2387, 4096, %s2389, %s2374, 128, 128, 8
        $region64: #{tpu_custom_call.1} parent=47 // pred_fallthru
          _
      $region48: #{tpu_custom_call.1} parent=5 // pred_fallthru
        _
      %p2395 = scmp.le.s32.totalorder 2, %s20
      // Predicated region
      $region65: #{tpu_custom_call.1} parent=5 // pred_check
        %p2396 = pneg %p2395
      $region66: #{tpu_custom_call.1} parent=5 // pred_check_branch
        %2398 = sbr.rel (%p2396) target = $region68
      $region67: #{tpu_custom_call.1} parent=5 // pred_region
        %s2399 = ssub.s32 %s20, 2
        // Predicated region
        $region69: #{tpu_custom_call.1} parent=67 // pred_check
          %p2400 = pneg %p201
        $region70: #{tpu_custom_call.1} parent=67 // pred_check_branch
          %2402 = sbr.rel (%p2400) target = $region72
        $region71: #{tpu_custom_call.1} parent=67 // pred_region
          %s2403 = sand.u32 %s186, 1
          %s2404 = scalar_lea.sflag [#allocation4], %s2403
          %s2405 = sand.u32 %s186, 1
          %s2406 = smul.addr %s2405, 256
          %s2407 = scalar_lea.vmem [#allocation8], %s2406
          %2409 = dma.done %s2404, 4096
        $region72: #{tpu_custom_call.1} parent=67 // pred_fallthru
          _
      $region68: #{tpu_custom_call.1} parent=5 // pred_fallthru
        _
    $region6: #{tpu_custom_call.1} parent=1 // loop_footer
      %s24 = sadd.s32 1, %s20
    $region7: #{tpu_custom_call.1} parent=1 // loop_footer_branch
      %19 = sbr.rel target = $region3
    $region8: #{tpu_custom_call.1} parent=1 // loop_exit
      _
    %2410 = vsyncpa [#allocation3], 1
    %s2411 = scalar_lea.sflag [#allocation3], 1
    %2412 = vsyncpa %s2411, 1
    %2413 = vsyncpa [#allocation6], 1
    %2414 = vsyncpa [#allocation4], 1
    %s2415 = scalar_lea.sflag [#allocation4], 1
    %2416 = vsyncpa %s2415, 1

</llo_original>
